<compile_context>
chip_gen: v7x
topology: tpu7x:2x2x1
jax: 0.10.0
libtpu: 0.0.40
codegen_flags: <defaults>
</compile_context>

<pallas_src>
import math
from functools import partial

import jax
import jax.numpy as jnp
from jax import lax
from jax.experimental import pallas as pl
from jax.experimental.pallas import tpu as pltpu

# Encoder layer configuration, mirroring Encoder.layers_config.
LAYERS_CONFIG = [(3, 16), (16, 32), (32, 48), (48, 64), (64, 80),
                 (80, 96), (96, 112), (112, 128), (128, 144)]
BN_EPS = 1e-5
LANE = 128


def _gae_kernel(x_ref, adj_ref, *refs, n_nodes):
    """refs = (w0_ref, ..., w8_ref, out_ref, zpad_ref).

    x_ref   : (N+1, 3)    augmented node features (row N is zero / ignored)
    adj_ref : (N+1, N+1)  augmented adjacency (row N = mean row, col N = 0)
    out_ref : (N, Npad)   lane-dense reconstruction
    zpad_ref: (Npad, 144) VMEM scratch for the zero-row-padded decoder RHS
    """
    *w_refs, o_ref, zpad_ref = refs
    n_layers = len(w_refs)
    inv_n = jnp.float32(1.0 / n_nodes)

    h = x_ref[...].astype(jnp.float32)                      # (N+1, 3)
    for i, w_ref in enumerate(w_refs):
        # Re-read adj from VMEM at each use instead of pinning it in vregs
        # across the 9-layer unroll (vld slots have slack; vregs don't).
        adj = adj_ref[...]                                   # (N+1, N+1)

        # Heavy matmul first: (adj @ h) has only in_i (<=128) output lanes.
        ah = jnp.dot(adj, h, preferred_element_type=jnp.float32)   # (N+1, in_i)

        w = w_ref[...].astype(jnp.float32)
        if i == 0:
            # Depth-3 contraction: three VPU broadcast-FMAs, skip the MXU.
            out = (ah[:, 0:1] * w[0:1, :]
                   + ah[:, 1:2] * w[1:2, :]
                   + ah[:, 2:3] * w[2:3, :])                 # (N+1, 16)
        else:
            out = jnp.dot(ah, w, preferred_element_type=jnp.float32)  # (N+1, out_i)

        if i < n_layers - 1:
            # BatchNorm1d(affine=False, batch stats) over the node axis.
            # Row n_nodes of `out` is already the per-channel column mean
            # (courtesy of the augmented adj row) -> no XLU reduce for it.
            mean = out[n_nodes:n_nodes + 1, :]               # (1, out_i)
            # Single remaining reduce: sum of squares over all N+1 rows; the
            # extra row contributes exactly mean^2, subtracted back out.
            sq = jnp.sum(out * out, axis=0, keepdims=True)
            var = (sq - mean * mean) * inv_n - mean * mean
            var = jnp.maximum(var, 0.0)                      # cancellation guard
            out = jnp.maximum((out - mean) * lax.rsqrt(var + BN_EPS), 0.0)
            # Row n_nodes becomes exactly 0 after BN/ReLU; it is multiplied by
            # adj_aug's zero last column next layer, so it never contaminates.
        h = out

    # Decoder: reconstruction = z @ z.T as a dot_general contracting dim 1 of
    # both operands.  The RHS node axis is zero-padded (via VMEM scratch, no
    # concatenate) so the output last dim is a lane-dense multiple of 128; the
    # extra columns are exactly zero and sliced off in the wrapper.
    z = h[0:n_nodes, :]                                      # (N, 144)
    zpad_ref[pl.ds(0, n_nodes), :] = z
    pad = zpad_ref.shape[0] - n_nodes
    if pad > 0:
        zpad_ref[pl.ds(n_nodes, pad), :] = jnp.zeros((pad, z.shape[1]),
                                                     jnp.float32)
    o_ref[...] = lax.dot_general(
        z, zpad_ref[...],
        dimension_numbers=(((1,), (1,)), ((), ())),
        preferred_element_type=jnp.float32)


def gae_forward(feat_xyz, adj, weights):
    """Fused GAE forward. Accepts (N,3)/(N,N) or batched (B,N,3)/(B,N,N)."""
    squeeze = feat_xyz.ndim == 2
    if squeeze:
        feat_xyz, adj = feat_xyz[None], adj[None]
    B, N, F = feat_xyz.shape
    n_pad = pl.cdiv(N, LANE) * LANE              # lane-dense output width
    z_dim = weights[-1].shape[1]

    # Augment once in the wrapper (layout/preprocessing, not per-layer work):
    #   feat: extra zero row;  adj: extra (1/N)*colsum row + zero column.
    feat_aug = jnp.pad(feat_xyz, ((0, 0), (0, 1), (0, 0)))            # (B,N+1,F)
    mean_row = jnp.sum(adj, axis=1, keepdims=True) * (1.0 / N)        # (B,1,N)
    adj_aug = jnp.concatenate([adj, mean_row], axis=1)                # (B,N+1,N)
    adj_aug = jnp.pad(adj_aug, ((0, 0), (0, 0), (0, 1)))              # (B,N+1,N+1)

    in_specs = [
        pl.BlockSpec((None, N + 1, F), lambda b: (b, 0, 0)),
        pl.BlockSpec((None, N + 1, N + 1), lambda b: (b, 0, 0)),
    ] + [pl.BlockSpec(w.shape, lambda b: (0, 0)) for w in weights]

    recon_pad = pl.pallas_call(
        partial(_gae_kernel, n_nodes=N),
        out_shape=jax.ShapeDtypeStruct((B, N, n_pad), jnp.float32),
        grid=(B,),
        in_specs=in_specs,
        out_specs=pl.BlockSpec((None, N, n_pad), lambda b: (b, 0, 0)),
        scratch_shapes=[pltpu.VMEM((n_pad, z_dim), jnp.float32)],
        compiler_params=pltpu.CompilerParams(
            dimension_semantics=("parallel",)),
    )(feat_aug, adj_aug, *weights)

    recon = recon_pad[:, :, :N]
    return recon[0] if squeeze else recon


def init_weights(key):
    """Deterministic GCNLayer.reset_parameters: U(-1/sqrt(out), 1/sqrt(out))."""
    weights = []
    for in_ch, out_ch in LAYERS_CONFIG:
        key, sub = jax.random.split(key)
        std = 1.0 / math.sqrt(out_ch)
        w = jax.random.uniform(sub, (in_ch, out_ch), jnp.float32,
                               minval=-std, maxval=std)
        weights.append(w)
    return weights


def gae_reference(feat_xyz, adj, weights):
    """Pure-JAX reference of the PyTorch forward (batched via vmap)."""
    def single(x, a):
        h = x
        for i, w in enumerate(weights):
            out = a @ (h @ w)
            if i < len(weights) - 1:
                mean = jnp.mean(out, axis=0, keepdims=True)
                var = jnp.mean((out - mean) ** 2, axis=0, keepdims=True)
                out = jnp.maximum((out - mean) * lax.rsqrt(var + BN_EPS), 0.0)
            h = out
        return h @ h.T
    return jax.vmap(single)(feat_xyz, adj)


if __name__ == "__main__":
    key = jax.random.PRNGKey(0)
    k_x, k_adj, k_w = jax.random.split(key, 3)

    B, N = 2, 64   # two small synthetic graphs
    feat_xyz = jax.random.normal(k_x, (B, N, 3), jnp.float32)

    # Symmetric normalized adjacency with self loops (typical GCN input).
    a = (jax.random.uniform(k_adj, (B, N, N)) < 0.1).astype(jnp.float32)
    a = jnp.maximum(a, jnp.swapaxes(a, -1, -2)) + jnp.eye(N, dtype=jnp.float32)
    deg = jnp.sum(a, axis=-1)
    d_inv_sqrt = lax.rsqrt(deg)
    adj = a * d_inv_sqrt[..., :, None] * d_inv_sqrt[..., None, :]

    weights = init_weights(k_w)

    recon = gae_forward(feat_xyz, adj, weights)
    recon = jax.block_until_ready(recon)

    ref = gae_reference(feat_xyz, adj, weights)
    assert recon.shape == (B, N, N)
    max_err = float(jnp.max(jnp.abs(recon - ref)))
    assert jnp.allclose(recon, ref, atol=1e-3, rtol=1e-3), max_err

    print("KERNEL_OK")
</pallas_src>

<mosaic_0001>
module attributes {stable_mosaic.version = 11 : i64} {
  func.func @_gae_kernel(%arg0: i32, %arg1: memref<1x65x3xf32, #tpu.memory_space<vmem>>, %arg2: memref<1x65x65xf32, #tpu.memory_space<vmem>>, %arg3: memref<3x16xf32, #tpu.memory_space<vmem>>, %arg4: memref<16x32xf32, #tpu.memory_space<vmem>>, %arg5: memref<32x48xf32, #tpu.memory_space<vmem>>, %arg6: memref<48x64xf32, #tpu.memory_space<vmem>>, %arg7: memref<64x80xf32, #tpu.memory_space<vmem>>, %arg8: memref<80x96xf32, #tpu.memory_space<vmem>>, %arg9: memref<96x112xf32, #tpu.memory_space<vmem>>, %arg10: memref<112x128xf32, #tpu.memory_space<vmem>>, %arg11: memref<128x144xf32, #tpu.memory_space<vmem>>, %arg12: memref<1x64x128xf32, #tpu.memory_space<vmem>>, %arg13: memref<128x144xf32, #tpu.memory_space<vmem>>) attributes {dimension_semantics = [#tpu.dimension_semantics<parallel>], iteration_bounds = array<i64: 2>, scalar_prefetch = 0 : i64, scratch_operands = 1 : i64, tpu.core_type = #tpu.core_type<tc>, window_params = [{transform_indices = @transform_0, window_bounds = array<i64: 1, 65, 3>}, {transform_indices = @transform_1, window_bounds = array<i64: 1, 65, 65>}, {pipeline_mode = #tpu.pipeline_mode<synchronous>, transform_indices = @transform_2, window_bounds = array<i64: 3, 16>}, {pipeline_mode = #tpu.pipeline_mode<synchronous>, transform_indices = @transform_3, window_bounds = array<i64: 16, 32>}, {pipeline_mode = #tpu.pipeline_mode<synchronous>, transform_indices = @transform_4, window_bounds = array<i64: 32, 48>}, {pipeline_mode = #tpu.pipeline_mode<synchronous>, transform_indices = @transform_5, window_bounds = array<i64: 48, 64>}, {pipeline_mode = #tpu.pipeline_mode<synchronous>, transform_indices = @transform_6, window_bounds = array<i64: 64, 80>}, {pipeline_mode = #tpu.pipeline_mode<synchronous>, transform_indices = @transform_7, window_bounds = array<i64: 80, 96>}, {pipeline_mode = #tpu.pipeline_mode<synchronous>, transform_indices = @transform_8, window_bounds = array<i64: 96, 112>}, {pipeline_mode = #tpu.pipeline_mode<synchronous>, transform_indices = @transform_9, window_bounds = array<i64: 112, 128>}, {pipeline_mode = #tpu.pipeline_mode<synchronous>, transform_indices = @transform_10, window_bounds = array<i64: 128, 144>}, {transform_indices = @transform_11, window_bounds = array<i64: 1, 64, 128>}]} {
    %c0 = arith.constant 0 : index
    %c0_0 = arith.constant 0 : index
    %c0_1 = arith.constant 0 : index
    %0 = vector.load %arg1[%c0, %c0_0, %c0_1] : memref<1x65x3xf32, #tpu.memory_space<vmem>>, vector<1x65x3xf32>
    %1 = vector.shape_cast %0 : vector<1x65x3xf32> to vector<65x3xf32>
    %c0_2 = arith.constant 0 : index
    %c0_3 = arith.constant 0 : index
    %c0_4 = arith.constant 0 : index
    %2 = vector.load %arg2[%c0_2, %c0_3, %c0_4] : memref<1x65x65xf32, #tpu.memory_space<vmem>>, vector<1x65x65xf32>
    %3 = vector.shape_cast %2 : vector<1x65x65xf32> to vector<65x65xf32>
    %cst = arith.constant dense<0.000000e+00> : vector<65x3xf32>
    %4 = tpu.matmul %3, %1, %cst {dimension_numbers = #tpu.dot_dimension_numbers<[1], [0], [0], [1], [0, 0, 1, 1], [], []>} : vector<65x65xf32>, vector<65x3xf32>, vector<65x3xf32> -> vector<65x3xf32>
    %c0_5 = arith.constant 0 : index
    %c0_6 = arith.constant 0 : index
    %5 = vector.load %arg3[%c0_5, %c0_6] : memref<3x16xf32, #tpu.memory_space<vmem>>, vector<3x16xf32>
    %6 = vector.extract_strided_slice %4 {offsets = [0, 0], sizes = [65, 1], strides = [1, 1]} : vector<65x3xf32> to vector<65x1xf32>
    %7 = vector.extract_strided_slice %5 {offsets = [0, 0], sizes = [1, 16], strides = [1, 1]} : vector<3x16xf32> to vector<1x16xf32>
    %8 = vector.broadcast %6 : vector<65x1xf32> to vector<65x16xf32>
    %9 = vector.broadcast %7 : vector<1x16xf32> to vector<65x16xf32>
    %10 = arith.mulf %8, %9 : vector<65x16xf32>
    %11 = vector.extract_strided_slice %4 {offsets = [0, 1], sizes = [65, 1], strides = [1, 1]} : vector<65x3xf32> to vector<65x1xf32>
    %12 = vector.extract_strided_slice %5 {offsets = [1, 0], sizes = [1, 16], strides = [1, 1]} : vector<3x16xf32> to vector<1x16xf32>
    %13 = vector.broadcast %11 : vector<65x1xf32> to vector<65x16xf32>
    %14 = vector.broadcast %12 : vector<1x16xf32> to vector<65x16xf32>
    %15 = arith.mulf %13, %14 : vector<65x16xf32>
    %16 = arith.addf %10, %15 : vector<65x16xf32>
    %17 = vector.extract_strided_slice %4 {offsets = [0, 2], sizes = [65, 1], strides = [1, 1]} : vector<65x3xf32> to vector<65x1xf32>
    %18 = vector.extract_strided_slice %5 {offsets = [2, 0], sizes = [1, 16], strides = [1, 1]} : vector<3x16xf32> to vector<1x16xf32>
    %19 = vector.broadcast %17 : vector<65x1xf32> to vector<65x16xf32>
    %20 = vector.broadcast %18 : vector<1x16xf32> to vector<65x16xf32>
    %21 = arith.mulf %19, %20 : vector<65x16xf32>
    %22 = arith.addf %16, %21 : vector<65x16xf32>
    %23 = vector.extract_strided_slice %22 {offsets = [64, 0], sizes = [1, 16], strides = [1, 1]} : vector<65x16xf32> to vector<1x16xf32>
    %24 = arith.mulf %22, %22 : vector<65x16xf32>
    %cst_7 = arith.constant dense<0.000000e+00> : vector<16xf32>
    %25 = vector.multi_reduction <add>, %24, %cst_7 [0] : vector<65x16xf32> to vector<16xf32>
    %26 = vector.shape_cast %25 : vector<16xf32> to vector<1x16xf32>
    %27 = arith.mulf %23, %23 : vector<1x16xf32>
    %28 = arith.subf %26, %27 : vector<1x16xf32>
    %cst_8 = arith.constant 1.562500e-02 : f32
    %29 = vector.broadcast %cst_8 : f32 to vector<1x16xf32>
    %30 = arith.mulf %28, %29 : vector<1x16xf32>
    %31 = arith.mulf %23, %23 : vector<1x16xf32>
    %32 = arith.subf %30, %31 : vector<1x16xf32>
    %cst_9 = arith.constant 0.000000e+00 : f32
    %33 = vector.broadcast %cst_9 : f32 to vector<1x16xf32>
    %34 = arith.maximumf %32, %33 : vector<1x16xf32>
    %35 = vector.broadcast %23 : vector<1x16xf32> to vector<65x16xf32>
    %36 = arith.subf %22, %35 : vector<65x16xf32>
    %cst_10 = arith.constant 9.99999974E-6 : f32
    %37 = vector.broadcast %cst_10 : f32 to vector<1x16xf32>
    %38 = arith.addf %34, %37 : vector<1x16xf32>
    %39 = math.rsqrt %38 : vector<1x16xf32>
    %40 = vector.broadcast %39 : vector<1x16xf32> to vector<65x16xf32>
    %41 = arith.mulf %36, %40 : vector<65x16xf32>
    %cst_11 = arith.constant 0.000000e+00 : f32
    %42 = vector.broadcast %cst_11 : f32 to vector<65x16xf32>
    %43 = arith.maximumf %41, %42 : vector<65x16xf32>
    %c0_12 = arith.constant 0 : index
    %c0_13 = arith.constant 0 : index
    %c0_14 = arith.constant 0 : index
    %44 = vector.load %arg2[%c0_12, %c0_13, %c0_14] : memref<1x65x65xf32, #tpu.memory_space<vmem>>, vector<1x65x65xf32>
    %45 = vector.shape_cast %44 : vector<1x65x65xf32> to vector<65x65xf32>
    %cst_15 = arith.constant dense<0.000000e+00> : vector<65x16xf32>
    %46 = tpu.matmul %45, %43, %cst_15 {dimension_numbers = #tpu.dot_dimension_numbers<[1], [0], [0], [1], [0, 0, 1, 1], [], []>} : vector<65x65xf32>, vector<65x16xf32>, vector<65x16xf32> -> vector<65x16xf32>
    %c0_16 = arith.constant 0 : index
    %c0_17 = arith.constant 0 : index
    %47 = vector.load %arg4[%c0_16, %c0_17] : memref<16x32xf32, #tpu.memory_space<vmem>>, vector<16x32xf32>
    %cst_18 = arith.constant dense<0.000000e+00> : vector<65x32xf32>
    %48 = tpu.matmul %46, %47, %cst_18 {dimension_numbers = #tpu.dot_dimension_numbers<[1], [0], [0], [1], [0, 0, 1, 1], [], []>} : vector<65x16xf32>, vector<16x32xf32>, vector<65x32xf32> -> vector<65x32xf32>
    %49 = vector.extract_strided_slice %48 {offsets = [64, 0], sizes = [1, 32], strides = [1, 1]} : vector<65x32xf32> to vector<1x32xf32>
    %50 = arith.mulf %48, %48 : vector<65x32xf32>
    %cst_19 = arith.constant dense<0.000000e+00> : vector<32xf32>
    %51 = vector.multi_reduction <add>, %50, %cst_19 [0] : vector<65x32xf32> to vector<32xf32>
    %52 = vector.shape_cast %51 : vector<32xf32> to vector<1x32xf32>
    %53 = arith.mulf %49, %49 : vector<1x32xf32>
    %54 = arith.subf %52, %53 : vector<1x32xf32>
    %cst_20 = arith.constant 1.562500e-02 : f32
    %55 = vector.broadcast %cst_20 : f32 to vector<1x32xf32>
    %56 = arith.mulf %54, %55 : vector<1x32xf32>
    %57 = arith.mulf %49, %49 : vector<1x32xf32>
    %58 = arith.subf %56, %57 : vector<1x32xf32>
    %cst_21 = arith.constant 0.000000e+00 : f32
    %59 = vector.broadcast %cst_21 : f32 to vector<1x32xf32>
    %60 = arith.maximumf %58, %59 : vector<1x32xf32>
    %61 = vector.broadcast %49 : vector<1x32xf32> to vector<65x32xf32>
    %62 = arith.subf %48, %61 : vector<65x32xf32>
    %cst_22 = arith.constant 9.99999974E-6 : f32
    %63 = vector.broadcast %cst_22 : f32 to vector<1x32xf32>
    %64 = arith.addf %60, %63 : vector<1x32xf32>
    %65 = math.rsqrt %64 : vector<1x32xf32>
    %66 = vector.broadcast %65 : vector<1x32xf32> to vector<65x32xf32>
    %67 = arith.mulf %62, %66 : vector<65x32xf32>
    %cst_23 = arith.constant 0.000000e+00 : f32
    %68 = vector.broadcast %cst_23 : f32 to vector<65x32xf32>
    %69 = arith.maximumf %67, %68 : vector<65x32xf32>
    %c0_24 = arith.constant 0 : index
    %c0_25 = arith.constant 0 : index
    %c0_26 = arith.constant 0 : index
    %70 = vector.load %arg2[%c0_24, %c0_25, %c0_26] : memref<1x65x65xf32, #tpu.memory_space<vmem>>, vector<1x65x65xf32>
    %71 = vector.shape_cast %70 : vector<1x65x65xf32> to vector<65x65xf32>
    %cst_27 = arith.constant dense<0.000000e+00> : vector<65x32xf32>
    %72 = tpu.matmul %71, %69, %cst_27 {dimension_numbers = #tpu.dot_dimension_numbers<[1], [0], [0], [1], [0, 0, 1, 1], [], []>} : vector<65x65xf32>, vector<65x32xf32>, vector<65x32xf32> -> vector<65x32xf32>
    %c0_28 = arith.constant 0 : index
    %c0_29 = arith.constant 0 : index
    %73 = vector.load %arg5[%c0_28, %c0_29] : memref<32x48xf32, #tpu.memory_space<vmem>>, vector<32x48xf32>
    %cst_30 = arith.constant dense<0.000000e+00> : vector<65x48xf32>
    %74 = tpu.matmul %72, %73, %cst_30 {dimension_numbers = #tpu.dot_dimension_numbers<[1], [0], [0], [1], [0, 0, 1, 1], [], []>} : vector<65x32xf32>, vector<32x48xf32>, vector<65x48xf32> -> vector<65x48xf32>
    %75 = vector.extract_strided_slice %74 {offsets = [64, 0], sizes = [1, 48], strides = [1, 1]} : vector<65x48xf32> to vector<1x48xf32>
    %76 = arith.mulf %74, %74 : vector<65x48xf32>
    %cst_31 = arith.constant dense<0.000000e+00> : vector<48xf32>
    %77 = vector.multi_reduction <add>, %76, %cst_31 [0] : vector<65x48xf32> to vector<48xf32>
    %78 = vector.shape_cast %77 : vector<48xf32> to vector<1x48xf32>
    %79 = arith.mulf %75, %75 : vector<1x48xf32>
    %80 = arith.subf %78, %79 : vector<1x48xf32>
    %cst_32 = arith.constant 1.562500e-02 : f32
    %81 = vector.broadcast %cst_32 : f32 to vector<1x48xf32>
    %82 = arith.mulf %80, %81 : vector<1x48xf32>
    %83 = arith.mulf %75, %75 : vector<1x48xf32>
    %84 = arith.subf %82, %83 : vector<1x48xf32>
    %cst_33 = arith.constant 0.000000e+00 : f32
    %85 = vector.broadcast %cst_33 : f32 to vector<1x48xf32>
    %86 = arith.maximumf %84, %85 : vector<1x48xf32>
    %87 = vector.broadcast %75 : vector<1x48xf32> to vector<65x48xf32>
    %88 = arith.subf %74, %87 : vector<65x48xf32>
    %cst_34 = arith.constant 9.99999974E-6 : f32
    %89 = vector.broadcast %cst_34 : f32 to vector<1x48xf32>
    %90 = arith.addf %86, %89 : vector<1x48xf32>
    %91 = math.rsqrt %90 : vector<1x48xf32>
    %92 = vector.broadcast %91 : vector<1x48xf32> to vector<65x48xf32>
    %93 = arith.mulf %88, %92 : vector<65x48xf32>
    %cst_35 = arith.constant 0.000000e+00 : f32
    %94 = vector.broadcast %cst_35 : f32 to vector<65x48xf32>
    %95 = arith.maximumf %93, %94 : vector<65x48xf32>
    %c0_36 = arith.constant 0 : index
    %c0_37 = arith.constant 0 : index
    %c0_38 = arith.constant 0 : index
    %96 = vector.load %arg2[%c0_36, %c0_37, %c0_38] : memref<1x65x65xf32, #tpu.memory_space<vmem>>, vector<1x65x65xf32>
    %97 = vector.shape_cast %96 : vector<1x65x65xf32> to vector<65x65xf32>
    %cst_39 = arith.constant dense<0.000000e+00> : vector<65x48xf32>
    %98 = tpu.matmul %97, %95, %cst_39 {dimension_numbers = #tpu.dot_dimension_numbers<[1], [0], [0], [1], [0, 0, 1, 1], [], []>} : vector<65x65xf32>, vector<65x48xf32>, vector<65x48xf32> -> vector<65x48xf32>
    %c0_40 = arith.constant 0 : index
    %c0_41 = arith.constant 0 : index
    %99 = vector.load %arg6[%c0_40, %c0_41] : memref<48x64xf32, #tpu.memory_space<vmem>>, vector<48x64xf32>
    %cst_42 = arith.constant dense<0.000000e+00> : vector<65x64xf32>
    %100 = tpu.matmul %98, %99, %cst_42 {dimension_numbers = #tpu.dot_dimension_numbers<[1], [0], [0], [1], [0, 0, 1, 1], [], []>} : vector<65x48xf32>, vector<48x64xf32>, vector<65x64xf32> -> vector<65x64xf32>
    %101 = vector.extract_strided_slice %100 {offsets = [64, 0], sizes = [1, 64], strides = [1, 1]} : vector<65x64xf32> to vector<1x64xf32>
    %102 = arith.mulf %100, %100 : vector<65x64xf32>
    %cst_43 = arith.constant dense<0.000000e+00> : vector<64xf32>
    %103 = vector.multi_reduction <add>, %102, %cst_43 [0] : vector<65x64xf32> to vector<64xf32>
    %104 = vector.shape_cast %103 : vector<64xf32> to vector<1x64xf32>
    %105 = arith.mulf %101, %101 : vector<1x64xf32>
    %106 = arith.subf %104, %105 : vector<1x64xf32>
    %cst_44 = arith.constant 1.562500e-02 : f32
    %107 = vector.broadcast %cst_44 : f32 to vector<1x64xf32>
    %108 = arith.mulf %106, %107 : vector<1x64xf32>
    %109 = arith.mulf %101, %101 : vector<1x64xf32>
    %110 = arith.subf %108, %109 : vector<1x64xf32>
    %cst_45 = arith.constant 0.000000e+00 : f32
    %111 = vector.broadcast %cst_45 : f32 to vector<1x64xf32>
    %112 = arith.maximumf %110, %111 : vector<1x64xf32>
    %113 = vector.broadcast %101 : vector<1x64xf32> to vector<65x64xf32>
    %114 = arith.subf %100, %113 : vector<65x64xf32>
    %cst_46 = arith.constant 9.99999974E-6 : f32
    %115 = vector.broadcast %cst_46 : f32 to vector<1x64xf32>
    %116 = arith.addf %112, %115 : vector<1x64xf32>
    %117 = math.rsqrt %116 : vector<1x64xf32>
    %118 = vector.broadcast %117 : vector<1x64xf32> to vector<65x64xf32>
    %119 = arith.mulf %114, %118 : vector<65x64xf32>
    %cst_47 = arith.constant 0.000000e+00 : f32
    %120 = vector.broadcast %cst_47 : f32 to vector<65x64xf32>
    %121 = arith.maximumf %119, %120 : vector<65x64xf32>
    %c0_48 = arith.constant 0 : index
    %c0_49 = arith.constant 0 : index
    %c0_50 = arith.constant 0 : index
    %122 = vector.load %arg2[%c0_48, %c0_49, %c0_50] : memref<1x65x65xf32, #tpu.memory_space<vmem>>, vector<1x65x65xf32>
    %123 = vector.shape_cast %122 : vector<1x65x65xf32> to vector<65x65xf32>
    %cst_51 = arith.constant dense<0.000000e+00> : vector<65x64xf32>
    %124 = tpu.matmul %123, %121, %cst_51 {dimension_numbers = #tpu.dot_dimension_numbers<[1], [0], [0], [1], [0, 0, 1, 1], [], []>} : vector<65x65xf32>, vector<65x64xf32>, vector<65x64xf32> -> vector<65x64xf32>
    %c0_52 = arith.constant 0 : index
    %c0_53 = arith.constant 0 : index
    %125 = vector.load %arg7[%c0_52, %c0_53] : memref<64x80xf32, #tpu.memory_space<vmem>>, vector<64x80xf32>
    %cst_54 = arith.constant dense<0.000000e+00> : vector<65x80xf32>
    %126 = tpu.matmul %124, %125, %cst_54 {dimension_numbers = #tpu.dot_dimension_numbers<[1], [0], [0], [1], [0, 0, 1, 1], [], []>} : vector<65x64xf32>, vector<64x80xf32>, vector<65x80xf32> -> vector<65x80xf32>
    %127 = vector.extract_strided_slice %126 {offsets = [64, 0], sizes = [1, 80], strides = [1, 1]} : vector<65x80xf32> to vector<1x80xf32>
    %128 = arith.mulf %126, %126 : vector<65x80xf32>
    %cst_55 = arith.constant dense<0.000000e+00> : vector<80xf32>
    %129 = vector.multi_reduction <add>, %128, %cst_55 [0] : vector<65x80xf32> to vector<80xf32>
    %130 = vector.shape_cast %129 : vector<80xf32> to vector<1x80xf32>
    %131 = arith.mulf %127, %127 : vector<1x80xf32>
    %132 = arith.subf %130, %131 : vector<1x80xf32>
    %cst_56 = arith.constant 1.562500e-02 : f32
    %133 = vector.broadcast %cst_56 : f32 to vector<1x80xf32>
    %134 = arith.mulf %132, %133 : vector<1x80xf32>
    %135 = arith.mulf %127, %127 : vector<1x80xf32>
    %136 = arith.subf %134, %135 : vector<1x80xf32>
    %cst_57 = arith.constant 0.000000e+00 : f32
    %137 = vector.broadcast %cst_57 : f32 to vector<1x80xf32>
    %138 = arith.maximumf %136, %137 : vector<1x80xf32>
    %139 = vector.broadcast %127 : vector<1x80xf32> to vector<65x80xf32>
    %140 = arith.subf %126, %139 : vector<65x80xf32>
    %cst_58 = arith.constant 9.99999974E-6 : f32
    %141 = vector.broadcast %cst_58 : f32 to vector<1x80xf32>
    %142 = arith.addf %138, %141 : vector<1x80xf32>
    %143 = math.rsqrt %142 : vector<1x80xf32>
    %144 = vector.broadcast %143 : vector<1x80xf32> to vector<65x80xf32>
    %145 = arith.mulf %140, %144 : vector<65x80xf32>
    %cst_59 = arith.constant 0.000000e+00 : f32
    %146 = vector.broadcast %cst_59 : f32 to vector<65x80xf32>
    %147 = arith.maximumf %145, %146 : vector<65x80xf32>
    %c0_60 = arith.constant 0 : index
    %c0_61 = arith.constant 0 : index
    %c0_62 = arith.constant 0 : index
    %148 = vector.load %arg2[%c0_60, %c0_61, %c0_62] : memref<1x65x65xf32, #tpu.memory_space<vmem>>, vector<1x65x65xf32>
    %149 = vector.shape_cast %148 : vector<1x65x65xf32> to vector<65x65xf32>
    %cst_63 = arith.constant dense<0.000000e+00> : vector<65x80xf32>
    %150 = tpu.matmul %149, %147, %cst_63 {dimension_numbers = #tpu.dot_dimension_numbers<[1], [0], [0], [1], [0, 0, 1, 1], [], []>} : vector<65x65xf32>, vector<65x80xf32>, vector<65x80xf32> -> vector<65x80xf32>
    %c0_64 = arith.constant 0 : index
    %c0_65 = arith.constant 0 : index
    %151 = vector.load %arg8[%c0_64, %c0_65] : memref<80x96xf32, #tpu.memory_space<vmem>>, vector<80x96xf32>
    %cst_66 = arith.constant dense<0.000000e+00> : vector<65x96xf32>
    %152 = tpu.matmul %150, %151, %cst_66 {dimension_numbers = #tpu.dot_dimension_numbers<[1], [0], [0], [1], [0, 0, 1, 1], [], []>} : vector<65x80xf32>, vector<80x96xf32>, vector<65x96xf32> -> vector<65x96xf32>
    %153 = vector.extract_strided_slice %152 {offsets = [64, 0], sizes = [1, 96], strides = [1, 1]} : vector<65x96xf32> to vector<1x96xf32>
    %154 = arith.mulf %152, %152 : vector<65x96xf32>
    %cst_67 = arith.constant dense<0.000000e+00> : vector<96xf32>
    %155 = vector.multi_reduction <add>, %154, %cst_67 [0] : vector<65x96xf32> to vector<96xf32>
    %156 = vector.shape_cast %155 : vector<96xf32> to vector<1x96xf32>
    %157 = arith.mulf %153, %153 : vector<1x96xf32>
    %158 = arith.subf %156, %157 : vector<1x96xf32>
    %cst_68 = arith.constant 1.562500e-02 : f32
    %159 = vector.broadcast %cst_68 : f32 to vector<1x96xf32>
    %160 = arith.mulf %158, %159 : vector<1x96xf32>
    %161 = arith.mulf %153, %153 : vector<1x96xf32>
    %162 = arith.subf %160, %161 : vector<1x96xf32>
    %cst_69 = arith.constant 0.000000e+00 : f32
    %163 = vector.broadcast %cst_69 : f32 to vector<1x96xf32>
    %164 = arith.maximumf %162, %163 : vector<1x96xf32>
    %165 = vector.broadcast %153 : vector<1x96xf32> to vector<65x96xf32>
    %166 = arith.subf %152, %165 : vector<65x96xf32>
    %cst_70 = arith.constant 9.99999974E-6 : f32
    %167 = vector.broadcast %cst_70 : f32 to vector<1x96xf32>
    %168 = arith.addf %164, %167 : vector<1x96xf32>
    %169 = math.rsqrt %168 : vector<1x96xf32>
    %170 = vector.broadcast %169 : vector<1x96xf32> to vector<65x96xf32>
    %171 = arith.mulf %166, %170 : vector<65x96xf32>
    %cst_71 = arith.constant 0.000000e+00 : f32
    %172 = vector.broadcast %cst_71 : f32 to vector<65x96xf32>
    %173 = arith.maximumf %171, %172 : vector<65x96xf32>
    %c0_72 = arith.constant 0 : index
    %c0_73 = arith.constant 0 : index
    %c0_74 = arith.constant 0 : index
    %174 = vector.load %arg2[%c0_72, %c0_73, %c0_74] : memref<1x65x65xf32, #tpu.memory_space<vmem>>, vector<1x65x65xf32>
    %175 = vector.shape_cast %174 : vector<1x65x65xf32> to vector<65x65xf32>
    %cst_75 = arith.constant dense<0.000000e+00> : vector<65x96xf32>
    %176 = tpu.matmul %175, %173, %cst_75 {dimension_numbers = #tpu.dot_dimension_numbers<[1], [0], [0], [1], [0, 0, 1, 1], [], []>} : vector<65x65xf32>, vector<65x96xf32>, vector<65x96xf32> -> vector<65x96xf32>
    %c0_76 = arith.constant 0 : index
    %c0_77 = arith.constant 0 : index
    %177 = vector.load %arg9[%c0_76, %c0_77] : memref<96x112xf32, #tpu.memory_space<vmem>>, vector<96x112xf32>
    %cst_78 = arith.constant dense<0.000000e+00> : vector<65x112xf32>
    %178 = tpu.matmul %176, %177, %cst_78 {dimension_numbers = #tpu.dot_dimension_numbers<[1], [0], [0], [1], [0, 0, 1, 1], [], []>} : vector<65x96xf32>, vector<96x112xf32>, vector<65x112xf32> -> vector<65x112xf32>
    %179 = vector.extract_strided_slice %178 {offsets = [64, 0], sizes = [1, 112], strides = [1, 1]} : vector<65x112xf32> to vector<1x112xf32>
    %180 = arith.mulf %178, %178 : vector<65x112xf32>
    %cst_79 = arith.constant dense<0.000000e+00> : vector<112xf32>
    %181 = vector.multi_reduction <add>, %180, %cst_79 [0] : vector<65x112xf32> to vector<112xf32>
    %182 = vector.shape_cast %181 : vector<112xf32> to vector<1x112xf32>
    %183 = arith.mulf %179, %179 : vector<1x112xf32>
    %184 = arith.subf %182, %183 : vector<1x112xf32>
    %cst_80 = arith.constant 1.562500e-02 : f32
    %185 = vector.broadcast %cst_80 : f32 to vector<1x112xf32>
    %186 = arith.mulf %184, %185 : vector<1x112xf32>
    %187 = arith.mulf %179, %179 : vector<1x112xf32>
    %188 = arith.subf %186, %187 : vector<1x112xf32>
    %cst_81 = arith.constant 0.000000e+00 : f32
    %189 = vector.broadcast %cst_81 : f32 to vector<1x112xf32>
    %190 = arith.maximumf %188, %189 : vector<1x112xf32>
    %191 = vector.broadcast %179 : vector<1x112xf32> to vector<65x112xf32>
    %192 = arith.subf %178, %191 : vector<65x112xf32>
    %cst_82 = arith.constant 9.99999974E-6 : f32
    %193 = vector.broadcast %cst_82 : f32 to vector<1x112xf32>
    %194 = arith.addf %190, %193 : vector<1x112xf32>
    %195 = math.rsqrt %194 : vector<1x112xf32>
    %196 = vector.broadcast %195 : vector<1x112xf32> to vector<65x112xf32>
    %197 = arith.mulf %192, %196 : vector<65x112xf32>
    %cst_83 = arith.constant 0.000000e+00 : f32
    %198 = vector.broadcast %cst_83 : f32 to vector<65x112xf32>
    %199 = arith.maximumf %197, %198 : vector<65x112xf32>
    %c0_84 = arith.constant 0 : index
    %c0_85 = arith.constant 0 : index
    %c0_86 = arith.constant 0 : index
    %200 = vector.load %arg2[%c0_84, %c0_85, %c0_86] : memref<1x65x65xf32, #tpu.memory_space<vmem>>, vector<1x65x65xf32>
    %201 = vector.shape_cast %200 : vector<1x65x65xf32> to vector<65x65xf32>
    %cst_87 = arith.constant dense<0.000000e+00> : vector<65x112xf32>
    %202 = tpu.matmul %201, %199, %cst_87 {dimension_numbers = #tpu.dot_dimension_numbers<[1], [0], [0], [1], [0, 0, 1, 1], [], []>} : vector<65x65xf32>, vector<65x112xf32>, vector<65x112xf32> -> vector<65x112xf32>
    %c0_88 = arith.constant 0 : index
    %c0_89 = arith.constant 0 : index
    %203 = vector.load %arg10[%c0_88, %c0_89] : memref<112x128xf32, #tpu.memory_space<vmem>>, vector<112x128xf32>
    %cst_90 = arith.constant dense<0.000000e+00> : vector<65x128xf32>
    %204 = tpu.matmul %202, %203, %cst_90 {dimension_numbers = #tpu.dot_dimension_numbers<[1], [0], [0], [1], [0, 0, 1, 1], [], []>} : vector<65x112xf32>, vector<112x128xf32>, vector<65x128xf32> -> vector<65x128xf32>
    %205 = vector.extract_strided_slice %204 {offsets = [64, 0], sizes = [1, 128], strides = [1, 1]} : vector<65x128xf32> to vector<1x128xf32>
    %206 = arith.mulf %204, %204 : vector<65x128xf32>
    %cst_91 = arith.constant dense<0.000000e+00> : vector<128xf32>
    %207 = vector.multi_reduction <add>, %206, %cst_91 [0] : vector<65x128xf32> to vector<128xf32>
    %208 = vector.shape_cast %207 : vector<128xf32> to vector<1x128xf32>
    %209 = arith.mulf %205, %205 : vector<1x128xf32>
    %210 = arith.subf %208, %209 : vector<1x128xf32>
    %cst_92 = arith.constant 1.562500e-02 : f32
    %211 = vector.broadcast %cst_92 : f32 to vector<1x128xf32>
    %212 = arith.mulf %210, %211 : vector<1x128xf32>
    %213 = arith.mulf %205, %205 : vector<1x128xf32>
    %214 = arith.subf %212, %213 : vector<1x128xf32>
    %cst_93 = arith.constant 0.000000e+00 : f32
    %215 = vector.broadcast %cst_93 : f32 to vector<1x128xf32>
    %216 = arith.maximumf %214, %215 : vector<1x128xf32>
    %217 = vector.broadcast %205 : vector<1x128xf32> to vector<65x128xf32>
    %218 = arith.subf %204, %217 : vector<65x128xf32>
    %cst_94 = arith.constant 9.99999974E-6 : f32
    %219 = vector.broadcast %cst_94 : f32 to vector<1x128xf32>
    %220 = arith.addf %216, %219 : vector<1x128xf32>
    %221 = math.rsqrt %220 : vector<1x128xf32>
    %222 = vector.broadcast %221 : vector<1x128xf32> to vector<65x128xf32>
    %223 = arith.mulf %218, %222 : vector<65x128xf32>
    %cst_95 = arith.constant 0.000000e+00 : f32
    %224 = vector.broadcast %cst_95 : f32 to vector<65x128xf32>
    %225 = arith.maximumf %223, %224 : vector<65x128xf32>
    %c0_96 = arith.constant 0 : index
    %c0_97 = arith.constant 0 : index
    %c0_98 = arith.constant 0 : index
    %226 = vector.load %arg2[%c0_96, %c0_97, %c0_98] : memref<1x65x65xf32, #tpu.memory_space<vmem>>, vector<1x65x65xf32>
    %227 = vector.shape_cast %226 : vector<1x65x65xf32> to vector<65x65xf32>
    %cst_99 = arith.constant dense<0.000000e+00> : vector<65x128xf32>
    %228 = tpu.matmul %227, %225, %cst_99 {dimension_numbers = #tpu.dot_dimension_numbers<[1], [0], [0], [1], [0, 0, 1, 1], [], []>} : vector<65x65xf32>, vector<65x128xf32>, vector<65x128xf32> -> vector<65x128xf32>
    %c0_100 = arith.constant 0 : index
    %c0_101 = arith.constant 0 : index
    %229 = vector.load %arg11[%c0_100, %c0_101] : memref<128x144xf32, #tpu.memory_space<vmem>>, vector<128x144xf32>
    %cst_102 = arith.constant dense<0.000000e+00> : vector<65x144xf32>
    %230 = tpu.matmul %228, %229, %cst_102 {dimension_numbers = #tpu.dot_dimension_numbers<[1], [0], [0], [1], [0, 0, 1, 1], [], []>} : vector<65x128xf32>, vector<128x144xf32>, vector<65x144xf32> -> vector<65x144xf32>
    %231 = vector.extract_strided_slice %230 {offsets = [0, 0], sizes = [64, 144], strides = [1, 1]} : vector<65x144xf32> to vector<64x144xf32>
    %c0_103 = arith.constant 0 : index
    %c0_104 = arith.constant 0 : index
    %232 = vector.load %arg13[%c0_103, %c0_104] : memref<128x144xf32, #tpu.memory_space<vmem>>, vector<64x144xf32>
    tpu.vector_store %arg13[%c0_103, %c0_104], %231 {strides = array<i32>} : memref<128x144xf32, #tpu.memory_space<vmem>>, vector<64x144xf32>,
    %cst_105 = arith.constant 0.000000e+00 : f32
    %233 = vector.broadcast %cst_105 : f32 to vector<64x144xf32>
    %c64 = arith.constant 64 : index
    %c0_106 = arith.constant 0 : index
    %234 = vector.load %arg13[%c64, %c0_106] : memref<128x144xf32, #tpu.memory_space<vmem>>, vector<64x144xf32>
    tpu.vector_store %arg13[%c64, %c0_106], %233 {strides = array<i32>} : memref<128x144xf32, #tpu.memory_space<vmem>>, vector<64x144xf32>,
    %c0_107 = arith.constant 0 : index
    %c0_108 = arith.constant 0 : index
    %235 = vector.load %arg13[%c0_107, %c0_108] : memref<128x144xf32, #tpu.memory_space<vmem>>, vector<128x144xf32>
    %cst_109 = arith.constant dense<0.000000e+00> : vector<64x128xf32>
    %236 = tpu.matmul %231, %235, %cst_109 {dimension_numbers = #tpu.dot_dimension_numbers<[1], [1], [0], [0], [0, 0, 1, 0], [], []>} : vector<64x144xf32>, vector<128x144xf32>, vector<64x128xf32> -> vector<64x128xf32>
    %c0_110 = arith.constant 0 : index
    %c0_111 = arith.constant 0 : index
    %c0_112 = arith.constant 0 : index
    %237 = vector.load %arg12[%c0_110, %c0_111, %c0_112] : memref<1x64x128xf32, #tpu.memory_space<vmem>>, vector<1x64x128xf32>
    %238 = vector.shape_cast %237 : vector<1x64x128xf32> to vector<64x128xf32>
    %239 = vector.shape_cast %236 : vector<64x128xf32> to vector<1x64x128xf32>
    tpu.vector_store %arg12[%c0_110, %c0_111, %c0_112], %239 {strides = array<i32>} : memref<1x64x128xf32, #tpu.memory_space<vmem>>, vector<1x64x128xf32>,
    return
  }
  func.func @transform_0(%arg0: i32) -> (i32, i32, i32) {
    %c0_i32 = arith.constant 0 : i32
    %c0_i32_0 = arith.constant 0 : i32
    %c0_i32_1 = arith.constant 0 : i32
    return %arg0, %c0_i32, %c0_i32_0 : i32, i32, i32
  }
  func.func @transform_1(%arg0: i32) -> (i32, i32, i32) {
    %c0_i32 = arith.constant 0 : i32
    %c0_i32_0 = arith.constant 0 : i32
    %c0_i32_1 = arith.constant 0 : i32
    return %arg0, %c0_i32, %c0_i32_0 : i32, i32, i32
  }
  func.func @transform_2(%arg0: i32) -> (i32, i32) {
    %c0_i32 = arith.constant 0 : i32
    %c0_i32_0 = arith.constant 0 : i32
    %c0_i32_1 = arith.constant 0 : i32
    return %c0_i32, %c0_i32_0 : i32, i32
  }
  func.func @transform_3(%arg0: i32) -> (i32, i32) {
    %c0_i32 = arith.constant 0 : i32
    %c0_i32_0 = arith.constant 0 : i32
    %c0_i32_1 = arith.constant 0 : i32
    return %c0_i32, %c0_i32_0 : i32, i32
  }
  func.func @transform_4(%arg0: i32) -> (i32, i32) {
    %c0_i32 = arith.constant 0 : i32
    %c0_i32_0 = arith.constant 0 : i32
    %c0_i32_1 = arith.constant 0 : i32
    return %c0_i32, %c0_i32_0 : i32, i32
  }
  func.func @transform_5(%arg0: i32) -> (i32, i32) {
    %c0_i32 = arith.constant 0 : i32
    %c0_i32_0 = arith.constant 0 : i32
    %c0_i32_1 = arith.constant 0 : i32
    return %c0_i32, %c0_i32_0 : i32, i32
  }
  func.func @transform_6(%arg0: i32) -> (i32, i32) {
    %c0_i32 = arith.constant 0 : i32
    %c0_i32_0 = arith.constant 0 : i32
    %c0_i32_1 = arith.constant 0 : i32
    return %c0_i32, %c0_i32_0 : i32, i32
  }
  func.func @transform_7(%arg0: i32) -> (i32, i32) {
    %c0_i32 = arith.constant 0 : i32
    %c0_i32_0 = arith.constant 0 : i32
    %c0_i32_1 = arith.constant 0 : i32
    return %c0_i32, %c0_i32_0 : i32, i32
  }
  func.func @transform_8(%arg0: i32) -> (i32, i32) {
    %c0_i32 = arith.constant 0 : i32
    %c0_i32_0 = arith.constant 0 : i32
    %c0_i32_1 = arith.constant 0 : i32
    return %c0_i32, %c0_i32_0 : i32, i32
  }
  func.func @transform_9(%arg0: i32) -> (i32, i32) {
    %c0_i32 = arith.constant 0 : i32
    %c0_i32_0 = arith.constant 0 : i32
    %c0_i32_1 = arith.constant 0 : i32
    return %c0_i32, %c0_i32_0 : i32, i32
  }
  func.func @transform_10(%arg0: i32) -> (i32, i32) {
    %c0_i32 = arith.constant 0 : i32
    %c0_i32_0 = arith.constant 0 : i32
    %c0_i32_1 = arith.constant 0 : i32
    return %c0_i32, %c0_i32_0 : i32, i32
  }
  func.func @transform_11(%arg0: i32) -> (i32, i32, i32) {
    %c0_i32 = arith.constant 0 : i32
    %c0_i32_0 = arith.constant 0 : i32
    %c0_i32_1 = arith.constant 0 : i32
    return %arg0, %c0_i32, %c0_i32_0 : i32, i32, i32
  }
}

</mosaic_0001>

<llo_original>
// kernel: tpu_custom_call.1
$region0: #{tpu_custom_call.1}
  #allocation0 [shape = 'u32[]', space=smem, size = 0x4, offset = 0x4, fixed_abs, tag = 'smem constant byte address 0x4 - core index']
  #allocation1 [shape = 'u32[144,128]{1,0:T(1,128)}', space=vmem, size = 0x12000, scoped, tag = 'internal scratch']
  #allocation2 [shape = 'f32[128,144]{1,0:T(8,128)}', space=vmem, size = 0x20000, scoped, tag = 'scratch operand']
  %s0 = inlined_call_operand.vmem [shape: f32[2,65,3], index: 0, kind: input, shape index: {}]
  %s1 = inlined_call_operand.vmem [shape: f32[2,65,65], index: 1, kind: input, shape index: {}]
  %s2 = inlined_call_operand.vmem [shape: f32[3,16], index: 2, kind: input, shape index: {}]
  %s3 = inlined_call_operand.vmem [shape: f32[16,32], index: 3, kind: input, shape index: {}]
  %s4 = inlined_call_operand.vmem [shape: f32[32,48], index: 4, kind: input, shape index: {}]
  %s5 = inlined_call_operand.vmem [shape: f32[48,64], index: 5, kind: input, shape index: {}]
  %s6 = inlined_call_operand.vmem [shape: f32[64,80], index: 6, kind: input, shape index: {}]
  %s7 = inlined_call_operand.vmem [shape: f32[80,96], index: 7, kind: input, shape index: {}]
  %s8 = inlined_call_operand.vmem [shape: f32[96,112], index: 8, kind: input, shape index: {}]
  %s9 = inlined_call_operand.vmem [shape: f32[112,128], index: 9, kind: input, shape index: {}]
  %s10 = inlined_call_operand.vmem [shape: f32[128,144], index: 10, kind: input, shape index: {}]
  %s11 = inlined_call_operand.hbm [shape: f32[2,64,128], index: 11, kind: output, shape index: {}]
  %s12 = sld [smem:[#allocation0]]
  $region77: #{tpu_custom_call.1} parent=0
    _
  %s14 = ssub.s32 1, %s12
  %s15 = scalar_select 0, %s14, %s12
  $region1: #{tpu_custom_call.1} parent=0
    #allocation3 [shape = 'u8[65536]{0}', space=vmem, size = 0x10000, scoped, tag = 'output window, operand 0']
    #allocation4 [shape = 's32[2]{0}', space=sflag, size = 0x8, scoped, tag = 'scoped memory for tpu_custom_call.1']
    %16 = vsyncpa [#allocation4], 0
    %s17 = scalar_lea.sflag [#allocation4], 1
    %18 = vsyncpa %s17, 0
    loop: start=0, step=1, limit=4
    $region2: #{tpu_custom_call.1} parent=1 // loop_pre_header
      _
    $region3: #{tpu_custom_call.1} parent=1 // loop_header
      %s20 = sphi 0, %s24
      %p21 = scmp.ge.s32.totalorder %s20, 4
      %s30 = sphi 0, %s32
      %s33 = sphi 0, %s30
      %s34 = sphi 0, %s33
      %s50 = sphi 0, %s34
      %s56 = sphi 0, %s58
      %s59 = sphi 0, %s56
      %s60 = sphi 0, %s59
      %s76 = sphi 0, %s60
      %s80 = sphi 0, %s80
      %s82 = sphi 0, %s80
      %s83 = sphi 0, %s82
      %s97 = sphi 0, %s83
      %s101 = sphi 0, %s101
      %s103 = sphi 0, %s101
      %s104 = sphi 0, %s103
      %s118 = sphi 0, %s104
      %s122 = sphi 0, %s122
      %s124 = sphi 0, %s122
      %s125 = sphi 0, %s124
      %s139 = sphi 0, %s125
      %s143 = sphi 0, %s143
      %s145 = sphi 0, %s143
      %s146 = sphi 0, %s145
      %s160 = sphi 0, %s146
      %s164 = sphi 0, %s164
      %s166 = sphi 0, %s164
      %s167 = sphi 0, %s166
      %s181 = sphi 0, %s167
      %s185 = sphi 0, %s185
      %s187 = sphi 0, %s185
      %s188 = sphi 0, %s187
      %s202 = sphi 0, %s188
      %s206 = sphi 0, %s206
      %s208 = sphi 0, %s206
      %s209 = sphi 0, %s208
      %s223 = sphi 0, %s209
      %s227 = sphi 0, %s227
      %s229 = sphi 0, %s227
      %s230 = sphi 0, %s229
      %s244 = sphi 0, %s230
      %s248 = sphi 0, %s248
      %s250 = sphi 0, %s248
      %s251 = sphi 0, %s250
      %s265 = sphi 0, %s251
      %s271 = sphi 0, %s273
      %s274 = sphi 0, %s271
      %s275 = sphi 0, %s274
      %s291 = sphi 0, %s275
    $region4: #{tpu_custom_call.1} parent=1 // loop_header_branch
      %23 = sbr.rel (%p21) target = $region8
    $region5: #{tpu_custom_call.1} parent=1 // loop_body
      %s25 = ssub.s32 %s20, 1
      %s26 = ssub.s32 %s20, 2
      %s27 = sadd.s32 %s20, 1
      %s28 = ssub.s32 %s20, %s27
      %p29 = scmp.eq.s32.totalorder %s28, 0
      %s31 = sadd.s32 %s30, 1
      %s32 = scalar_select %p29, %s30, %s31
      %p35 = pneg %p29
      %p36 = scmp.eq.s32.totalorder %s20, 1
      %p37 = por %p35, %p36
      %p38 = scmp.ne.s32.totalorder %s30, %s33
      %p39 = scmp.eq.s32.totalorder %s20, 0
      %p40 = por %p38, %p39
      %p41 = scmp.ne.s32.totalorder %s30, %s33
      %p42 = scmp.eq.s32.totalorder %s25, 1
      %p43 = por %p41, %p42
      %p44 = scmp.ne.s32.totalorder %s33, %s34
      %p45 = scmp.eq.s32.totalorder %s25, 0
      %p46 = por %p44, %p45
      %p47 = scmp.ne.s32.totalorder %s33, %s34
      %p48 = scmp.eq.s32.totalorder %s26, 1
      %p49 = por %p47, %p48
      %p51 = scmp.ne.s32.totalorder %s34, %s50
      %p52 = scmp.eq.s32.totalorder %s26, 0
      %p53 = por %p51, %p52
      %s54 = ssub.s32 %s20, %s27
      %p55 = scmp.eq.s32.totalorder %s54, 0
      %s57 = sadd.s32 %s56, 1
      %s58 = scalar_select %p55, %s56, %s57
      %p61 = pneg %p55
      %p62 = scmp.eq.s32.totalorder %s20, 1
      %p63 = por %p61, %p62
      %p64 = scmp.ne.s32.totalorder %s56, %s59
      %p65 = scmp.eq.s32.totalorder %s20, 0
      %p66 = por %p64, %p65
      %p67 = scmp.ne.s32.totalorder %s56, %s59
      %p68 = scmp.eq.s32.totalorder %s25, 1
      %p69 = por %p67, %p68
      %p70 = scmp.ne.s32.totalorder %s59, %s60
      %p71 = scmp.eq.s32.totalorder %s25, 0
      %p72 = por %p70, %p71
      %p73 = scmp.ne.s32.totalorder %s59, %s60
      %p74 = scmp.eq.s32.totalorder %s26, 1
      %p75 = por %p73, %p74
      %p77 = scmp.ne.s32.totalorder %s60, %s76
      %p78 = scmp.eq.s32.totalorder %s26, 0
      %p79 = por %p77, %p78
      %s81 = sadd.s32 %s80, 1
      %p84 = scmp.eq.s32.totalorder %s20, 1
      %p85 = scmp.ne.s32.totalorder %s80, %s82
      %p86 = scmp.eq.s32.totalorder %s20, 0
      %p87 = por %p85, %p86
      %p88 = scmp.ne.s32.totalorder %s80, %s82
      %p89 = scmp.eq.s32.totalorder %s25, 1
      %p90 = por %p88, %p89
      %p91 = scmp.ne.s32.totalorder %s82, %s83
      %p92 = scmp.eq.s32.totalorder %s25, 0
      %p93 = por %p91, %p92
      %p94 = scmp.ne.s32.totalorder %s82, %s83
      %p95 = scmp.eq.s32.totalorder %s26, 1
      %p96 = por %p94, %p95
      %p98 = scmp.ne.s32.totalorder %s83, %s97
      %p99 = scmp.eq.s32.totalorder %s26, 0
      %p100 = por %p98, %p99
      %s102 = sadd.s32 %s101, 1
      %p105 = scmp.eq.s32.totalorder %s20, 1
      %p106 = scmp.ne.s32.totalorder %s101, %s103
      %p107 = scmp.eq.s32.totalorder %s20, 0
      %p108 = por %p106, %p107
      %p109 = scmp.ne.s32.totalorder %s101, %s103
      %p110 = scmp.eq.s32.totalorder %s25, 1
      %p111 = por %p109, %p110
      %p112 = scmp.ne.s32.totalorder %s103, %s104
      %p113 = scmp.eq.s32.totalorder %s25, 0
      %p114 = por %p112, %p113
      %p115 = scmp.ne.s32.totalorder %s103, %s104
      %p116 = scmp.eq.s32.totalorder %s26, 1
      %p117 = por %p115, %p116
      %p119 = scmp.ne.s32.totalorder %s104, %s118
      %p120 = scmp.eq.s32.totalorder %s26, 0
      %p121 = por %p119, %p120
      %s123 = sadd.s32 %s122, 1
      %p126 = scmp.eq.s32.totalorder %s20, 1
      %p127 = scmp.ne.s32.totalorder %s122, %s124
      %p128 = scmp.eq.s32.totalorder %s20, 0
      %p129 = por %p127, %p128
      %p130 = scmp.ne.s32.totalorder %s122, %s124
      %p131 = scmp.eq.s32.totalorder %s25, 1
      %p132 = por %p130, %p131
      %p133 = scmp.ne.s32.totalorder %s124, %s125
      %p134 = scmp.eq.s32.totalorder %s25, 0
      %p135 = por %p133, %p134
      %p136 = scmp.ne.s32.totalorder %s124, %s125
      %p137 = scmp.eq.s32.totalorder %s26, 1
      %p138 = por %p136, %p137
      %p140 = scmp.ne.s32.totalorder %s125, %s139
      %p141 = scmp.eq.s32.totalorder %s26, 0
      %p142 = por %p140, %p141
      %s144 = sadd.s32 %s143, 1
      %p147 = scmp.eq.s32.totalorder %s20, 1
      %p148 = scmp.ne.s32.totalorder %s143, %s145
      %p149 = scmp.eq.s32.totalorder %s20, 0
      %p150 = por %p148, %p149
      %p151 = scmp.ne.s32.totalorder %s143, %s145
      %p152 = scmp.eq.s32.totalorder %s25, 1
      %p153 = por %p151, %p152
      %p154 = scmp.ne.s32.totalorder %s145, %s146
      %p155 = scmp.eq.s32.totalorder %s25, 0
      %p156 = por %p154, %p155
      %p157 = scmp.ne.s32.totalorder %s145, %s146
      %p158 = scmp.eq.s32.totalorder %s26, 1
      %p159 = por %p157, %p158
      %p161 = scmp.ne.s32.totalorder %s146, %s160
      %p162 = scmp.eq.s32.totalorder %s26, 0
      %p163 = por %p161, %p162
      %s165 = sadd.s32 %s164, 1
      %p168 = scmp.eq.s32.totalorder %s20, 1
      %p169 = scmp.ne.s32.totalorder %s164, %s166
      %p170 = scmp.eq.s32.totalorder %s20, 0
      %p171 = por %p169, %p170
      %p172 = scmp.ne.s32.totalorder %s164, %s166
      %p173 = scmp.eq.s32.totalorder %s25, 1
      %p174 = por %p172, %p173
      %p175 = scmp.ne.s32.totalorder %s166, %s167
      %p176 = scmp.eq.s32.totalorder %s25, 0
      %p177 = por %p175, %p176
      %p178 = scmp.ne.s32.totalorder %s166, %s167
      %p179 = scmp.eq.s32.totalorder %s26, 1
      %p180 = por %p178, %p179
      %p182 = scmp.ne.s32.totalorder %s167, %s181
      %p183 = scmp.eq.s32.totalorder %s26, 0
      %p184 = por %p182, %p183
      %s186 = sadd.s32 %s185, 1
      %p189 = scmp.eq.s32.totalorder %s20, 1
      %p190 = scmp.ne.s32.totalorder %s185, %s187
      %p191 = scmp.eq.s32.totalorder %s20, 0
      %p192 = por %p190, %p191
      %p193 = scmp.ne.s32.totalorder %s185, %s187
      %p194 = scmp.eq.s32.totalorder %s25, 1
      %p195 = por %p193, %p194
      %p196 = scmp.ne.s32.totalorder %s187, %s188
      %p197 = scmp.eq.s32.totalorder %s25, 0
      %p198 = por %p196, %p197
      %p199 = scmp.ne.s32.totalorder %s187, %s188
      %p200 = scmp.eq.s32.totalorder %s26, 1
      %p201 = por %p199, %p200
      %p203 = scmp.ne.s32.totalorder %s188, %s202
      %p204 = scmp.eq.s32.totalorder %s26, 0
      %p205 = por %p203, %p204
      %s207 = sadd.s32 %s206, 1
      %p210 = scmp.eq.s32.totalorder %s20, 1
      %p211 = scmp.ne.s32.totalorder %s206, %s208
      %p212 = scmp.eq.s32.totalorder %s20, 0
      %p213 = por %p211, %p212
      %p214 = scmp.ne.s32.totalorder %s206, %s208
      %p215 = scmp.eq.s32.totalorder %s25, 1
      %p216 = por %p214, %p215
      %p217 = scmp.ne.s32.totalorder %s208, %s209
      %p218 = scmp.eq.s32.totalorder %s25, 0
      %p219 = por %p217, %p218
      %p220 = scmp.ne.s32.totalorder %s208, %s209
      %p221 = scmp.eq.s32.totalorder %s26, 1
      %p222 = por %p220, %p221
      %p224 = scmp.ne.s32.totalorder %s209, %s223
      %p225 = scmp.eq.s32.totalorder %s26, 0
      %p226 = por %p224, %p225
      %s228 = sadd.s32 %s227, 1
      %p231 = scmp.eq.s32.totalorder %s20, 1
      %p232 = scmp.ne.s32.totalorder %s227, %s229
      %p233 = scmp.eq.s32.totalorder %s20, 0
      %p234 = por %p232, %p233
      %p235 = scmp.ne.s32.totalorder %s227, %s229
      %p236 = scmp.eq.s32.totalorder %s25, 1
      %p237 = por %p235, %p236
      %p238 = scmp.ne.s32.totalorder %s229, %s230
      %p239 = scmp.eq.s32.totalorder %s25, 0
      %p240 = por %p238, %p239
      %p241 = scmp.ne.s32.totalorder %s229, %s230
      %p242 = scmp.eq.s32.totalorder %s26, 1
      %p243 = por %p241, %p242
      %p245 = scmp.ne.s32.totalorder %s230, %s244
      %p246 = scmp.eq.s32.totalorder %s26, 0
      %p247 = por %p245, %p246
      %s249 = sadd.s32 %s248, 1
      %p252 = scmp.eq.s32.totalorder %s20, 1
      %p253 = scmp.ne.s32.totalorder %s248, %s250
      %p254 = scmp.eq.s32.totalorder %s20, 0
      %p255 = por %p253, %p254
      %p256 = scmp.ne.s32.totalorder %s248, %s250
      %p257 = scmp.eq.s32.totalorder %s25, 1
      %p258 = por %p256, %p257
      %p259 = scmp.ne.s32.totalorder %s250, %s251
      %p260 = scmp.eq.s32.totalorder %s25, 0
      %p261 = por %p259, %p260
      %p262 = scmp.ne.s32.totalorder %s250, %s251
      %p263 = scmp.eq.s32.totalorder %s26, 1
      %p264 = por %p262, %p263
      %p266 = scmp.ne.s32.totalorder %s251, %s265
      %p267 = scmp.eq.s32.totalorder %s26, 0
      %p268 = por %p266, %p267
      %s269 = ssub.s32 %s20, %s27
      %p270 = scmp.eq.s32.totalorder %s269, 0
      %s272 = sadd.s32 %s271, 1
      %s273 = scalar_select %p270, %s271, %s272
      %p276 = pneg %p270
      %p277 = scmp.eq.s32.totalorder %s20, 1
      %p278 = por %p276, %p277
      %p279 = scmp.ne.s32.totalorder %s271, %s274
      %p280 = scmp.eq.s32.totalorder %s20, 0
      %p281 = por %p279, %p280
      %p282 = scmp.ne.s32.totalorder %s271, %s274
      %p283 = scmp.eq.s32.totalorder %s25, 1
      %p284 = por %p282, %p283
      %p285 = scmp.ne.s32.totalorder %s274, %s275
      %p286 = scmp.eq.s32.totalorder %s25, 0
      %p287 = por %p285, %p286
      %p288 = scmp.ne.s32.totalorder %s274, %s275
      %p289 = scmp.eq.s32.totalorder %s26, 1
      %p290 = por %p288, %p289
      %p292 = scmp.ne.s32.totalorder %s275, %s291
      %p293 = scmp.eq.s32.totalorder %s26, 0
      %p294 = por %p292, %p293
      %p295 = scmp.le.s32.totalorder 1, %s20
      %p296 = scmp.lt.s32.totalorder %s20, 3
      %p297 = pnand %p295, %p296
      %p298 = pneg %p297
      // Predicated region
      $region9: #{tpu_custom_call.1} parent=5 // pred_check
        _
      $region10: #{tpu_custom_call.1} parent=5 // pred_check_branch
        %300 = sbr.rel (%p297) target = $region12
      $region11: #{tpu_custom_call.1} parent=5 // pred_region
        %s301 = ssub.s32 %s20, 1
        // Predicated region
        $region13: #{tpu_custom_call.1} parent=11 // pred_check
          %p302 = pneg %p93
        $region14: #{tpu_custom_call.1} parent=11 // pred_check_branch
          %304 = sbr.rel (%p302) target = $region16
        $region15: #{tpu_custom_call.1} parent=11 // pred_region
          _
        $region16: #{tpu_custom_call.1} parent=11 // pred_fallthru
          _
        // Predicated region
        $region17: #{tpu_custom_call.1} parent=11 // pred_check
          %p305 = pneg %p114
        $region18: #{tpu_custom_call.1} parent=11 // pred_check_branch
          %307 = sbr.rel (%p305) target = $region20
        $region19: #{tpu_custom_call.1} parent=11 // pred_region
          _
        $region20: #{tpu_custom_call.1} parent=11 // pred_fallthru
          _
        // Predicated region
        $region21: #{tpu_custom_call.1} parent=11 // pred_check
          %p308 = pneg %p135
        $region22: #{tpu_custom_call.1} parent=11 // pred_check_branch
          %310 = sbr.rel (%p308) target = $region24
        $region23: #{tpu_custom_call.1} parent=11 // pred_region
          _
        $region24: #{tpu_custom_call.1} parent=11 // pred_fallthru
          _
        // Predicated region
        $region25: #{tpu_custom_call.1} parent=11 // pred_check
          %p311 = pneg %p156
        $region26: #{tpu_custom_call.1} parent=11 // pred_check_branch
          %313 = sbr.rel (%p311) target = $region28
        $region27: #{tpu_custom_call.1} parent=11 // pred_region
          _
        $region28: #{tpu_custom_call.1} parent=11 // pred_fallthru
          _
        // Predicated region
        $region29: #{tpu_custom_call.1} parent=11 // pred_check
          %p314 = pneg %p177
        $region30: #{tpu_custom_call.1} parent=11 // pred_check_branch
          %316 = sbr.rel (%p314) target = $region32
        $region31: #{tpu_custom_call.1} parent=11 // pred_region
          _
        $region32: #{tpu_custom_call.1} parent=11 // pred_fallthru
          _
        // Predicated region
        $region33: #{tpu_custom_call.1} parent=11 // pred_check
          %p317 = pneg %p198
        $region34: #{tpu_custom_call.1} parent=11 // pred_check_branch
          %319 = sbr.rel (%p317) target = $region36
        $region35: #{tpu_custom_call.1} parent=11 // pred_region
          _
        $region36: #{tpu_custom_call.1} parent=11 // pred_fallthru
          _
        // Predicated region
        $region37: #{tpu_custom_call.1} parent=11 // pred_check
          %p320 = pneg %p219
        $region38: #{tpu_custom_call.1} parent=11 // pred_check_branch
          %322 = sbr.rel (%p320) target = $region40
        $region39: #{tpu_custom_call.1} parent=11 // pred_region
          _
        $region40: #{tpu_custom_call.1} parent=11 // pred_fallthru
          _
        // Predicated region
        $region41: #{tpu_custom_call.1} parent=11 // pred_check
          %p323 = pneg %p240
        $region42: #{tpu_custom_call.1} parent=11 // pred_check_branch
          %325 = sbr.rel (%p323) target = $region44
        $region43: #{tpu_custom_call.1} parent=11 // pred_region
          _
        $region44: #{tpu_custom_call.1} parent=11 // pred_fallthru
          _
        // Predicated region
        $region45: #{tpu_custom_call.1} parent=11 // pred_check
          %p326 = pneg %p261
        $region46: #{tpu_custom_call.1} parent=11 // pred_check_branch
          %328 = sbr.rel (%p326) target = $region48
        $region47: #{tpu_custom_call.1} parent=11 // pred_region
          _
        $region48: #{tpu_custom_call.1} parent=11 // pred_fallthru
          _
      $region12: #{tpu_custom_call.1} parent=5 // pred_fallthru
        _
      %p329 = scmp.lt.s32.totalorder %s20, 2
      // Predicated region
      $region49: #{tpu_custom_call.1} parent=5 // pred_check
        %p330 = pneg %p329
      $region50: #{tpu_custom_call.1} parent=5 // pred_check_branch
        %332 = sbr.rel (%p330) target = $region52
      $region51: #{tpu_custom_call.1} parent=5 // pred_region
        // Predicated region
        $region53: #{tpu_custom_call.1} parent=51 // pred_check
          %p333 = pneg %p40
        $region54: #{tpu_custom_call.1} parent=51 // pred_check_branch
          %335 = sbr.rel (%p333) target = $region56
        $region55: #{tpu_custom_call.1} parent=51 // pred_region
          %p336 = scmp.lt.s32.totalorder %s20, 1
          %s337 = scalar_select %p336, %s20, 1
          %s338 = smul.addr %s337, 9
          %s339 = smul.addr %s338, 8
          %s340 = scalar_lea.vmem %s0, %s339
        $region56: #{tpu_custom_call.1} parent=51 // pred_fallthru
          _
        // Predicated region
        $region57: #{tpu_custom_call.1} parent=51 // pred_check
          %p341 = pneg %p66
        $region58: #{tpu_custom_call.1} parent=51 // pred_check_branch
          %343 = sbr.rel (%p341) target = $region60
        $region59: #{tpu_custom_call.1} parent=51 // pred_region
          %p344 = scmp.lt.s32.totalorder %s20, 1
          %s345 = scalar_select %p344, %s20, 1
          %s346 = smul.addr %s345, 9
          %s347 = smul.addr %s346, 8
          %s348 = scalar_lea.vmem %s1, %s347
        $region60: #{tpu_custom_call.1} parent=51 // pred_fallthru
          _
      $region52: #{tpu_custom_call.1} parent=5 // pred_fallthru
        _
      %p349 = scmp.le.s32.totalorder 1, %s20
      %p350 = scmp.lt.s32.totalorder %s20, 3
      %p351 = pnand %p349, %p350
      %p352 = pneg %p351
      // Predicated region
      $region61: #{tpu_custom_call.1} parent=5 // pred_check
        _
      $region62: #{tpu_custom_call.1} parent=5 // pred_check_branch
        %354 = sbr.rel (%p351) target = $region64
      $region63: #{tpu_custom_call.1} parent=5 // pred_region
        %s355 = ssub.s32 %s20, 1
        %p356 = scmp.lt.s32.totalorder %s25, 1
        %s357 = scalar_select %p356, %s25, 1
        %s358 = smul.addr %s357, 9
        %s359 = smul.addr %s358, 8
        %s360 = scalar_lea.vmem %s0, %s359
        %p361 = pneg %p46
        %p362 = pneg %p43
        %p363 = scmp.lt.s32.totalorder %s25, 1
        %s364 = scalar_select %p363, %s25, 1
        %s365 = smul.addr %s364, 9
        %s366 = smul.addr %s365, 8
        %s367 = scalar_lea.vmem %s1, %s366
        %p368 = pneg %p72
        %p369 = pneg %p69
        %p370 = pneg %p93
        %p371 = pneg %p90
        %p372 = pneg %p114
        %p373 = pneg %p111
        %p374 = pneg %p135
        %p375 = pneg %p132
        %p376 = pneg %p156
        %p377 = pneg %p153
        %p378 = pneg %p177
        %p379 = pneg %p174
        %p380 = pneg %p198
        %p381 = pneg %p195
        %p382 = pneg %p219
        %p383 = pneg %p216
        %p384 = pneg %p240
        %p385 = pneg %p237
        %p386 = pneg %p261
        %p387 = pneg %p258
        %p388 = pneg %p287
        %p389 = pneg %p284
        %s390 = sand.u32 %s274, 1
        %s391 = scalar_lea.sflag [#allocation4], %s390
        %s392 = sand.u32 %s274, 1
        %s393 = smul.addr %s392, 64
        %s394 = scalar_lea.vmem [#allocation3], %s393
        %p395 = scmp.lt.s32.totalorder %s25, 1
        %s396 = scalar_select %p395, %s25, 1
        %s397 = smul.addr %s396, 9
        %s398 = smul.addr %s397, 8
        %s399 = scalar_lea.vmem %s0, %s398
        %p400 = scmp.lt.s32.totalorder %s25, 1
        %s401 = scalar_select %p400, %s25, 1
        %s402 = smul.addr %s401, 9
        %s403 = smul.addr %s402, 8
        %s404 = scalar_lea.vmem %s1, %s403
        %v405 = vld [vmem:[%s399] sm:$0xff]
        %v406 = vld [vmem:[%s399 + $0x8] sm:$0xff]
        %v407 = vld [vmem:[%s399 + $0x10] sm:$0xff]
        %v408 = vld [vmem:[%s399 + $0x18] sm:$0xff]
        %v409 = vld [vmem:[%s399 + $0x20] sm:$0xff]
        %v410 = vld [vmem:[%s399 + $0x28] sm:$0xff]
        %v411 = vld [vmem:[%s399 + $0x30] sm:$0xff]
        %v412 = vld [vmem:[%s399 + $0x38] sm:$0xff]
        %v413 = vld [vmem:[%s399 + $0x40] sm:$0x1]
        %v414 = vld [vmem:[%s404] sm:$0xff]
        %v415 = vld [vmem:[%s404 + $0x8] sm:$0xff]
        %v416 = vld [vmem:[%s404 + $0x10] sm:$0xff]
        %v417 = vld [vmem:[%s404 + $0x18] sm:$0xff]
        %v418 = vld [vmem:[%s404 + $0x20] sm:$0xff]
        %v419 = vld [vmem:[%s404 + $0x28] sm:$0xff]
        %v420 = vld [vmem:[%s404 + $0x30] sm:$0xff]
        %v421 = vld [vmem:[%s404 + $0x38] sm:$0xff]
        %v422 = vld [vmem:[%s404 + $0x40] sm:$0x1]
        %vm423 = vcmask 531456
        %v425 = vsel %vm423, %v414, 0
        %v428 = vsel %vm423, %v415, 0
        %v431 = vsel %vm423, %v416, 0
        %v434 = vsel %vm423, %v417, 0
        %v437 = vsel %vm423, %v418, 0
        %v440 = vsel %vm423, %v419, 0
        %v443 = vsel %vm423, %v420, 0
        %v446 = vsel %vm423, %v421, 0
        %v449 = vsel %vm423, %v422, 0
        %vm451 = vcmask 1040384
        %v453 = vsel %vm451, %v413, 0
        %455 = vmatprep.subr.mxu0 0.0
        %456 = vmatpush1.msra.mxu0 %v405
        %457 = vmatprep.subr.mxu0 0.0
        %458 = vmatpush1.msra.mxu0 %v406
        %459 = vmatprep.subr.mxu0 0.0
        %460 = vmatpush1.msra.mxu0 %v407
        %461 = vmatprep.subr.mxu0 0.0
        %462 = vmatpush1.msra.mxu0 %v408
        %463 = vmatprep.subr.mxu0 0.0
        %464 = vmatpush1.msra.mxu0 %v409
        %465 = vmatprep.subr.mxu0 0.0
        %466 = vmatpush1.msra.mxu0 %v410
        %467 = vmatprep.subr.mxu0 0.0
        %468 = vmatpush1.msra.mxu0 %v411
        %469 = vmatprep.subr.mxu0 0.0
        %470 = vmatpush1.msra.mxu0 %v412
        %471 = vmatprep.subr.mxu0 0.0
        %472 = vmatpush1.msra.mxu0 %v453
        %473 = vmatprep.subr.mxu0 0.0
        %474 = vmatpush1.msra.mxu0 0.0
        %475 = vmatprep.subr.mxu0 0.0
        %476 = vmatpush1.msra.mxu0 0.0
        %477 = vmatprep.subr.mxu0 0.0
        %478 = vmatpush1.msra.mxu0 0.0
        %479 = vmatprep.subr.mxu0 0.0
        %480 = vmatpush1.msra.mxu0 0.0
        %481 = vmatprep.subr.mxu0 0.0
        %482 = vmatpush1.msra.mxu0 0.0
        %483 = vmatprep.subr.mxu0 0.0
        %484 = vmatpush1.msra.mxu0 0.0
        %485 = vmatprep.subr.mxu0 0.0
        %486 = vmatpush1.msra.mxu0 0.0
        %487 = vmatprep.subr.mxu0 0.0
        %488 = vmatpush1.msra.mxu0 0.0
        %489 = vmatprep.subr.mxu0 0.0
        %490 = vmatpush1.msra.mxu0 0.0
        %491 = vmatprep.subr.mxu0 0.0
        %492 = vmatpush1.msra.mxu0 0.0
        %493 = vmatprep.subr.mxu0 0.0
        %494 = vmatpush1.msra.mxu0 0.0
        %495 = vmatprep.subr.mxu0 0.0
        %496 = vmatpush1.msra.mxu0 0.0
        %497 = vmatprep.subr.mxu0 0.0
        %498 = vmatpush1.msra.mxu0 0.0
        %499 = vmatprep.subr.mxu0 0.0
        %500 = vmatpush1.msra.mxu0 0.0
        %501 = vmatprep.subr.mxu0 0.0
        %502 = vmatpush1.msra.mxu0 0.0
        %503 = vmatprep.subr.mxu0 0.0
        %504 = vmatpush1.msra.mxu0 0.0
        %505 = vmatprep.subr.mxu0 0.0
        %506 = vmatpush1.msra.mxu0 0.0
        %507 = vmatprep.subr.mxu0 0.0
        %508 = vmatpush1.msra.mxu0 0.0
        %509 = vmatprep.subr.mxu0 0.0
        %510 = vmatpush1.msra.mxu0 0.0
        %511 = vmatprep.subr.mxu0 0.0
        %512 = vmatpush1.msra.mxu0 0.0
        %513 = vmatprep.subr.mxu0 0.0
        %514 = vmatpush1.msra.mxu0 0.0
        %515 = vmatprep.subr.mxu0 0.0
        %516 = vmatpush1.msra.mxu0 0.0
        %517 = vmatprep.subr.mxu0 0.0
        %518 = vmatpush1.msra.mxu0 0.0
        %519 = vmatprep.mubr.f32.mxu0 0.0
        %520 = vmatmul.mubr.f32.gmra.mrb[0].mxu0 %v425
        %v521 = vpop.f32.mrb[0].mxu0
        %v522 = vadd.f32 0.0, %v521
        %v523 = vpop.f32.mrb[0].mxu0
        %524 = vmatprep.mubr.f32.mxu0 0.0
        %525 = vmatmul.mubr.f32.gmra.mrb[0].mxu0 %v428
        %v526 = vpop.f32.mrb[0].mxu0
        %v527 = vadd.f32 0.0, %v526
        %v528 = vpop.f32.mrb[0].mxu0
        %529 = vmatprep.mubr.f32.mxu0 0.0
        %530 = vmatmul.mubr.f32.gmra.mrb[0].mxu0 %v431
        %v531 = vpop.f32.mrb[0].mxu0
        %v532 = vadd.f32 0.0, %v531
        %v533 = vpop.f32.mrb[0].mxu0
        %534 = vmatprep.mubr.f32.mxu0 0.0
        %535 = vmatmul.mubr.f32.gmra.mrb[0].mxu0 %v434
        %v536 = vpop.f32.mrb[0].mxu0
        %v537 = vadd.f32 0.0, %v536
        %v538 = vpop.f32.mrb[0].mxu0
        %539 = vmatprep.mubr.f32.mxu0 0.0
        %540 = vmatmul.mubr.f32.gmra.mrb[0].mxu0 %v437
        %v541 = vpop.f32.mrb[0].mxu0
        %v542 = vadd.f32 0.0, %v541
        %v543 = vpop.f32.mrb[0].mxu0
        %544 = vmatprep.mubr.f32.mxu0 0.0
        %545 = vmatmul.mubr.f32.gmra.mrb[0].mxu0 %v440
        %v546 = vpop.f32.mrb[0].mxu0
        %v547 = vadd.f32 0.0, %v546
        %v548 = vpop.f32.mrb[0].mxu0
        %549 = vmatprep.mubr.f32.mxu0 0.0
        %550 = vmatmul.mubr.f32.gmra.mrb[0].mxu0 %v443
        %v551 = vpop.f32.mrb[0].mxu0
        %v552 = vadd.f32 0.0, %v551
        %v553 = vpop.f32.mrb[0].mxu0
        %554 = vmatprep.mubr.f32.mxu0 0.0
        %555 = vmatmul.mubr.f32.gmra.mrb[0].mxu0 %v446
        %v556 = vpop.f32.mrb[0].mxu0
        %v557 = vadd.f32 0.0, %v556
        %v558 = vpop.f32.mrb[0].mxu0
        %559 = vmatprep.mubr.f32.mxu0 0.0
        %560 = vmatmul.mubr.f32.gmra.mrb[0].mxu0 %v449
        %v561 = vpop.f32.mrb[0].mxu0
        %v562 = vadd.f32 0.0, %v561
        %v563 = vpop.f32.mrb[0].mxu0
        %564 = vdwg.mxu0
        %v565 = vld [vmem:[%s2] sm:$0x7]
        %567 = vset.pattern.permute.xlu0 0
        %568 = vperm.xlu0 %567, %v522
        %v569 = vpop.permute.xlu0 %568
        %572 = vset.pattern.permute.xlu0 0
        %573 = vperm.xlu0 %572, %v527
        %v574 = vpop.permute.xlu0 %573
        %577 = vset.pattern.permute.xlu0 0
        %578 = vperm.xlu0 %577, %v532
        %v579 = vpop.permute.xlu0 %578
        %582 = vset.pattern.permute.xlu0 0
        %583 = vperm.xlu0 %582, %v537
        %v584 = vpop.permute.xlu0 %583
        %587 = vset.pattern.permute.xlu0 0
        %588 = vperm.xlu0 %587, %v542
        %v589 = vpop.permute.xlu0 %588
        %592 = vset.pattern.permute.xlu0 0
        %593 = vperm.xlu0 %592, %v547
        %v594 = vpop.permute.xlu0 %593
        %597 = vset.pattern.permute.xlu0 0
        %598 = vperm.xlu0 %597, %v552
        %v599 = vpop.permute.xlu0 %598
        %602 = vset.pattern.permute.xlu0 0
        %603 = vperm.xlu0 %602, %v557
        %v604 = vpop.permute.xlu0 %603
        %607 = vset.pattern.permute.xlu0 0
        %608 = vperm.xlu0 %607, %v562
        %v609 = vpop.permute.xlu0 %608
        %v611 = vlaneseq
        %v612 = vshrl.u32 %v611, 7
        %v613 = vsub.s32 0, %v612
        %v614 = vrot.slane %v565, %v613
        %v615 = vmul.f32 %v569, %v614
        %v616 = vmul.f32 %v574, %v614
        %v617 = vmul.f32 %v579, %v614
        %v618 = vmul.f32 %v584, %v614
        %v619 = vmul.f32 %v589, %v614
        %v620 = vmul.f32 %v594, %v614
        %v621 = vmul.f32 %v599, %v614
        %v622 = vmul.f32 %v604, %v614
        %v623 = vmul.f32 %v609, %v614
        %624 = vset.pattern.permute.xlu0 1
        %625 = vperm.xlu0 %624, %v522
        %v626 = vpop.permute.xlu0 %625
        %628 = vset.pattern.permute.xlu0 1
        %629 = vperm.xlu0 %628, %v527
        %v630 = vpop.permute.xlu0 %629
        %632 = vset.pattern.permute.xlu0 1
        %633 = vperm.xlu0 %632, %v532
        %v634 = vpop.permute.xlu0 %633
        %636 = vset.pattern.permute.xlu0 1
        %637 = vperm.xlu0 %636, %v537
        %v638 = vpop.permute.xlu0 %637
        %640 = vset.pattern.permute.xlu0 1
        %641 = vperm.xlu0 %640, %v542
        %v642 = vpop.permute.xlu0 %641
        %644 = vset.pattern.permute.xlu0 1
        %645 = vperm.xlu0 %644, %v547
        %v646 = vpop.permute.xlu0 %645
        %648 = vset.pattern.permute.xlu0 1
        %649 = vperm.xlu0 %648, %v552
        %v650 = vpop.permute.xlu0 %649
        %652 = vset.pattern.permute.xlu0 1
        %653 = vperm.xlu0 %652, %v557
        %v654 = vpop.permute.xlu0 %653
        %656 = vset.pattern.permute.xlu0 1
        %657 = vperm.xlu0 %656, %v562
        %v658 = vpop.permute.xlu0 %657
        %v660 = vlaneseq
        %v661 = vshrl.u32 %v660, 7
        %v662 = vsub.s32 1, %v661
        %v663 = vrot.slane %v565, %v662
        %v664 = vmul.f32 %v626, %v663
        %v665 = vmul.f32 %v630, %v663
        %v666 = vmul.f32 %v634, %v663
        %v667 = vmul.f32 %v638, %v663
        %v668 = vmul.f32 %v642, %v663
        %v669 = vmul.f32 %v646, %v663
        %v670 = vmul.f32 %v650, %v663
        %v671 = vmul.f32 %v654, %v663
        %v672 = vmul.f32 %v658, %v663
        %v673 = vadd.f32 %v615, %v664
        %v674 = vadd.f32 %v616, %v665
        %v675 = vadd.f32 %v617, %v666
        %v676 = vadd.f32 %v618, %v667
        %v677 = vadd.f32 %v619, %v668
        %v678 = vadd.f32 %v620, %v669
        %v679 = vadd.f32 %v621, %v670
        %v680 = vadd.f32 %v622, %v671
        %v681 = vadd.f32 %v623, %v672
        %682 = vset.pattern.permute.xlu0 2
        %683 = vperm.xlu0 %682, %v522
        %v684 = vpop.permute.xlu0 %683
        %686 = vset.pattern.permute.xlu0 2
        %687 = vperm.xlu0 %686, %v527
        %v688 = vpop.permute.xlu0 %687
        %690 = vset.pattern.permute.xlu0 2
        %691 = vperm.xlu0 %690, %v532
        %v692 = vpop.permute.xlu0 %691
        %694 = vset.pattern.permute.xlu0 2
        %695 = vperm.xlu0 %694, %v537
        %v696 = vpop.permute.xlu0 %695
        %698 = vset.pattern.permute.xlu0 2
        %699 = vperm.xlu0 %698, %v542
        %v700 = vpop.permute.xlu0 %699
        %702 = vset.pattern.permute.xlu0 2
        %703 = vperm.xlu0 %702, %v547
        %v704 = vpop.permute.xlu0 %703
        %706 = vset.pattern.permute.xlu0 2
        %707 = vperm.xlu0 %706, %v552
        %v708 = vpop.permute.xlu0 %707
        %710 = vset.pattern.permute.xlu0 2
        %711 = vperm.xlu0 %710, %v557
        %v712 = vpop.permute.xlu0 %711
        %714 = vset.pattern.permute.xlu0 2
        %715 = vperm.xlu0 %714, %v562
        %v716 = vpop.permute.xlu0 %715
        %v718 = vlaneseq
        %v719 = vshrl.u32 %v718, 7
        %v720 = vsub.s32 2, %v719
        %v721 = vrot.slane %v565, %v720
        %v722 = vmul.f32 %v684, %v721
        %v723 = vmul.f32 %v688, %v721
        %v724 = vmul.f32 %v692, %v721
        %v725 = vmul.f32 %v696, %v721
        %v726 = vmul.f32 %v700, %v721
        %v727 = vmul.f32 %v704, %v721
        %v728 = vmul.f32 %v708, %v721
        %v729 = vmul.f32 %v712, %v721
        %v730 = vmul.f32 %v716, %v721
        %v731 = vadd.f32 %v673, %v722
        %v732 = vadd.f32 %v674, %v723
        %v733 = vadd.f32 %v675, %v724
        %v734 = vadd.f32 %v676, %v725
        %v735 = vadd.f32 %v677, %v726
        %v736 = vadd.f32 %v678, %v727
        %v737 = vadd.f32 %v679, %v728
        %v738 = vadd.f32 %v680, %v729
        %v739 = vadd.f32 %v681, %v730
        %v740 = vmul.f32 %v731, %v731
        %v741 = vmul.f32 %v732, %v732
        %v742 = vmul.f32 %v733, %v733
        %v743 = vmul.f32 %v734, %v734
        %v744 = vmul.f32 %v735, %v735
        %v745 = vmul.f32 %v736, %v736
        %v746 = vmul.f32 %v737, %v737
        %v747 = vmul.f32 %v738, %v738
        %v748 = vmul.f32 %v739, %v739
        %vm749 = vcmask 130048
        %v750 = vsel %vm749, %v740, 0.0
        %v751 = vsel %vm749, %v741, 0.0
        %v752 = vadd.f32 %v750, %v751
        %v753 = vsel %vm749, %v742, 0.0
        %v754 = vadd.f32 %v752, %v753
        %v755 = vsel %vm749, %v743, 0.0
        %v756 = vadd.f32 %v754, %v755
        %v757 = vsel %vm749, %v744, 0.0
        %v758 = vadd.f32 %v756, %v757
        %v759 = vsel %vm749, %v745, 0.0
        %v760 = vadd.f32 %v758, %v759
        %v761 = vsel %vm749, %v746, 0.0
        %v762 = vadd.f32 %v760, %v761
        %v763 = vsel %vm749, %v747, 0.0
        %v764 = vadd.f32 %v762, %v763
        %vm765 = vcmask 122880
        %v766 = vsel %vm765, %v748, 0.0
        %v767 = vadd.f32 %v764, %v766
        %v768 = vrot.slane %v767, 4
        %v769 = vadd.f32 %v767, %v768
        %v770 = vrot.slane %v769, 2
        %v771 = vadd.f32 %v769, %v770
        %v772 = vrot.slane %v771, 1
        %v773 = vadd.f32 %v771, %v772
        %v774 = vsub.f32 %v773, %v748
        %v775 = vmul.f32 %v774, 0.015625
        %v776 = vsub.f32 %v775, %v748
        %v777 = vmax.f32 %v776, 0.0
        %v778 = vlaneseq
        %v779 = vshrl.u32 %v778, 7
        %v780 = vsub.s32 0, %v779
        %v781 = vrot.slane %v739, %v780
        %v782 = vsub.f32 %v731, %v781
        %v783 = vsub.f32 %v732, %v781
        %v784 = vsub.f32 %v733, %v781
        %v785 = vsub.f32 %v734, %v781
        %v786 = vsub.f32 %v735, %v781
        %v787 = vsub.f32 %v736, %v781
        %v788 = vsub.f32 %v737, %v781
        %v789 = vsub.f32 %v738, %v781
        %v790 = vsub.f32 %v739, %v781
        %v791 = vadd.f32 %v777, 1e-05
        %v792 = vrsqrt.pop %v791
        %v793 = vlaneseq
        %v794 = vshrl.u32 %v793, 7
        %v795 = vsub.s32 0, %v794
        %v796 = vrot.slane %v792, %v795
        %v797 = vmul.f32 %v782, %v796
        %v798 = vmul.f32 %v783, %v796
        %v799 = vmul.f32 %v784, %v796
        %v800 = vmul.f32 %v785, %v796
        %v801 = vmul.f32 %v786, %v796
        %v802 = vmul.f32 %v787, %v796
        %v803 = vmul.f32 %v788, %v796
        %v804 = vmul.f32 %v789, %v796
        %v805 = vmul.f32 %v790, %v796
        %v806 = vmax.f32 %v797, 0.0
        %v807 = vmax.f32 %v798, 0.0
        %v808 = vmax.f32 %v799, 0.0
        %v809 = vmax.f32 %v800, 0.0
        %v810 = vmax.f32 %v801, 0.0
        %v811 = vmax.f32 %v802, 0.0
        %v812 = vmax.f32 %v803, 0.0
        %v813 = vmax.f32 %v804, 0.0
        %v814 = vmax.f32 %v805, 0.0
        %v816 = vsel %vm451, %v814, 0
        %818 = vmatprep.subr.mxu0 0.0
        %819 = vmatpush1.msra.mxu0 %v806
        %820 = vmatprep.subr.mxu0 0.0
        %821 = vmatpush1.msra.mxu0 %v807
        %822 = vmatprep.subr.mxu0 0.0
        %823 = vmatpush1.msra.mxu0 %v808
        %824 = vmatprep.subr.mxu0 0.0
        %825 = vmatpush1.msra.mxu0 %v809
        %826 = vmatprep.subr.mxu0 0.0
        %827 = vmatpush1.msra.mxu0 %v810
        %828 = vmatprep.subr.mxu0 0.0
        %829 = vmatpush1.msra.mxu0 %v811
        %830 = vmatprep.subr.mxu0 0.0
        %831 = vmatpush1.msra.mxu0 %v812
        %832 = vmatprep.subr.mxu0 0.0
        %833 = vmatpush1.msra.mxu0 %v813
        %834 = vmatprep.subr.mxu0 0.0
        %835 = vmatpush1.msra.mxu0 %v816
        %836 = vmatprep.subr.mxu0 0.0
        %837 = vmatpush1.msra.mxu0 0.0
        %838 = vmatprep.subr.mxu0 0.0
        %839 = vmatpush1.msra.mxu0 0.0
        %840 = vmatprep.subr.mxu0 0.0
        %841 = vmatpush1.msra.mxu0 0.0
        %842 = vmatprep.subr.mxu0 0.0
        %843 = vmatpush1.msra.mxu0 0.0
        %844 = vmatprep.subr.mxu0 0.0
        %845 = vmatpush1.msra.mxu0 0.0
        %846 = vmatprep.subr.mxu0 0.0
        %847 = vmatpush1.msra.mxu0 0.0
        %848 = vmatprep.subr.mxu0 0.0
        %849 = vmatpush1.msra.mxu0 0.0
        %850 = vmatprep.subr.mxu0 0.0
        %851 = vmatpush1.msra.mxu0 0.0
        %852 = vmatprep.subr.mxu0 0.0
        %853 = vmatpush1.msra.mxu0 0.0
        %854 = vmatprep.subr.mxu0 0.0
        %855 = vmatpush1.msra.mxu0 0.0
        %856 = vmatprep.subr.mxu0 0.0
        %857 = vmatpush1.msra.mxu0 0.0
        %858 = vmatprep.subr.mxu0 0.0
        %859 = vmatpush1.msra.mxu0 0.0
        %860 = vmatprep.subr.mxu0 0.0
        %861 = vmatpush1.msra.mxu0 0.0
        %862 = vmatprep.subr.mxu0 0.0
        %863 = vmatpush1.msra.mxu0 0.0
        %864 = vmatprep.subr.mxu0 0.0
        %865 = vmatpush1.msra.mxu0 0.0
        %866 = vmatprep.subr.mxu0 0.0
        %867 = vmatpush1.msra.mxu0 0.0
        %868 = vmatprep.subr.mxu0 0.0
        %869 = vmatpush1.msra.mxu0 0.0
        %870 = vmatprep.subr.mxu0 0.0
        %871 = vmatpush1.msra.mxu0 0.0
        %872 = vmatprep.subr.mxu0 0.0
        %873 = vmatpush1.msra.mxu0 0.0
        %874 = vmatprep.subr.mxu0 0.0
        %875 = vmatpush1.msra.mxu0 0.0
        %876 = vmatprep.subr.mxu0 0.0
        %877 = vmatpush1.msra.mxu0 0.0
        %878 = vmatprep.subr.mxu0 0.0
        %879 = vmatpush1.msra.mxu0 0.0
        %880 = vmatprep.subr.mxu0 0.0
        %881 = vmatpush1.msra.mxu0 0.0
        %882 = vmatprep.mubr.f32.mxu0 0.0
        %883 = vmatmul.mubr.f32.gmra.mrb[0].mxu0 %v425
        %v884 = vpop.f32.mrb[0].mxu0
        %v885 = vadd.f32 0.0, %v884
        %v886 = vpop.f32.mrb[0].mxu0
        %887 = vmatprep.mubr.f32.mxu0 0.0
        %888 = vmatmul.mubr.f32.gmra.mrb[0].mxu0 %v428
        %v889 = vpop.f32.mrb[0].mxu0
        %v890 = vadd.f32 0.0, %v889
        %v891 = vpop.f32.mrb[0].mxu0
        %892 = vmatprep.mubr.f32.mxu0 0.0
        %893 = vmatmul.mubr.f32.gmra.mrb[0].mxu0 %v431
        %v894 = vpop.f32.mrb[0].mxu0
        %v895 = vadd.f32 0.0, %v894
        %v896 = vpop.f32.mrb[0].mxu0
        %897 = vmatprep.mubr.f32.mxu0 0.0
        %898 = vmatmul.mubr.f32.gmra.mrb[0].mxu0 %v434
        %v899 = vpop.f32.mrb[0].mxu0
        %v900 = vadd.f32 0.0, %v899
        %v901 = vpop.f32.mrb[0].mxu0
        %902 = vmatprep.mubr.f32.mxu0 0.0
        %903 = vmatmul.mubr.f32.gmra.mrb[0].mxu0 %v437
        %v904 = vpop.f32.mrb[0].mxu0
        %v905 = vadd.f32 0.0, %v904
        %v906 = vpop.f32.mrb[0].mxu0
        %907 = vmatprep.mubr.f32.mxu0 0.0
        %908 = vmatmul.mubr.f32.gmra.mrb[0].mxu0 %v440
        %v909 = vpop.f32.mrb[0].mxu0
        %v910 = vadd.f32 0.0, %v909
        %v911 = vpop.f32.mrb[0].mxu0
        %912 = vmatprep.mubr.f32.mxu0 0.0
        %913 = vmatmul.mubr.f32.gmra.mrb[0].mxu0 %v443
        %v914 = vpop.f32.mrb[0].mxu0
        %v915 = vadd.f32 0.0, %v914
        %v916 = vpop.f32.mrb[0].mxu0
        %917 = vmatprep.mubr.f32.mxu0 0.0
        %918 = vmatmul.mubr.f32.gmra.mrb[0].mxu0 %v446
        %v919 = vpop.f32.mrb[0].mxu0
        %v920 = vadd.f32 0.0, %v919
        %v921 = vpop.f32.mrb[0].mxu0
        %922 = vmatprep.mubr.f32.mxu0 0.0
        %923 = vmatmul.mubr.f32.gmra.mrb[0].mxu0 %v449
        %v924 = vpop.f32.mrb[0].mxu0
        %v925 = vadd.f32 0.0, %v924
        %v926 = vpop.f32.mrb[0].mxu0
        %927 = vdwg.mxu0
        %v928 = vld [vmem:[%s3] sm:$0xff]
        %v929 = vld [vmem:[%s3 + $0x8] sm:$0xff]
        %v931 = vsel %vm749, %v885, 0
        %v934 = vsel %vm749, %v890, 0
        %v937 = vsel %vm749, %v895, 0
        %v940 = vsel %vm749, %v900, 0
        %v943 = vsel %vm749, %v905, 0
        %v946 = vsel %vm749, %v910, 0
        %v949 = vsel %vm749, %v915, 0
        %v952 = vsel %vm749, %v920, 0
        %v955 = vsel %vm749, %v925, 0
        %957 = vmatprep.subr.mxu0 0.0
        %958 = vmatpush1.msra.mxu0 %v928
        %959 = vmatprep.subr.mxu0 0.0
        %960 = vmatpush1.msra.mxu0 %v929
        %961 = vmatprep.subr.mxu0 0.0
        %962 = vmatpush1.msra.mxu0 0.0
        %963 = vmatprep.subr.mxu0 0.0
        %964 = vmatpush1.msra.mxu0 0.0
        %965 = vmatprep.subr.mxu0 0.0
        %966 = vmatpush1.msra.mxu0 0.0
        %967 = vmatprep.subr.mxu0 0.0
        %968 = vmatpush1.msra.mxu0 0.0
        %969 = vmatprep.subr.mxu0 0.0
        %970 = vmatpush1.msra.mxu0 0.0
        %971 = vmatprep.subr.mxu0 0.0
        %972 = vmatpush1.msra.mxu0 0.0
        %973 = vmatprep.subr.mxu0 0.0
        %974 = vmatpush1.msra.mxu0 0.0
        %975 = vmatprep.subr.mxu0 0.0
        %976 = vmatpush1.msra.mxu0 0.0
        %977 = vmatprep.subr.mxu0 0.0
        %978 = vmatpush1.msra.mxu0 0.0
        %979 = vmatprep.subr.mxu0 0.0
        %980 = vmatpush1.msra.mxu0 0.0
        %981 = vmatprep.subr.mxu0 0.0
        %982 = vmatpush1.msra.mxu0 0.0
        %983 = vmatprep.subr.mxu0 0.0
        %984 = vmatpush1.msra.mxu0 0.0
        %985 = vmatprep.subr.mxu0 0.0
        %986 = vmatpush1.msra.mxu0 0.0
        %987 = vmatprep.subr.mxu0 0.0
        %988 = vmatpush1.msra.mxu0 0.0
        %989 = vmatprep.subr.mxu0 0.0
        %990 = vmatpush1.msra.mxu0 0.0
        %991 = vmatprep.subr.mxu0 0.0
        %992 = vmatpush1.msra.mxu0 0.0
        %993 = vmatprep.subr.mxu0 0.0
        %994 = vmatpush1.msra.mxu0 0.0
        %995 = vmatprep.subr.mxu0 0.0
        %996 = vmatpush1.msra.mxu0 0.0
        %997 = vmatprep.subr.mxu0 0.0
        %998 = vmatpush1.msra.mxu0 0.0
        %999 = vmatprep.subr.mxu0 0.0
        %1000 = vmatpush1.msra.mxu0 0.0
        %1001 = vmatprep.subr.mxu0 0.0
        %1002 = vmatpush1.msra.mxu0 0.0
        %1003 = vmatprep.subr.mxu0 0.0
        %1004 = vmatpush1.msra.mxu0 0.0
        %1005 = vmatprep.subr.mxu0 0.0
        %1006 = vmatpush1.msra.mxu0 0.0
        %1007 = vmatprep.subr.mxu0 0.0
        %1008 = vmatpush1.msra.mxu0 0.0
        %1009 = vmatprep.subr.mxu0 0.0
        %1010 = vmatpush1.msra.mxu0 0.0
        %1011 = vmatprep.subr.mxu0 0.0
        %1012 = vmatpush1.msra.mxu0 0.0
        %1013 = vmatprep.subr.mxu0 0.0
        %1014 = vmatpush1.msra.mxu0 0.0
        %1015 = vmatprep.subr.mxu0 0.0
        %1016 = vmatpush1.msra.mxu0 0.0
        %1017 = vmatprep.subr.mxu0 0.0
        %1018 = vmatpush1.msra.mxu0 0.0
        %1019 = vmatprep.subr.mxu0 0.0
        %1020 = vmatpush1.msra.mxu0 0.0
        %1021 = vmatprep.mubr.f32.mxu0 0.0
        %1022 = vmatmul.mubr.f32.gmra.mrb[0].mxu0 %v931
        %v1023 = vpop.f32.mrb[0].mxu0
        %v1024 = vadd.f32 0.0, %v1023
        %v1025 = vpop.f32.mrb[0].mxu0
        %1026 = vmatprep.mubr.f32.mxu0 0.0
        %1027 = vmatmul.mubr.f32.gmra.mrb[0].mxu0 %v934
        %v1028 = vpop.f32.mrb[0].mxu0
        %v1029 = vadd.f32 0.0, %v1028
        %v1030 = vpop.f32.mrb[0].mxu0
        %1031 = vmatprep.mubr.f32.mxu0 0.0
        %1032 = vmatmul.mubr.f32.gmra.mrb[0].mxu0 %v937
        %v1033 = vpop.f32.mrb[0].mxu0
        %v1034 = vadd.f32 0.0, %v1033
        %v1035 = vpop.f32.mrb[0].mxu0
        %1036 = vmatprep.mubr.f32.mxu0 0.0
        %1037 = vmatmul.mubr.f32.gmra.mrb[0].mxu0 %v940
        %v1038 = vpop.f32.mrb[0].mxu0
        %v1039 = vadd.f32 0.0, %v1038
        %v1040 = vpop.f32.mrb[0].mxu0
        %1041 = vmatprep.mubr.f32.mxu0 0.0
        %1042 = vmatmul.mubr.f32.gmra.mrb[0].mxu0 %v943
        %v1043 = vpop.f32.mrb[0].mxu0
        %v1044 = vadd.f32 0.0, %v1043
        %v1045 = vpop.f32.mrb[0].mxu0
        %1046 = vmatprep.mubr.f32.mxu0 0.0
        %1047 = vmatmul.mubr.f32.gmra.mrb[0].mxu0 %v946
        %v1048 = vpop.f32.mrb[0].mxu0
        %v1049 = vadd.f32 0.0, %v1048
        %v1050 = vpop.f32.mrb[0].mxu0
        %1051 = vmatprep.mubr.f32.mxu0 0.0
        %1052 = vmatmul.mubr.f32.gmra.mrb[0].mxu0 %v949
        %v1053 = vpop.f32.mrb[0].mxu0
        %v1054 = vadd.f32 0.0, %v1053
        %v1055 = vpop.f32.mrb[0].mxu0
        %1056 = vmatprep.mubr.f32.mxu0 0.0
        %1057 = vmatmul.mubr.f32.gmra.mrb[0].mxu0 %v952
        %v1058 = vpop.f32.mrb[0].mxu0
        %v1059 = vadd.f32 0.0, %v1058
        %v1060 = vpop.f32.mrb[0].mxu0
        %1061 = vmatprep.mubr.f32.mxu0 0.0
        %1062 = vmatmul.mubr.f32.gmra.mrb[0].mxu0 %v955
        %v1063 = vpop.f32.mrb[0].mxu0
        %v1064 = vadd.f32 0.0, %v1063
        %v1065 = vpop.f32.mrb[0].mxu0
        %1066 = vdwg.mxu0
        %v1067 = vmul.f32 %v1024, %v1024
        %v1068 = vmul.f32 %v1029, %v1029
        %v1069 = vmul.f32 %v1034, %v1034
        %v1070 = vmul.f32 %v1039, %v1039
        %v1071 = vmul.f32 %v1044, %v1044
        %v1072 = vmul.f32 %v1049, %v1049
        %v1073 = vmul.f32 %v1054, %v1054
        %v1074 = vmul.f32 %v1059, %v1059
        %v1075 = vmul.f32 %v1064, %v1064
        %vm1076 = vcmask 261120
        %v1077 = vsel %vm1076, %v1067, 0.0
        %v1078 = vsel %vm1076, %v1068, 0.0
        %v1079 = vadd.f32 %v1077, %v1078
        %v1080 = vsel %vm1076, %v1069, 0.0
        %v1081 = vadd.f32 %v1079, %v1080
        %v1082 = vsel %vm1076, %v1070, 0.0
        %v1083 = vadd.f32 %v1081, %v1082
        %v1084 = vsel %vm1076, %v1071, 0.0
        %v1085 = vadd.f32 %v1083, %v1084
        %v1086 = vsel %vm1076, %v1072, 0.0
        %v1087 = vadd.f32 %v1085, %v1086
        %v1088 = vsel %vm1076, %v1073, 0.0
        %v1089 = vadd.f32 %v1087, %v1088
        %v1090 = vsel %vm1076, %v1074, 0.0
        %v1091 = vadd.f32 %v1089, %v1090
        %vm1092 = vcmask 253952
        %v1093 = vsel %vm1092, %v1075, 0.0
        %v1094 = vadd.f32 %v1091, %v1093
        %v1095 = vrot.slane %v1094, 4
        %v1096 = vadd.f32 %v1094, %v1095
        %v1097 = vrot.slane %v1096, 2
        %v1098 = vadd.f32 %v1096, %v1097
        %v1099 = vrot.slane %v1098, 1
        %v1100 = vadd.f32 %v1098, %v1099
        %v1101 = vsub.f32 %v1100, %v1075
        %v1102 = vmul.f32 %v1101, 0.015625
        %v1103 = vsub.f32 %v1102, %v1075
        %v1104 = vmax.f32 %v1103, 0.0
        %v1105 = vlaneseq
        %v1106 = vshrl.u32 %v1105, 7
        %v1107 = vsub.s32 0, %v1106
        %v1108 = vrot.slane %v1064, %v1107
        %v1109 = vsub.f32 %v1024, %v1108
        %v1110 = vsub.f32 %v1029, %v1108
        %v1111 = vsub.f32 %v1034, %v1108
        %v1112 = vsub.f32 %v1039, %v1108
        %v1113 = vsub.f32 %v1044, %v1108
        %v1114 = vsub.f32 %v1049, %v1108
        %v1115 = vsub.f32 %v1054, %v1108
        %v1116 = vsub.f32 %v1059, %v1108
        %v1117 = vsub.f32 %v1064, %v1108
        %v1118 = vadd.f32 %v1104, 1e-05
        %v1119 = vrsqrt.pop %v1118
        %v1120 = vlaneseq
        %v1121 = vshrl.u32 %v1120, 7
        %v1122 = vsub.s32 0, %v1121
        %v1123 = vrot.slane %v1119, %v1122
        %v1124 = vmul.f32 %v1109, %v1123
        %v1125 = vmul.f32 %v1110, %v1123
        %v1126 = vmul.f32 %v1111, %v1123
        %v1127 = vmul.f32 %v1112, %v1123
        %v1128 = vmul.f32 %v1113, %v1123
        %v1129 = vmul.f32 %v1114, %v1123
        %v1130 = vmul.f32 %v1115, %v1123
        %v1131 = vmul.f32 %v1116, %v1123
        %v1132 = vmul.f32 %v1117, %v1123
        %v1133 = vmax.f32 %v1124, 0.0
        %v1134 = vmax.f32 %v1125, 0.0
        %v1135 = vmax.f32 %v1126, 0.0
        %v1136 = vmax.f32 %v1127, 0.0
        %v1137 = vmax.f32 %v1128, 0.0
        %v1138 = vmax.f32 %v1129, 0.0
        %v1139 = vmax.f32 %v1130, 0.0
        %v1140 = vmax.f32 %v1131, 0.0
        %v1141 = vmax.f32 %v1132, 0.0
        %v1143 = vsel %vm451, %v1141, 0
        %1145 = vmatprep.subr.mxu0 0.0
        %1146 = vmatpush1.msra.mxu0 %v1133
        %1147 = vmatprep.subr.mxu0 0.0
        %1148 = vmatpush1.msra.mxu0 %v1134
        %1149 = vmatprep.subr.mxu0 0.0
        %1150 = vmatpush1.msra.mxu0 %v1135
        %1151 = vmatprep.subr.mxu0 0.0
        %1152 = vmatpush1.msra.mxu0 %v1136
        %1153 = vmatprep.subr.mxu0 0.0
        %1154 = vmatpush1.msra.mxu0 %v1137
        %1155 = vmatprep.subr.mxu0 0.0
        %1156 = vmatpush1.msra.mxu0 %v1138
        %1157 = vmatprep.subr.mxu0 0.0
        %1158 = vmatpush1.msra.mxu0 %v1139
        %1159 = vmatprep.subr.mxu0 0.0
        %1160 = vmatpush1.msra.mxu0 %v1140
        %1161 = vmatprep.subr.mxu0 0.0
        %1162 = vmatpush1.msra.mxu0 %v1143
        %1163 = vmatprep.subr.mxu0 0.0
        %1164 = vmatpush1.msra.mxu0 0.0
        %1165 = vmatprep.subr.mxu0 0.0
        %1166 = vmatpush1.msra.mxu0 0.0
        %1167 = vmatprep.subr.mxu0 0.0
        %1168 = vmatpush1.msra.mxu0 0.0
        %1169 = vmatprep.subr.mxu0 0.0
        %1170 = vmatpush1.msra.mxu0 0.0
        %1171 = vmatprep.subr.mxu0 0.0
        %1172 = vmatpush1.msra.mxu0 0.0
        %1173 = vmatprep.subr.mxu0 0.0
        %1174 = vmatpush1.msra.mxu0 0.0
        %1175 = vmatprep.subr.mxu0 0.0
        %1176 = vmatpush1.msra.mxu0 0.0
        %1177 = vmatprep.subr.mxu0 0.0
        %1178 = vmatpush1.msra.mxu0 0.0
        %1179 = vmatprep.subr.mxu0 0.0
        %1180 = vmatpush1.msra.mxu0 0.0
        %1181 = vmatprep.subr.mxu0 0.0
        %1182 = vmatpush1.msra.mxu0 0.0
        %1183 = vmatprep.subr.mxu0 0.0
        %1184 = vmatpush1.msra.mxu0 0.0
        %1185 = vmatprep.subr.mxu0 0.0
        %1186 = vmatpush1.msra.mxu0 0.0
        %1187 = vmatprep.subr.mxu0 0.0
        %1188 = vmatpush1.msra.mxu0 0.0
        %1189 = vmatprep.subr.mxu0 0.0
        %1190 = vmatpush1.msra.mxu0 0.0
        %1191 = vmatprep.subr.mxu0 0.0
        %1192 = vmatpush1.msra.mxu0 0.0
        %1193 = vmatprep.subr.mxu0 0.0
        %1194 = vmatpush1.msra.mxu0 0.0
        %1195 = vmatprep.subr.mxu0 0.0
        %1196 = vmatpush1.msra.mxu0 0.0
        %1197 = vmatprep.subr.mxu0 0.0
        %1198 = vmatpush1.msra.mxu0 0.0
        %1199 = vmatprep.subr.mxu0 0.0
        %1200 = vmatpush1.msra.mxu0 0.0
        %1201 = vmatprep.subr.mxu0 0.0
        %1202 = vmatpush1.msra.mxu0 0.0
        %1203 = vmatprep.subr.mxu0 0.0
        %1204 = vmatpush1.msra.mxu0 0.0
        %1205 = vmatprep.subr.mxu0 0.0
        %1206 = vmatpush1.msra.mxu0 0.0
        %1207 = vmatprep.subr.mxu0 0.0
        %1208 = vmatpush1.msra.mxu0 0.0
        %1209 = vmatprep.mubr.f32.mxu0 0.0
        %1210 = vmatmul.mubr.f32.gmra.mrb[0].mxu0 %v425
        %v1211 = vpop.f32.mrb[0].mxu0
        %v1212 = vadd.f32 0.0, %v1211
        %v1213 = vpop.f32.mrb[0].mxu0
        %1214 = vmatprep.mubr.f32.mxu0 0.0
        %1215 = vmatmul.mubr.f32.gmra.mrb[0].mxu0 %v428
        %v1216 = vpop.f32.mrb[0].mxu0
        %v1217 = vadd.f32 0.0, %v1216
        %v1218 = vpop.f32.mrb[0].mxu0
        %1219 = vmatprep.mubr.f32.mxu0 0.0
        %1220 = vmatmul.mubr.f32.gmra.mrb[0].mxu0 %v431
        %v1221 = vpop.f32.mrb[0].mxu0
        %v1222 = vadd.f32 0.0, %v1221
        %v1223 = vpop.f32.mrb[0].mxu0
        %1224 = vmatprep.mubr.f32.mxu0 0.0
        %1225 = vmatmul.mubr.f32.gmra.mrb[0].mxu0 %v434
        %v1226 = vpop.f32.mrb[0].mxu0
        %v1227 = vadd.f32 0.0, %v1226
        %v1228 = vpop.f32.mrb[0].mxu0
        %1229 = vmatprep.mubr.f32.mxu0 0.0
        %1230 = vmatmul.mubr.f32.gmra.mrb[0].mxu0 %v437
        %v1231 = vpop.f32.mrb[0].mxu0
        %v1232 = vadd.f32 0.0, %v1231
        %v1233 = vpop.f32.mrb[0].mxu0
        %1234 = vmatprep.mubr.f32.mxu0 0.0
        %1235 = vmatmul.mubr.f32.gmra.mrb[0].mxu0 %v440
        %v1236 = vpop.f32.mrb[0].mxu0
        %v1237 = vadd.f32 0.0, %v1236
        %v1238 = vpop.f32.mrb[0].mxu0
        %1239 = vmatprep.mubr.f32.mxu0 0.0
        %1240 = vmatmul.mubr.f32.gmra.mrb[0].mxu0 %v443
        %v1241 = vpop.f32.mrb[0].mxu0
        %v1242 = vadd.f32 0.0, %v1241
        %v1243 = vpop.f32.mrb[0].mxu0
        %1244 = vmatprep.mubr.f32.mxu0 0.0
        %1245 = vmatmul.mubr.f32.gmra.mrb[0].mxu0 %v446
        %v1246 = vpop.f32.mrb[0].mxu0
        %v1247 = vadd.f32 0.0, %v1246
        %v1248 = vpop.f32.mrb[0].mxu0
        %1249 = vmatprep.mubr.f32.mxu0 0.0
        %1250 = vmatmul.mubr.f32.gmra.mrb[0].mxu0 %v449
        %v1251 = vpop.f32.mrb[0].mxu0
        %v1252 = vadd.f32 0.0, %v1251
        %v1253 = vpop.f32.mrb[0].mxu0
        %1254 = vdwg.mxu0
        %v1255 = vld [vmem:[%s4] sm:$0xff]
        %v1256 = vld [vmem:[%s4 + $0x8] sm:$0xff]
        %v1257 = vld [vmem:[%s4 + $0x10] sm:$0xff]
        %v1258 = vld [vmem:[%s4 + $0x18] sm:$0xff]
        %v1260 = vsel %vm1076, %v1212, 0
        %v1263 = vsel %vm1076, %v1217, 0
        %v1266 = vsel %vm1076, %v1222, 0
        %v1269 = vsel %vm1076, %v1227, 0
        %v1272 = vsel %vm1076, %v1232, 0
        %v1275 = vsel %vm1076, %v1237, 0
        %v1278 = vsel %vm1076, %v1242, 0
        %v1281 = vsel %vm1076, %v1247, 0
        %v1284 = vsel %vm1076, %v1252, 0
        %1286 = vmatprep.subr.mxu0 0.0
        %1287 = vmatpush1.msra.mxu0 %v1255
        %1288 = vmatprep.subr.mxu0 0.0
        %1289 = vmatpush1.msra.mxu0 %v1256
        %1290 = vmatprep.subr.mxu0 0.0
        %1291 = vmatpush1.msra.mxu0 %v1257
        %1292 = vmatprep.subr.mxu0 0.0
        %1293 = vmatpush1.msra.mxu0 %v1258
        %1294 = vmatprep.subr.mxu0 0.0
        %1295 = vmatpush1.msra.mxu0 0.0
        %1296 = vmatprep.subr.mxu0 0.0
        %1297 = vmatpush1.msra.mxu0 0.0
        %1298 = vmatprep.subr.mxu0 0.0
        %1299 = vmatpush1.msra.mxu0 0.0
        %1300 = vmatprep.subr.mxu0 0.0
        %1301 = vmatpush1.msra.mxu0 0.0
        %1302 = vmatprep.subr.mxu0 0.0
        %1303 = vmatpush1.msra.mxu0 0.0
        %1304 = vmatprep.subr.mxu0 0.0
        %1305 = vmatpush1.msra.mxu0 0.0
        %1306 = vmatprep.subr.mxu0 0.0
        %1307 = vmatpush1.msra.mxu0 0.0
        %1308 = vmatprep.subr.mxu0 0.0
        %1309 = vmatpush1.msra.mxu0 0.0
        %1310 = vmatprep.subr.mxu0 0.0
        %1311 = vmatpush1.msra.mxu0 0.0
        %1312 = vmatprep.subr.mxu0 0.0
        %1313 = vmatpush1.msra.mxu0 0.0
        %1314 = vmatprep.subr.mxu0 0.0
        %1315 = vmatpush1.msra.mxu0 0.0
        %1316 = vmatprep.subr.mxu0 0.0
        %1317 = vmatpush1.msra.mxu0 0.0
        %1318 = vmatprep.subr.mxu0 0.0
        %1319 = vmatpush1.msra.mxu0 0.0
        %1320 = vmatprep.subr.mxu0 0.0
        %1321 = vmatpush1.msra.mxu0 0.0
        %1322 = vmatprep.subr.mxu0 0.0
        %1323 = vmatpush1.msra.mxu0 0.0
        %1324 = vmatprep.subr.mxu0 0.0
        %1325 = vmatpush1.msra.mxu0 0.0
        %1326 = vmatprep.subr.mxu0 0.0
        %1327 = vmatpush1.msra.mxu0 0.0
        %1328 = vmatprep.subr.mxu0 0.0
        %1329 = vmatpush1.msra.mxu0 0.0
        %1330 = vmatprep.subr.mxu0 0.0
        %1331 = vmatpush1.msra.mxu0 0.0
        %1332 = vmatprep.subr.mxu0 0.0
        %1333 = vmatpush1.msra.mxu0 0.0
        %1334 = vmatprep.subr.mxu0 0.0
        %1335 = vmatpush1.msra.mxu0 0.0
        %1336 = vmatprep.subr.mxu0 0.0
        %1337 = vmatpush1.msra.mxu0 0.0
        %1338 = vmatprep.subr.mxu0 0.0
        %1339 = vmatpush1.msra.mxu0 0.0
        %1340 = vmatprep.subr.mxu0 0.0
        %1341 = vmatpush1.msra.mxu0 0.0
        %1342 = vmatprep.subr.mxu0 0.0
        %1343 = vmatpush1.msra.mxu0 0.0
        %1344 = vmatprep.subr.mxu0 0.0
        %1345 = vmatpush1.msra.mxu0 0.0
        %1346 = vmatprep.subr.mxu0 0.0
        %1347 = vmatpush1.msra.mxu0 0.0
        %1348 = vmatprep.subr.mxu0 0.0
        %1349 = vmatpush1.msra.mxu0 0.0
        %1350 = vmatprep.mubr.f32.mxu0 0.0
        %1351 = vmatmul.mubr.f32.gmra.mrb[0].mxu0 %v1260
        %v1352 = vpop.f32.mrb[0].mxu0
        %v1353 = vadd.f32 0.0, %v1352
        %v1354 = vpop.f32.mrb[0].mxu0
        %1355 = vmatprep.mubr.f32.mxu0 0.0
        %1356 = vmatmul.mubr.f32.gmra.mrb[0].mxu0 %v1263
        %v1357 = vpop.f32.mrb[0].mxu0
        %v1358 = vadd.f32 0.0, %v1357
        %v1359 = vpop.f32.mrb[0].mxu0
        %1360 = vmatprep.mubr.f32.mxu0 0.0
        %1361 = vmatmul.mubr.f32.gmra.mrb[0].mxu0 %v1266
        %v1362 = vpop.f32.mrb[0].mxu0
        %v1363 = vadd.f32 0.0, %v1362
        %v1364 = vpop.f32.mrb[0].mxu0
        %1365 = vmatprep.mubr.f32.mxu0 0.0
        %1366 = vmatmul.mubr.f32.gmra.mrb[0].mxu0 %v1269
        %v1367 = vpop.f32.mrb[0].mxu0
        %v1368 = vadd.f32 0.0, %v1367
        %v1369 = vpop.f32.mrb[0].mxu0
        %1370 = vmatprep.mubr.f32.mxu0 0.0
        %1371 = vmatmul.mubr.f32.gmra.mrb[0].mxu0 %v1272
        %v1372 = vpop.f32.mrb[0].mxu0
        %v1373 = vadd.f32 0.0, %v1372
        %v1374 = vpop.f32.mrb[0].mxu0
        %1375 = vmatprep.mubr.f32.mxu0 0.0
        %1376 = vmatmul.mubr.f32.gmra.mrb[0].mxu0 %v1275
        %v1377 = vpop.f32.mrb[0].mxu0
        %v1378 = vadd.f32 0.0, %v1377
        %v1379 = vpop.f32.mrb[0].mxu0
        %1380 = vmatprep.mubr.f32.mxu0 0.0
        %1381 = vmatmul.mubr.f32.gmra.mrb[0].mxu0 %v1278
        %v1382 = vpop.f32.mrb[0].mxu0
        %v1383 = vadd.f32 0.0, %v1382
        %v1384 = vpop.f32.mrb[0].mxu0
        %1385 = vmatprep.mubr.f32.mxu0 0.0
        %1386 = vmatmul.mubr.f32.gmra.mrb[0].mxu0 %v1281
        %v1387 = vpop.f32.mrb[0].mxu0
        %v1388 = vadd.f32 0.0, %v1387
        %v1389 = vpop.f32.mrb[0].mxu0
        %1390 = vmatprep.mubr.f32.mxu0 0.0
        %1391 = vmatmul.mubr.f32.gmra.mrb[0].mxu0 %v1284
        %v1392 = vpop.f32.mrb[0].mxu0
        %v1393 = vadd.f32 0.0, %v1392
        %v1394 = vpop.f32.mrb[0].mxu0
        %1395 = vdwg.mxu0
        %v1396 = vmul.f32 %v1353, %v1353
        %v1397 = vmul.f32 %v1358, %v1358
        %v1398 = vmul.f32 %v1363, %v1363
        %v1399 = vmul.f32 %v1368, %v1368
        %v1400 = vmul.f32 %v1373, %v1373
        %v1401 = vmul.f32 %v1378, %v1378
        %v1402 = vmul.f32 %v1383, %v1383
        %v1403 = vmul.f32 %v1388, %v1388
        %v1404 = vmul.f32 %v1393, %v1393
        %vm1405 = vcmask 392192
        %v1406 = vsel %vm1405, %v1396, 0.0
        %v1407 = vsel %vm1405, %v1397, 0.0
        %v1408 = vadd.f32 %v1406, %v1407
        %v1409 = vsel %vm1405, %v1398, 0.0
        %v1410 = vadd.f32 %v1408, %v1409
        %v1411 = vsel %vm1405, %v1399, 0.0
        %v1412 = vadd.f32 %v1410, %v1411
        %v1413 = vsel %vm1405, %v1400, 0.0
        %v1414 = vadd.f32 %v1412, %v1413
        %v1415 = vsel %vm1405, %v1401, 0.0
        %v1416 = vadd.f32 %v1414, %v1415
        %v1417 = vsel %vm1405, %v1402, 0.0
        %v1418 = vadd.f32 %v1416, %v1417
        %v1419 = vsel %vm1405, %v1403, 0.0
        %v1420 = vadd.f32 %v1418, %v1419
        %vm1421 = vcmask 385024
        %v1422 = vsel %vm1421, %v1404, 0.0
        %v1423 = vadd.f32 %v1420, %v1422
        %v1424 = vrot.slane %v1423, 4
        %v1425 = vadd.f32 %v1423, %v1424
        %v1426 = vrot.slane %v1425, 2
        %v1427 = vadd.f32 %v1425, %v1426
        %v1428 = vrot.slane %v1427, 1
        %v1429 = vadd.f32 %v1427, %v1428
        %v1430 = vsub.f32 %v1429, %v1404
        %v1431 = vmul.f32 %v1430, 0.015625
        %v1432 = vsub.f32 %v1431, %v1404
        %v1433 = vmax.f32 %v1432, 0.0
        %v1434 = vlaneseq
        %v1435 = vshrl.u32 %v1434, 7
        %v1436 = vsub.s32 0, %v1435
        %v1437 = vrot.slane %v1393, %v1436
        %v1438 = vsub.f32 %v1353, %v1437
        %v1439 = vsub.f32 %v1358, %v1437
        %v1440 = vsub.f32 %v1363, %v1437
        %v1441 = vsub.f32 %v1368, %v1437
        %v1442 = vsub.f32 %v1373, %v1437
        %v1443 = vsub.f32 %v1378, %v1437
        %v1444 = vsub.f32 %v1383, %v1437
        %v1445 = vsub.f32 %v1388, %v1437
        %v1446 = vsub.f32 %v1393, %v1437
        %v1447 = vadd.f32 %v1433, 1e-05
        %v1448 = vrsqrt.pop %v1447
        %v1449 = vlaneseq
        %v1450 = vshrl.u32 %v1449, 7
        %v1451 = vsub.s32 0, %v1450
        %v1452 = vrot.slane %v1448, %v1451
        %v1453 = vmul.f32 %v1438, %v1452
        %v1454 = vmul.f32 %v1439, %v1452
        %v1455 = vmul.f32 %v1440, %v1452
        %v1456 = vmul.f32 %v1441, %v1452
        %v1457 = vmul.f32 %v1442, %v1452
        %v1458 = vmul.f32 %v1443, %v1452
        %v1459 = vmul.f32 %v1444, %v1452
        %v1460 = vmul.f32 %v1445, %v1452
        %v1461 = vmul.f32 %v1446, %v1452
        %v1462 = vmax.f32 %v1453, 0.0
        %v1463 = vmax.f32 %v1454, 0.0
        %v1464 = vmax.f32 %v1455, 0.0
        %v1465 = vmax.f32 %v1456, 0.0
        %v1466 = vmax.f32 %v1457, 0.0
        %v1467 = vmax.f32 %v1458, 0.0
        %v1468 = vmax.f32 %v1459, 0.0
        %v1469 = vmax.f32 %v1460, 0.0
        %v1470 = vmax.f32 %v1461, 0.0
        %v1472 = vsel %vm451, %v1470, 0
        %1474 = vmatprep.subr.mxu0 0.0
        %1475 = vmatpush1.msra.mxu0 %v1462
        %1476 = vmatprep.subr.mxu0 0.0
        %1477 = vmatpush1.msra.mxu0 %v1463
        %1478 = vmatprep.subr.mxu0 0.0
        %1479 = vmatpush1.msra.mxu0 %v1464
        %1480 = vmatprep.subr.mxu0 0.0
        %1481 = vmatpush1.msra.mxu0 %v1465
        %1482 = vmatprep.subr.mxu0 0.0
        %1483 = vmatpush1.msra.mxu0 %v1466
        %1484 = vmatprep.subr.mxu0 0.0
        %1485 = vmatpush1.msra.mxu0 %v1467
        %1486 = vmatprep.subr.mxu0 0.0
        %1487 = vmatpush1.msra.mxu0 %v1468
        %1488 = vmatprep.subr.mxu0 0.0
        %1489 = vmatpush1.msra.mxu0 %v1469
        %1490 = vmatprep.subr.mxu0 0.0
        %1491 = vmatpush1.msra.mxu0 %v1472
        %1492 = vmatprep.subr.mxu0 0.0
        %1493 = vmatpush1.msra.mxu0 0.0
        %1494 = vmatprep.subr.mxu0 0.0
        %1495 = vmatpush1.msra.mxu0 0.0
        %1496 = vmatprep.subr.mxu0 0.0
        %1497 = vmatpush1.msra.mxu0 0.0
        %1498 = vmatprep.subr.mxu0 0.0
        %1499 = vmatpush1.msra.mxu0 0.0
        %1500 = vmatprep.subr.mxu0 0.0
        %1501 = vmatpush1.msra.mxu0 0.0
        %1502 = vmatprep.subr.mxu0 0.0
        %1503 = vmatpush1.msra.mxu0 0.0
        %1504 = vmatprep.subr.mxu0 0.0
        %1505 = vmatpush1.msra.mxu0 0.0
        %1506 = vmatprep.subr.mxu0 0.0
        %1507 = vmatpush1.msra.mxu0 0.0
        %1508 = vmatprep.subr.mxu0 0.0
        %1509 = vmatpush1.msra.mxu0 0.0
        %1510 = vmatprep.subr.mxu0 0.0
        %1511 = vmatpush1.msra.mxu0 0.0
        %1512 = vmatprep.subr.mxu0 0.0
        %1513 = vmatpush1.msra.mxu0 0.0
        %1514 = vmatprep.subr.mxu0 0.0
        %1515 = vmatpush1.msra.mxu0 0.0
        %1516 = vmatprep.subr.mxu0 0.0
        %1517 = vmatpush1.msra.mxu0 0.0
        %1518 = vmatprep.subr.mxu0 0.0
        %1519 = vmatpush1.msra.mxu0 0.0
        %1520 = vmatprep.subr.mxu0 0.0
        %1521 = vmatpush1.msra.mxu0 0.0
        %1522 = vmatprep.subr.mxu0 0.0
        %1523 = vmatpush1.msra.mxu0 0.0
        %1524 = vmatprep.subr.mxu0 0.0
        %1525 = vmatpush1.msra.mxu0 0.0
        %1526 = vmatprep.subr.mxu0 0.0
        %1527 = vmatpush1.msra.mxu0 0.0
        %1528 = vmatprep.subr.mxu0 0.0
        %1529 = vmatpush1.msra.mxu0 0.0
        %1530 = vmatprep.subr.mxu0 0.0
        %1531 = vmatpush1.msra.mxu0 0.0
        %1532 = vmatprep.subr.mxu0 0.0
        %1533 = vmatpush1.msra.mxu0 0.0
        %1534 = vmatprep.subr.mxu0 0.0
        %1535 = vmatpush1.msra.mxu0 0.0
        %1536 = vmatprep.subr.mxu0 0.0
        %1537 = vmatpush1.msra.mxu0 0.0
        %1538 = vmatprep.mubr.f32.mxu0 0.0
        %1539 = vmatmul.mubr.f32.gmra.mrb[0].mxu0 %v425
        %v1540 = vpop.f32.mrb[0].mxu0
        %v1541 = vadd.f32 0.0, %v1540
        %v1542 = vpop.f32.mrb[0].mxu0
        %1543 = vmatprep.mubr.f32.mxu0 0.0
        %1544 = vmatmul.mubr.f32.gmra.mrb[0].mxu0 %v428
        %v1545 = vpop.f32.mrb[0].mxu0
        %v1546 = vadd.f32 0.0, %v1545
        %v1547 = vpop.f32.mrb[0].mxu0
        %1548 = vmatprep.mubr.f32.mxu0 0.0
        %1549 = vmatmul.mubr.f32.gmra.mrb[0].mxu0 %v431
        %v1550 = vpop.f32.mrb[0].mxu0
        %v1551 = vadd.f32 0.0, %v1550
        %v1552 = vpop.f32.mrb[0].mxu0
        %1553 = vmatprep.mubr.f32.mxu0 0.0
        %1554 = vmatmul.mubr.f32.gmra.mrb[0].mxu0 %v434
        %v1555 = vpop.f32.mrb[0].mxu0
        %v1556 = vadd.f32 0.0, %v1555
        %v1557 = vpop.f32.mrb[0].mxu0
        %1558 = vmatprep.mubr.f32.mxu0 0.0
        %1559 = vmatmul.mubr.f32.gmra.mrb[0].mxu0 %v437
        %v1560 = vpop.f32.mrb[0].mxu0
        %v1561 = vadd.f32 0.0, %v1560
        %v1562 = vpop.f32.mrb[0].mxu0
        %1563 = vmatprep.mubr.f32.mxu0 0.0
        %1564 = vmatmul.mubr.f32.gmra.mrb[0].mxu0 %v440
        %v1565 = vpop.f32.mrb[0].mxu0
        %v1566 = vadd.f32 0.0, %v1565
        %v1567 = vpop.f32.mrb[0].mxu0
        %1568 = vmatprep.mubr.f32.mxu0 0.0
        %1569 = vmatmul.mubr.f32.gmra.mrb[0].mxu0 %v443
        %v1570 = vpop.f32.mrb[0].mxu0
        %v1571 = vadd.f32 0.0, %v1570
        %v1572 = vpop.f32.mrb[0].mxu0
        %1573 = vmatprep.mubr.f32.mxu0 0.0
        %1574 = vmatmul.mubr.f32.gmra.mrb[0].mxu0 %v446
        %v1575 = vpop.f32.mrb[0].mxu0
        %v1576 = vadd.f32 0.0, %v1575
        %v1577 = vpop.f32.mrb[0].mxu0
        %1578 = vmatprep.mubr.f32.mxu0 0.0
        %1579 = vmatmul.mubr.f32.gmra.mrb[0].mxu0 %v449
        %v1580 = vpop.f32.mrb[0].mxu0
        %v1581 = vadd.f32 0.0, %v1580
        %v1582 = vpop.f32.mrb[0].mxu0
        %1583 = vdwg.mxu0
        %v1584 = vld [vmem:[%s5] sm:$0xff]
        %v1585 = vld [vmem:[%s5 + $0x8] sm:$0xff]
        %v1586 = vld [vmem:[%s5 + $0x10] sm:$0xff]
        %v1587 = vld [vmem:[%s5 + $0x18] sm:$0xff]
        %v1588 = vld [vmem:[%s5 + $0x20] sm:$0xff]
        %v1589 = vld [vmem:[%s5 + $0x28] sm:$0xff]
        %v1591 = vsel %vm1405, %v1541, 0
        %v1594 = vsel %vm1405, %v1546, 0
        %v1597 = vsel %vm1405, %v1551, 0
        %v1600 = vsel %vm1405, %v1556, 0
        %v1603 = vsel %vm1405, %v1561, 0
        %v1606 = vsel %vm1405, %v1566, 0
        %v1609 = vsel %vm1405, %v1571, 0
        %v1612 = vsel %vm1405, %v1576, 0
        %v1615 = vsel %vm1405, %v1581, 0
        %1617 = vmatprep.subr.mxu0 0.0
        %1618 = vmatpush1.msra.mxu0 %v1584
        %1619 = vmatprep.subr.mxu0 0.0
        %1620 = vmatpush1.msra.mxu0 %v1585
        %1621 = vmatprep.subr.mxu0 0.0
        %1622 = vmatpush1.msra.mxu0 %v1586
        %1623 = vmatprep.subr.mxu0 0.0
        %1624 = vmatpush1.msra.mxu0 %v1587
        %1625 = vmatprep.subr.mxu0 0.0
        %1626 = vmatpush1.msra.mxu0 %v1588
        %1627 = vmatprep.subr.mxu0 0.0
        %1628 = vmatpush1.msra.mxu0 %v1589
        %1629 = vmatprep.subr.mxu0 0.0
        %1630 = vmatpush1.msra.mxu0 0.0
        %1631 = vmatprep.subr.mxu0 0.0
        %1632 = vmatpush1.msra.mxu0 0.0
        %1633 = vmatprep.subr.mxu0 0.0
        %1634 = vmatpush1.msra.mxu0 0.0
        %1635 = vmatprep.subr.mxu0 0.0
        %1636 = vmatpush1.msra.mxu0 0.0
        %1637 = vmatprep.subr.mxu0 0.0
        %1638 = vmatpush1.msra.mxu0 0.0
        %1639 = vmatprep.subr.mxu0 0.0
        %1640 = vmatpush1.msra.mxu0 0.0
        %1641 = vmatprep.subr.mxu0 0.0
        %1642 = vmatpush1.msra.mxu0 0.0
        %1643 = vmatprep.subr.mxu0 0.0
        %1644 = vmatpush1.msra.mxu0 0.0
        %1645 = vmatprep.subr.mxu0 0.0
        %1646 = vmatpush1.msra.mxu0 0.0
        %1647 = vmatprep.subr.mxu0 0.0
        %1648 = vmatpush1.msra.mxu0 0.0
        %1649 = vmatprep.subr.mxu0 0.0
        %1650 = vmatpush1.msra.mxu0 0.0
        %1651 = vmatprep.subr.mxu0 0.0
        %1652 = vmatpush1.msra.mxu0 0.0
        %1653 = vmatprep.subr.mxu0 0.0
        %1654 = vmatpush1.msra.mxu0 0.0
        %1655 = vmatprep.subr.mxu0 0.0
        %1656 = vmatpush1.msra.mxu0 0.0
        %1657 = vmatprep.subr.mxu0 0.0
        %1658 = vmatpush1.msra.mxu0 0.0
        %1659 = vmatprep.subr.mxu0 0.0
        %1660 = vmatpush1.msra.mxu0 0.0
        %1661 = vmatprep.subr.mxu0 0.0
        %1662 = vmatpush1.msra.mxu0 0.0
        %1663 = vmatprep.subr.mxu0 0.0
        %1664 = vmatpush1.msra.mxu0 0.0
        %1665 = vmatprep.subr.mxu0 0.0
        %1666 = vmatpush1.msra.mxu0 0.0
        %1667 = vmatprep.subr.mxu0 0.0
        %1668 = vmatpush1.msra.mxu0 0.0
        %1669 = vmatprep.subr.mxu0 0.0
        %1670 = vmatpush1.msra.mxu0 0.0
        %1671 = vmatprep.subr.mxu0 0.0
        %1672 = vmatpush1.msra.mxu0 0.0
        %1673 = vmatprep.subr.mxu0 0.0
        %1674 = vmatpush1.msra.mxu0 0.0
        %1675 = vmatprep.subr.mxu0 0.0
        %1676 = vmatpush1.msra.mxu0 0.0
        %1677 = vmatprep.subr.mxu0 0.0
        %1678 = vmatpush1.msra.mxu0 0.0
        %1679 = vmatprep.subr.mxu0 0.0
        %1680 = vmatpush1.msra.mxu0 0.0
        %1681 = vmatprep.mubr.f32.mxu0 0.0
        %1682 = vmatmul.mubr.f32.gmra.mrb[0].mxu0 %v1591
        %v1683 = vpop.f32.mrb[0].mxu0
        %v1684 = vadd.f32 0.0, %v1683
        %v1685 = vpop.f32.mrb[0].mxu0
        %1686 = vmatprep.mubr.f32.mxu0 0.0
        %1687 = vmatmul.mubr.f32.gmra.mrb[0].mxu0 %v1594
        %v1688 = vpop.f32.mrb[0].mxu0
        %v1689 = vadd.f32 0.0, %v1688
        %v1690 = vpop.f32.mrb[0].mxu0
        %1691 = vmatprep.mubr.f32.mxu0 0.0
        %1692 = vmatmul.mubr.f32.gmra.mrb[0].mxu0 %v1597
        %v1693 = vpop.f32.mrb[0].mxu0
        %v1694 = vadd.f32 0.0, %v1693
        %v1695 = vpop.f32.mrb[0].mxu0
        %1696 = vmatprep.mubr.f32.mxu0 0.0
        %1697 = vmatmul.mubr.f32.gmra.mrb[0].mxu0 %v1600
        %v1698 = vpop.f32.mrb[0].mxu0
        %v1699 = vadd.f32 0.0, %v1698
        %v1700 = vpop.f32.mrb[0].mxu0
        %1701 = vmatprep.mubr.f32.mxu0 0.0
        %1702 = vmatmul.mubr.f32.gmra.mrb[0].mxu0 %v1603
        %v1703 = vpop.f32.mrb[0].mxu0
        %v1704 = vadd.f32 0.0, %v1703
        %v1705 = vpop.f32.mrb[0].mxu0
        %1706 = vmatprep.mubr.f32.mxu0 0.0
        %1707 = vmatmul.mubr.f32.gmra.mrb[0].mxu0 %v1606
        %v1708 = vpop.f32.mrb[0].mxu0
        %v1709 = vadd.f32 0.0, %v1708
        %v1710 = vpop.f32.mrb[0].mxu0
        %1711 = vmatprep.mubr.f32.mxu0 0.0
        %1712 = vmatmul.mubr.f32.gmra.mrb[0].mxu0 %v1609
        %v1713 = vpop.f32.mrb[0].mxu0
        %v1714 = vadd.f32 0.0, %v1713
        %v1715 = vpop.f32.mrb[0].mxu0
        %1716 = vmatprep.mubr.f32.mxu0 0.0
        %1717 = vmatmul.mubr.f32.gmra.mrb[0].mxu0 %v1612
        %v1718 = vpop.f32.mrb[0].mxu0
        %v1719 = vadd.f32 0.0, %v1718
        %v1720 = vpop.f32.mrb[0].mxu0
        %1721 = vmatprep.mubr.f32.mxu0 0.0
        %1722 = vmatmul.mubr.f32.gmra.mrb[0].mxu0 %v1615
        %v1723 = vpop.f32.mrb[0].mxu0
        %v1724 = vadd.f32 0.0, %v1723
        %v1725 = vpop.f32.mrb[0].mxu0
        %1726 = vdwg.mxu0
        %v1727 = vmul.f32 %v1684, %v1684
        %v1728 = vmul.f32 %v1689, %v1689
        %v1729 = vmul.f32 %v1694, %v1694
        %v1730 = vmul.f32 %v1699, %v1699
        %v1731 = vmul.f32 %v1704, %v1704
        %v1732 = vmul.f32 %v1709, %v1709
        %v1733 = vmul.f32 %v1714, %v1714
        %v1734 = vmul.f32 %v1719, %v1719
        %v1735 = vmul.f32 %v1724, %v1724
        %vm1736 = vcmask 523264
        %v1737 = vsel %vm1736, %v1727, 0.0
        %v1738 = vsel %vm1736, %v1728, 0.0
        %v1739 = vadd.f32 %v1737, %v1738
        %v1740 = vsel %vm1736, %v1729, 0.0
        %v1741 = vadd.f32 %v1739, %v1740
        %v1742 = vsel %vm1736, %v1730, 0.0
        %v1743 = vadd.f32 %v1741, %v1742
        %v1744 = vsel %vm1736, %v1731, 0.0
        %v1745 = vadd.f32 %v1743, %v1744
        %v1746 = vsel %vm1736, %v1732, 0.0
        %v1747 = vadd.f32 %v1745, %v1746
        %v1748 = vsel %vm1736, %v1733, 0.0
        %v1749 = vadd.f32 %v1747, %v1748
        %v1750 = vsel %vm1736, %v1734, 0.0
        %v1751 = vadd.f32 %v1749, %v1750
        %vm1752 = vcmask 516096
        %v1753 = vsel %vm1752, %v1735, 0.0
        %v1754 = vadd.f32 %v1751, %v1753
        %v1755 = vrot.slane %v1754, 4
        %v1756 = vadd.f32 %v1754, %v1755
        %v1757 = vrot.slane %v1756, 2
        %v1758 = vadd.f32 %v1756, %v1757
        %v1759 = vrot.slane %v1758, 1
        %v1760 = vadd.f32 %v1758, %v1759
        %v1761 = vsub.f32 %v1760, %v1735
        %v1762 = vmul.f32 %v1761, 0.015625
        %v1763 = vsub.f32 %v1762, %v1735
        %v1764 = vmax.f32 %v1763, 0.0
        %v1765 = vlaneseq
        %v1766 = vshrl.u32 %v1765, 7
        %v1767 = vsub.s32 0, %v1766
        %v1768 = vrot.slane %v1724, %v1767
        %v1769 = vsub.f32 %v1684, %v1768
        %v1770 = vsub.f32 %v1689, %v1768
        %v1771 = vsub.f32 %v1694, %v1768
        %v1772 = vsub.f32 %v1699, %v1768
        %v1773 = vsub.f32 %v1704, %v1768
        %v1774 = vsub.f32 %v1709, %v1768
        %v1775 = vsub.f32 %v1714, %v1768
        %v1776 = vsub.f32 %v1719, %v1768
        %v1777 = vsub.f32 %v1724, %v1768
        %v1778 = vadd.f32 %v1764, 1e-05
        %v1779 = vrsqrt.pop %v1778
        %v1780 = vlaneseq
        %v1781 = vshrl.u32 %v1780, 7
        %v1782 = vsub.s32 0, %v1781
        %v1783 = vrot.slane %v1779, %v1782
        %v1784 = vmul.f32 %v1769, %v1783
        %v1785 = vmul.f32 %v1770, %v1783
        %v1786 = vmul.f32 %v1771, %v1783
        %v1787 = vmul.f32 %v1772, %v1783
        %v1788 = vmul.f32 %v1773, %v1783
        %v1789 = vmul.f32 %v1774, %v1783
        %v1790 = vmul.f32 %v1775, %v1783
        %v1791 = vmul.f32 %v1776, %v1783
        %v1792 = vmul.f32 %v1777, %v1783
        %v1793 = vmax.f32 %v1784, 0.0
        %v1794 = vmax.f32 %v1785, 0.0
        %v1795 = vmax.f32 %v1786, 0.0
        %v1796 = vmax.f32 %v1787, 0.0
        %v1797 = vmax.f32 %v1788, 0.0
        %v1798 = vmax.f32 %v1789, 0.0
        %v1799 = vmax.f32 %v1790, 0.0
        %v1800 = vmax.f32 %v1791, 0.0
        %v1801 = vmax.f32 %v1792, 0.0
        %v1803 = vsel %vm451, %v1801, 0
        %1805 = vmatprep.subr.mxu0 0.0
        %1806 = vmatpush1.msra.mxu0 %v1793
        %1807 = vmatprep.subr.mxu0 0.0
        %1808 = vmatpush1.msra.mxu0 %v1794
        %1809 = vmatprep.subr.mxu0 0.0
        %1810 = vmatpush1.msra.mxu0 %v1795
        %1811 = vmatprep.subr.mxu0 0.0
        %1812 = vmatpush1.msra.mxu0 %v1796
        %1813 = vmatprep.subr.mxu0 0.0
        %1814 = vmatpush1.msra.mxu0 %v1797
        %1815 = vmatprep.subr.mxu0 0.0
        %1816 = vmatpush1.msra.mxu0 %v1798
        %1817 = vmatprep.subr.mxu0 0.0
        %1818 = vmatpush1.msra.mxu0 %v1799
        %1819 = vmatprep.subr.mxu0 0.0
        %1820 = vmatpush1.msra.mxu0 %v1800
        %1821 = vmatprep.subr.mxu0 0.0
        %1822 = vmatpush1.msra.mxu0 %v1803
        %1823 = vmatprep.subr.mxu0 0.0
        %1824 = vmatpush1.msra.mxu0 0.0
        %1825 = vmatprep.subr.mxu0 0.0
        %1826 = vmatpush1.msra.mxu0 0.0
        %1827 = vmatprep.subr.mxu0 0.0
        %1828 = vmatpush1.msra.mxu0 0.0
        %1829 = vmatprep.subr.mxu0 0.0
        %1830 = vmatpush1.msra.mxu0 0.0
        %1831 = vmatprep.subr.mxu0 0.0
        %1832 = vmatpush1.msra.mxu0 0.0
        %1833 = vmatprep.subr.mxu0 0.0
        %1834 = vmatpush1.msra.mxu0 0.0
        %1835 = vmatprep.subr.mxu0 0.0
        %1836 = vmatpush1.msra.mxu0 0.0
        %1837 = vmatprep.subr.mxu0 0.0
        %1838 = vmatpush1.msra.mxu0 0.0
        %1839 = vmatprep.subr.mxu0 0.0
        %1840 = vmatpush1.msra.mxu0 0.0
        %1841 = vmatprep.subr.mxu0 0.0
        %1842 = vmatpush1.msra.mxu0 0.0
        %1843 = vmatprep.subr.mxu0 0.0
        %1844 = vmatpush1.msra.mxu0 0.0
        %1845 = vmatprep.subr.mxu0 0.0
        %1846 = vmatpush1.msra.mxu0 0.0
        %1847 = vmatprep.subr.mxu0 0.0
        %1848 = vmatpush1.msra.mxu0 0.0
        %1849 = vmatprep.subr.mxu0 0.0
        %1850 = vmatpush1.msra.mxu0 0.0
        %1851 = vmatprep.subr.mxu0 0.0
        %1852 = vmatpush1.msra.mxu0 0.0
        %1853 = vmatprep.subr.mxu0 0.0
        %1854 = vmatpush1.msra.mxu0 0.0
        %1855 = vmatprep.subr.mxu0 0.0
        %1856 = vmatpush1.msra.mxu0 0.0
        %1857 = vmatprep.subr.mxu0 0.0
        %1858 = vmatpush1.msra.mxu0 0.0
        %1859 = vmatprep.subr.mxu0 0.0
        %1860 = vmatpush1.msra.mxu0 0.0
        %1861 = vmatprep.subr.mxu0 0.0
        %1862 = vmatpush1.msra.mxu0 0.0
        %1863 = vmatprep.subr.mxu0 0.0
        %1864 = vmatpush1.msra.mxu0 0.0
        %1865 = vmatprep.subr.mxu0 0.0
        %1866 = vmatpush1.msra.mxu0 0.0
        %1867 = vmatprep.subr.mxu0 0.0
        %1868 = vmatpush1.msra.mxu0 0.0
        %1869 = vmatprep.mubr.f32.mxu0 0.0
        %1870 = vmatmul.mubr.f32.gmra.mrb[0].mxu0 %v425
        %v1871 = vpop.f32.mrb[0].mxu0
        %v1872 = vadd.f32 0.0, %v1871
        %v1873 = vpop.f32.mrb[0].mxu0
        %1874 = vmatprep.mubr.f32.mxu0 0.0
        %1875 = vmatmul.mubr.f32.gmra.mrb[0].mxu0 %v428
        %v1876 = vpop.f32.mrb[0].mxu0
        %v1877 = vadd.f32 0.0, %v1876
        %v1878 = vpop.f32.mrb[0].mxu0
        %1879 = vmatprep.mubr.f32.mxu0 0.0
        %1880 = vmatmul.mubr.f32.gmra.mrb[0].mxu0 %v431
        %v1881 = vpop.f32.mrb[0].mxu0
        %v1882 = vadd.f32 0.0, %v1881
        %v1883 = vpop.f32.mrb[0].mxu0
        %1884 = vmatprep.mubr.f32.mxu0 0.0
        %1885 = vmatmul.mubr.f32.gmra.mrb[0].mxu0 %v434
        %v1886 = vpop.f32.mrb[0].mxu0
        %v1887 = vadd.f32 0.0, %v1886
        %v1888 = vpop.f32.mrb[0].mxu0
        %1889 = vmatprep.mubr.f32.mxu0 0.0
        %1890 = vmatmul.mubr.f32.gmra.mrb[0].mxu0 %v437
        %v1891 = vpop.f32.mrb[0].mxu0
        %v1892 = vadd.f32 0.0, %v1891
        %v1893 = vpop.f32.mrb[0].mxu0
        %1894 = vmatprep.mubr.f32.mxu0 0.0
        %1895 = vmatmul.mubr.f32.gmra.mrb[0].mxu0 %v440
        %v1896 = vpop.f32.mrb[0].mxu0
        %v1897 = vadd.f32 0.0, %v1896
        %v1898 = vpop.f32.mrb[0].mxu0
        %1899 = vmatprep.mubr.f32.mxu0 0.0
        %1900 = vmatmul.mubr.f32.gmra.mrb[0].mxu0 %v443
        %v1901 = vpop.f32.mrb[0].mxu0
        %v1902 = vadd.f32 0.0, %v1901
        %v1903 = vpop.f32.mrb[0].mxu0
        %1904 = vmatprep.mubr.f32.mxu0 0.0
        %1905 = vmatmul.mubr.f32.gmra.mrb[0].mxu0 %v446
        %v1906 = vpop.f32.mrb[0].mxu0
        %v1907 = vadd.f32 0.0, %v1906
        %v1908 = vpop.f32.mrb[0].mxu0
        %1909 = vmatprep.mubr.f32.mxu0 0.0
        %1910 = vmatmul.mubr.f32.gmra.mrb[0].mxu0 %v449
        %v1911 = vpop.f32.mrb[0].mxu0
        %v1912 = vadd.f32 0.0, %v1911
        %v1913 = vpop.f32.mrb[0].mxu0
        %1914 = vdwg.mxu0
        %v1915 = vld [vmem:[%s6] sm:$0xff]
        %v1916 = vld [vmem:[%s6 + $0x8] sm:$0xff]
        %v1917 = vld [vmem:[%s6 + $0x10] sm:$0xff]
        %v1918 = vld [vmem:[%s6 + $0x18] sm:$0xff]
        %v1919 = vld [vmem:[%s6 + $0x20] sm:$0xff]
        %v1920 = vld [vmem:[%s6 + $0x28] sm:$0xff]
        %v1921 = vld [vmem:[%s6 + $0x30] sm:$0xff]
        %v1922 = vld [vmem:[%s6 + $0x38] sm:$0xff]
        %v1924 = vsel %vm1736, %v1872, 0
        %v1927 = vsel %vm1736, %v1877, 0
        %v1930 = vsel %vm1736, %v1882, 0
        %v1933 = vsel %vm1736, %v1887, 0
        %v1936 = vsel %vm1736, %v1892, 0
        %v1939 = vsel %vm1736, %v1897, 0
        %v1942 = vsel %vm1736, %v1902, 0
        %v1945 = vsel %vm1736, %v1907, 0
        %v1948 = vsel %vm1736, %v1912, 0
        %1950 = vmatprep.subr.mxu0 0.0
        %1951 = vmatpush1.msra.mxu0 %v1915
        %1952 = vmatprep.subr.mxu0 0.0
        %1953 = vmatpush1.msra.mxu0 %v1916
        %1954 = vmatprep.subr.mxu0 0.0
        %1955 = vmatpush1.msra.mxu0 %v1917
        %1956 = vmatprep.subr.mxu0 0.0
        %1957 = vmatpush1.msra.mxu0 %v1918
        %1958 = vmatprep.subr.mxu0 0.0
        %1959 = vmatpush1.msra.mxu0 %v1919
        %1960 = vmatprep.subr.mxu0 0.0
        %1961 = vmatpush1.msra.mxu0 %v1920
        %1962 = vmatprep.subr.mxu0 0.0
        %1963 = vmatpush1.msra.mxu0 %v1921
        %1964 = vmatprep.subr.mxu0 0.0
        %1965 = vmatpush1.msra.mxu0 %v1922
        %1966 = vmatprep.subr.mxu0 0.0
        %1967 = vmatpush1.msra.mxu0 0.0
        %1968 = vmatprep.subr.mxu0 0.0
        %1969 = vmatpush1.msra.mxu0 0.0
        %1970 = vmatprep.subr.mxu0 0.0
        %1971 = vmatpush1.msra.mxu0 0.0
        %1972 = vmatprep.subr.mxu0 0.0
        %1973 = vmatpush1.msra.mxu0 0.0
        %1974 = vmatprep.subr.mxu0 0.0
        %1975 = vmatpush1.msra.mxu0 0.0
        %1976 = vmatprep.subr.mxu0 0.0
        %1977 = vmatpush1.msra.mxu0 0.0
        %1978 = vmatprep.subr.mxu0 0.0
        %1979 = vmatpush1.msra.mxu0 0.0
        %1980 = vmatprep.subr.mxu0 0.0
        %1981 = vmatpush1.msra.mxu0 0.0
        %1982 = vmatprep.subr.mxu0 0.0
        %1983 = vmatpush1.msra.mxu0 0.0
        %1984 = vmatprep.subr.mxu0 0.0
        %1985 = vmatpush1.msra.mxu0 0.0
        %1986 = vmatprep.subr.mxu0 0.0
        %1987 = vmatpush1.msra.mxu0 0.0
        %1988 = vmatprep.subr.mxu0 0.0
        %1989 = vmatpush1.msra.mxu0 0.0
        %1990 = vmatprep.subr.mxu0 0.0
        %1991 = vmatpush1.msra.mxu0 0.0
        %1992 = vmatprep.subr.mxu0 0.0
        %1993 = vmatpush1.msra.mxu0 0.0
        %1994 = vmatprep.subr.mxu0 0.0
        %1995 = vmatpush1.msra.mxu0 0.0
        %1996 = vmatprep.subr.mxu0 0.0
        %1997 = vmatpush1.msra.mxu0 0.0
        %1998 = vmatprep.subr.mxu0 0.0
        %1999 = vmatpush1.msra.mxu0 0.0
        %2000 = vmatprep.subr.mxu0 0.0
        %2001 = vmatpush1.msra.mxu0 0.0
        %2002 = vmatprep.subr.mxu0 0.0
        %2003 = vmatpush1.msra.mxu0 0.0
        %2004 = vmatprep.subr.mxu0 0.0
        %2005 = vmatpush1.msra.mxu0 0.0
        %2006 = vmatprep.subr.mxu0 0.0
        %2007 = vmatpush1.msra.mxu0 0.0
        %2008 = vmatprep.subr.mxu0 0.0
        %2009 = vmatpush1.msra.mxu0 0.0
        %2010 = vmatprep.subr.mxu0 0.0
        %2011 = vmatpush1.msra.mxu0 0.0
        %2012 = vmatprep.subr.mxu0 0.0
        %2013 = vmatpush1.msra.mxu0 0.0
        %2014 = vmatprep.mubr.f32.mxu0 0.0
        %2015 = vmatmul.mubr.f32.gmra.mrb[0].mxu0 %v1924
        %v2016 = vpop.f32.mrb[0].mxu0
        %v2017 = vadd.f32 0.0, %v2016
        %v2018 = vpop.f32.mrb[0].mxu0
        %2019 = vmatprep.mubr.f32.mxu0 0.0
        %2020 = vmatmul.mubr.f32.gmra.mrb[0].mxu0 %v1927
        %v2021 = vpop.f32.mrb[0].mxu0
        %v2022 = vadd.f32 0.0, %v2021
        %v2023 = vpop.f32.mrb[0].mxu0
        %2024 = vmatprep.mubr.f32.mxu0 0.0
        %2025 = vmatmul.mubr.f32.gmra.mrb[0].mxu0 %v1930
        %v2026 = vpop.f32.mrb[0].mxu0
        %v2027 = vadd.f32 0.0, %v2026
        %v2028 = vpop.f32.mrb[0].mxu0
        %2029 = vmatprep.mubr.f32.mxu0 0.0
        %2030 = vmatmul.mubr.f32.gmra.mrb[0].mxu0 %v1933
        %v2031 = vpop.f32.mrb[0].mxu0
        %v2032 = vadd.f32 0.0, %v2031
        %v2033 = vpop.f32.mrb[0].mxu0
        %2034 = vmatprep.mubr.f32.mxu0 0.0
        %2035 = vmatmul.mubr.f32.gmra.mrb[0].mxu0 %v1936
        %v2036 = vpop.f32.mrb[0].mxu0
        %v2037 = vadd.f32 0.0, %v2036
        %v2038 = vpop.f32.mrb[0].mxu0
        %2039 = vmatprep.mubr.f32.mxu0 0.0
        %2040 = vmatmul.mubr.f32.gmra.mrb[0].mxu0 %v1939
        %v2041 = vpop.f32.mrb[0].mxu0
        %v2042 = vadd.f32 0.0, %v2041
        %v2043 = vpop.f32.mrb[0].mxu0
        %2044 = vmatprep.mubr.f32.mxu0 0.0
        %2045 = vmatmul.mubr.f32.gmra.mrb[0].mxu0 %v1942
        %v2046 = vpop.f32.mrb[0].mxu0
        %v2047 = vadd.f32 0.0, %v2046
        %v2048 = vpop.f32.mrb[0].mxu0
        %2049 = vmatprep.mubr.f32.mxu0 0.0
        %2050 = vmatmul.mubr.f32.gmra.mrb[0].mxu0 %v1945
        %v2051 = vpop.f32.mrb[0].mxu0
        %v2052 = vadd.f32 0.0, %v2051
        %v2053 = vpop.f32.mrb[0].mxu0
        %2054 = vmatprep.mubr.f32.mxu0 0.0
        %2055 = vmatmul.mubr.f32.gmra.mrb[0].mxu0 %v1948
        %v2056 = vpop.f32.mrb[0].mxu0
        %v2057 = vadd.f32 0.0, %v2056
        %v2058 = vpop.f32.mrb[0].mxu0
        %2059 = vdwg.mxu0
        %v2060 = vmul.f32 %v2017, %v2017
        %v2061 = vmul.f32 %v2022, %v2022
        %v2062 = vmul.f32 %v2027, %v2027
        %v2063 = vmul.f32 %v2032, %v2032
        %v2064 = vmul.f32 %v2037, %v2037
        %v2065 = vmul.f32 %v2042, %v2042
        %v2066 = vmul.f32 %v2047, %v2047
        %v2067 = vmul.f32 %v2052, %v2052
        %v2068 = vmul.f32 %v2057, %v2057
        %vm2069 = vcmask 654336
        %v2070 = vsel %vm2069, %v2060, 0.0
        %v2071 = vsel %vm2069, %v2061, 0.0
        %v2072 = vadd.f32 %v2070, %v2071
        %v2073 = vsel %vm2069, %v2062, 0.0
        %v2074 = vadd.f32 %v2072, %v2073
        %v2075 = vsel %vm2069, %v2063, 0.0
        %v2076 = vadd.f32 %v2074, %v2075
        %v2077 = vsel %vm2069, %v2064, 0.0
        %v2078 = vadd.f32 %v2076, %v2077
        %v2079 = vsel %vm2069, %v2065, 0.0
        %v2080 = vadd.f32 %v2078, %v2079
        %v2081 = vsel %vm2069, %v2066, 0.0
        %v2082 = vadd.f32 %v2080, %v2081
        %v2083 = vsel %vm2069, %v2067, 0.0
        %v2084 = vadd.f32 %v2082, %v2083
        %vm2085 = vcmask 647168
        %v2086 = vsel %vm2085, %v2068, 0.0
        %v2087 = vadd.f32 %v2084, %v2086
        %v2088 = vrot.slane %v2087, 4
        %v2089 = vadd.f32 %v2087, %v2088
        %v2090 = vrot.slane %v2089, 2
        %v2091 = vadd.f32 %v2089, %v2090
        %v2092 = vrot.slane %v2091, 1
        %v2093 = vadd.f32 %v2091, %v2092
        %v2094 = vsub.f32 %v2093, %v2068
        %v2095 = vmul.f32 %v2094, 0.015625
        %v2096 = vsub.f32 %v2095, %v2068
        %v2097 = vmax.f32 %v2096, 0.0
        %v2098 = vlaneseq
        %v2099 = vshrl.u32 %v2098, 7
        %v2100 = vsub.s32 0, %v2099
        %v2101 = vrot.slane %v2057, %v2100
        %v2102 = vsub.f32 %v2017, %v2101
        %v2103 = vsub.f32 %v2022, %v2101
        %v2104 = vsub.f32 %v2027, %v2101
        %v2105 = vsub.f32 %v2032, %v2101
        %v2106 = vsub.f32 %v2037, %v2101
        %v2107 = vsub.f32 %v2042, %v2101
        %v2108 = vsub.f32 %v2047, %v2101
        %v2109 = vsub.f32 %v2052, %v2101
        %v2110 = vsub.f32 %v2057, %v2101
        %v2111 = vadd.f32 %v2097, 1e-05
        %v2112 = vrsqrt.pop %v2111
        %v2113 = vlaneseq
        %v2114 = vshrl.u32 %v2113, 7
        %v2115 = vsub.s32 0, %v2114
        %v2116 = vrot.slane %v2112, %v2115
        %v2117 = vmul.f32 %v2102, %v2116
        %v2118 = vmul.f32 %v2103, %v2116
        %v2119 = vmul.f32 %v2104, %v2116
        %v2120 = vmul.f32 %v2105, %v2116
        %v2121 = vmul.f32 %v2106, %v2116
        %v2122 = vmul.f32 %v2107, %v2116
        %v2123 = vmul.f32 %v2108, %v2116
        %v2124 = vmul.f32 %v2109, %v2116
        %v2125 = vmul.f32 %v2110, %v2116
        %v2126 = vmax.f32 %v2117, 0.0
        %v2127 = vmax.f32 %v2118, 0.0
        %v2128 = vmax.f32 %v2119, 0.0
        %v2129 = vmax.f32 %v2120, 0.0
        %v2130 = vmax.f32 %v2121, 0.0
        %v2131 = vmax.f32 %v2122, 0.0
        %v2132 = vmax.f32 %v2123, 0.0
        %v2133 = vmax.f32 %v2124, 0.0
        %v2134 = vmax.f32 %v2125, 0.0
        %v2136 = vsel %vm451, %v2134, 0
        %2138 = vmatprep.subr.mxu0 0.0
        %2139 = vmatpush1.msra.mxu0 %v2126
        %2140 = vmatprep.subr.mxu0 0.0
        %2141 = vmatpush1.msra.mxu0 %v2127
        %2142 = vmatprep.subr.mxu0 0.0
        %2143 = vmatpush1.msra.mxu0 %v2128
        %2144 = vmatprep.subr.mxu0 0.0
        %2145 = vmatpush1.msra.mxu0 %v2129
        %2146 = vmatprep.subr.mxu0 0.0
        %2147 = vmatpush1.msra.mxu0 %v2130
        %2148 = vmatprep.subr.mxu0 0.0
        %2149 = vmatpush1.msra.mxu0 %v2131
        %2150 = vmatprep.subr.mxu0 0.0
        %2151 = vmatpush1.msra.mxu0 %v2132
        %2152 = vmatprep.subr.mxu0 0.0
        %2153 = vmatpush1.msra.mxu0 %v2133
        %2154 = vmatprep.subr.mxu0 0.0
        %2155 = vmatpush1.msra.mxu0 %v2136
        %2156 = vmatprep.subr.mxu0 0.0
        %2157 = vmatpush1.msra.mxu0 0.0
        %2158 = vmatprep.subr.mxu0 0.0
        %2159 = vmatpush1.msra.mxu0 0.0
        %2160 = vmatprep.subr.mxu0 0.0
        %2161 = vmatpush1.msra.mxu0 0.0
        %2162 = vmatprep.subr.mxu0 0.0
        %2163 = vmatpush1.msra.mxu0 0.0
        %2164 = vmatprep.subr.mxu0 0.0
        %2165 = vmatpush1.msra.mxu0 0.0
        %2166 = vmatprep.subr.mxu0 0.0
        %2167 = vmatpush1.msra.mxu0 0.0
        %2168 = vmatprep.subr.mxu0 0.0
        %2169 = vmatpush1.msra.mxu0 0.0
        %2170 = vmatprep.subr.mxu0 0.0
        %2171 = vmatpush1.msra.mxu0 0.0
        %2172 = vmatprep.subr.mxu0 0.0
        %2173 = vmatpush1.msra.mxu0 0.0
        %2174 = vmatprep.subr.mxu0 0.0
        %2175 = vmatpush1.msra.mxu0 0.0
        %2176 = vmatprep.subr.mxu0 0.0
        %2177 = vmatpush1.msra.mxu0 0.0
        %2178 = vmatprep.subr.mxu0 0.0
        %2179 = vmatpush1.msra.mxu0 0.0
        %2180 = vmatprep.subr.mxu0 0.0
        %2181 = vmatpush1.msra.mxu0 0.0
        %2182 = vmatprep.subr.mxu0 0.0
        %2183 = vmatpush1.msra.mxu0 0.0
        %2184 = vmatprep.subr.mxu0 0.0
        %2185 = vmatpush1.msra.mxu0 0.0
        %2186 = vmatprep.subr.mxu0 0.0
        %2187 = vmatpush1.msra.mxu0 0.0
        %2188 = vmatprep.subr.mxu0 0.0
        %2189 = vmatpush1.msra.mxu0 0.0
        %2190 = vmatprep.subr.mxu0 0.0
        %2191 = vmatpush1.msra.mxu0 0.0
        %2192 = vmatprep.subr.mxu0 0.0
        %2193 = vmatpush1.msra.mxu0 0.0
        %2194 = vmatprep.subr.mxu0 0.0
        %2195 = vmatpush1.msra.mxu0 0.0
        %2196 = vmatprep.subr.mxu0 0.0
        %2197 = vmatpush1.msra.mxu0 0.0
        %2198 = vmatprep.subr.mxu0 0.0
        %2199 = vmatpush1.msra.mxu0 0.0
        %2200 = vmatprep.subr.mxu0 0.0
        %2201 = vmatpush1.msra.mxu0 0.0
        %2202 = vmatprep.mubr.f32.mxu0 0.0
        %2203 = vmatmul.mubr.f32.gmra.mrb[0].mxu0 %v425
        %v2204 = vpop.f32.mrb[0].mxu0
        %v2205 = vadd.f32 0.0, %v2204
        %v2206 = vpop.f32.mrb[0].mxu0
        %2207 = vmatprep.mubr.f32.mxu0 0.0
        %2208 = vmatmul.mubr.f32.gmra.mrb[0].mxu0 %v428
        %v2209 = vpop.f32.mrb[0].mxu0
        %v2210 = vadd.f32 0.0, %v2209
        %v2211 = vpop.f32.mrb[0].mxu0
        %2212 = vmatprep.mubr.f32.mxu0 0.0
        %2213 = vmatmul.mubr.f32.gmra.mrb[0].mxu0 %v431
        %v2214 = vpop.f32.mrb[0].mxu0
        %v2215 = vadd.f32 0.0, %v2214
        %v2216 = vpop.f32.mrb[0].mxu0
        %2217 = vmatprep.mubr.f32.mxu0 0.0
        %2218 = vmatmul.mubr.f32.gmra.mrb[0].mxu0 %v434
        %v2219 = vpop.f32.mrb[0].mxu0
        %v2220 = vadd.f32 0.0, %v2219
        %v2221 = vpop.f32.mrb[0].mxu0
        %2222 = vmatprep.mubr.f32.mxu0 0.0
        %2223 = vmatmul.mubr.f32.gmra.mrb[0].mxu0 %v437
        %v2224 = vpop.f32.mrb[0].mxu0
        %v2225 = vadd.f32 0.0, %v2224
        %v2226 = vpop.f32.mrb[0].mxu0
        %2227 = vmatprep.mubr.f32.mxu0 0.0
        %2228 = vmatmul.mubr.f32.gmra.mrb[0].mxu0 %v440
        %v2229 = vpop.f32.mrb[0].mxu0
        %v2230 = vadd.f32 0.0, %v2229
        %v2231 = vpop.f32.mrb[0].mxu0
        %2232 = vmatprep.mubr.f32.mxu0 0.0
        %2233 = vmatmul.mubr.f32.gmra.mrb[0].mxu0 %v443
        %v2234 = vpop.f32.mrb[0].mxu0
        %v2235 = vadd.f32 0.0, %v2234
        %v2236 = vpop.f32.mrb[0].mxu0
        %2237 = vmatprep.mubr.f32.mxu0 0.0
        %2238 = vmatmul.mubr.f32.gmra.mrb[0].mxu0 %v446
        %v2239 = vpop.f32.mrb[0].mxu0
        %v2240 = vadd.f32 0.0, %v2239
        %v2241 = vpop.f32.mrb[0].mxu0
        %2242 = vmatprep.mubr.f32.mxu0 0.0
        %2243 = vmatmul.mubr.f32.gmra.mrb[0].mxu0 %v449
        %v2244 = vpop.f32.mrb[0].mxu0
        %v2245 = vadd.f32 0.0, %v2244
        %v2246 = vpop.f32.mrb[0].mxu0
        %2247 = vdwg.mxu0
        %v2248 = vld [vmem:[%s7] sm:$0xff]
        %v2249 = vld [vmem:[%s7 + $0x8] sm:$0xff]
        %v2250 = vld [vmem:[%s7 + $0x10] sm:$0xff]
        %v2251 = vld [vmem:[%s7 + $0x18] sm:$0xff]
        %v2252 = vld [vmem:[%s7 + $0x20] sm:$0xff]
        %v2253 = vld [vmem:[%s7 + $0x28] sm:$0xff]
        %v2254 = vld [vmem:[%s7 + $0x30] sm:$0xff]
        %v2255 = vld [vmem:[%s7 + $0x38] sm:$0xff]
        %v2256 = vld [vmem:[%s7 + $0x40] sm:$0xff]
        %v2257 = vld [vmem:[%s7 + $0x48] sm:$0xff]
        %v2259 = vsel %vm2069, %v2205, 0
        %v2262 = vsel %vm2069, %v2210, 0
        %v2265 = vsel %vm2069, %v2215, 0
        %v2268 = vsel %vm2069, %v2220, 0
        %v2271 = vsel %vm2069, %v2225, 0
        %v2274 = vsel %vm2069, %v2230, 0
        %v2277 = vsel %vm2069, %v2235, 0
        %v2280 = vsel %vm2069, %v2240, 0
        %v2283 = vsel %vm2069, %v2245, 0
        %2285 = vmatprep.subr.mxu0 0.0
        %2286 = vmatpush1.msra.mxu0 %v2248
        %2287 = vmatprep.subr.mxu0 0.0
        %2288 = vmatpush1.msra.mxu0 %v2249
        %2289 = vmatprep.subr.mxu0 0.0
        %2290 = vmatpush1.msra.mxu0 %v2250
        %2291 = vmatprep.subr.mxu0 0.0
        %2292 = vmatpush1.msra.mxu0 %v2251
        %2293 = vmatprep.subr.mxu0 0.0
        %2294 = vmatpush1.msra.mxu0 %v2252
        %2295 = vmatprep.subr.mxu0 0.0
        %2296 = vmatpush1.msra.mxu0 %v2253
        %2297 = vmatprep.subr.mxu0 0.0
        %2298 = vmatpush1.msra.mxu0 %v2254
        %2299 = vmatprep.subr.mxu0 0.0
        %2300 = vmatpush1.msra.mxu0 %v2255
        %2301 = vmatprep.subr.mxu0 0.0
        %2302 = vmatpush1.msra.mxu0 %v2256
        %2303 = vmatprep.subr.mxu0 0.0
        %2304 = vmatpush1.msra.mxu0 %v2257
        %2305 = vmatprep.subr.mxu0 0.0
        %2306 = vmatpush1.msra.mxu0 0.0
        %2307 = vmatprep.subr.mxu0 0.0
        %2308 = vmatpush1.msra.mxu0 0.0
        %2309 = vmatprep.subr.mxu0 0.0
        %2310 = vmatpush1.msra.mxu0 0.0
        %2311 = vmatprep.subr.mxu0 0.0
        %2312 = vmatpush1.msra.mxu0 0.0
        %2313 = vmatprep.subr.mxu0 0.0
        %2314 = vmatpush1.msra.mxu0 0.0
        %2315 = vmatprep.subr.mxu0 0.0
        %2316 = vmatpush1.msra.mxu0 0.0
        %2317 = vmatprep.subr.mxu0 0.0
        %2318 = vmatpush1.msra.mxu0 0.0
        %2319 = vmatprep.subr.mxu0 0.0
        %2320 = vmatpush1.msra.mxu0 0.0
        %2321 = vmatprep.subr.mxu0 0.0
        %2322 = vmatpush1.msra.mxu0 0.0
        %2323 = vmatprep.subr.mxu0 0.0
        %2324 = vmatpush1.msra.mxu0 0.0
        %2325 = vmatprep.subr.mxu0 0.0
        %2326 = vmatpush1.msra.mxu0 0.0
        %2327 = vmatprep.subr.mxu0 0.0
        %2328 = vmatpush1.msra.mxu0 0.0
        %2329 = vmatprep.subr.mxu0 0.0
        %2330 = vmatpush1.msra.mxu0 0.0
        %2331 = vmatprep.subr.mxu0 0.0
        %2332 = vmatpush1.msra.mxu0 0.0
        %2333 = vmatprep.subr.mxu0 0.0
        %2334 = vmatpush1.msra.mxu0 0.0
        %2335 = vmatprep.subr.mxu0 0.0
        %2336 = vmatpush1.msra.mxu0 0.0
        %2337 = vmatprep.subr.mxu0 0.0
        %2338 = vmatpush1.msra.mxu0 0.0
        %2339 = vmatprep.subr.mxu0 0.0
        %2340 = vmatpush1.msra.mxu0 0.0
        %2341 = vmatprep.subr.mxu0 0.0
        %2342 = vmatpush1.msra.mxu0 0.0
        %2343 = vmatprep.subr.mxu0 0.0
        %2344 = vmatpush1.msra.mxu0 0.0
        %2345 = vmatprep.subr.mxu0 0.0
        %2346 = vmatpush1.msra.mxu0 0.0
        %2347 = vmatprep.subr.mxu0 0.0
        %2348 = vmatpush1.msra.mxu0 0.0
        %2349 = vmatprep.mubr.f32.mxu0 0.0
        %2350 = vmatmul.mubr.f32.gmra.mrb[0].mxu0 %v2259
        %v2351 = vpop.f32.mrb[0].mxu0
        %v2352 = vadd.f32 0.0, %v2351
        %v2353 = vpop.f32.mrb[0].mxu0
        %2354 = vmatprep.mubr.f32.mxu0 0.0
        %2355 = vmatmul.mubr.f32.gmra.mrb[0].mxu0 %v2262
        %v2356 = vpop.f32.mrb[0].mxu0
        %v2357 = vadd.f32 0.0, %v2356
        %v2358 = vpop.f32.mrb[0].mxu0
        %2359 = vmatprep.mubr.f32.mxu0 0.0
        %2360 = vmatmul.mubr.f32.gmra.mrb[0].mxu0 %v2265
        %v2361 = vpop.f32.mrb[0].mxu0
        %v2362 = vadd.f32 0.0, %v2361
        %v2363 = vpop.f32.mrb[0].mxu0
        %2364 = vmatprep.mubr.f32.mxu0 0.0
        %2365 = vmatmul.mubr.f32.gmra.mrb[0].mxu0 %v2268
        %v2366 = vpop.f32.mrb[0].mxu0
        %v2367 = vadd.f32 0.0, %v2366
        %v2368 = vpop.f32.mrb[0].mxu0
        %2369 = vmatprep.mubr.f32.mxu0 0.0
        %2370 = vmatmul.mubr.f32.gmra.mrb[0].mxu0 %v2271
        %v2371 = vpop.f32.mrb[0].mxu0
        %v2372 = vadd.f32 0.0, %v2371
        %v2373 = vpop.f32.mrb[0].mxu0
        %2374 = vmatprep.mubr.f32.mxu0 0.0
        %2375 = vmatmul.mubr.f32.gmra.mrb[0].mxu0 %v2274
        %v2376 = vpop.f32.mrb[0].mxu0
        %v2377 = vadd.f32 0.0, %v2376
        %v2378 = vpop.f32.mrb[0].mxu0
        %2379 = vmatprep.mubr.f32.mxu0 0.0
        %2380 = vmatmul.mubr.f32.gmra.mrb[0].mxu0 %v2277
        %v2381 = vpop.f32.mrb[0].mxu0
        %v2382 = vadd.f32 0.0, %v2381
        %v2383 = vpop.f32.mrb[0].mxu0
        %2384 = vmatprep.mubr.f32.mxu0 0.0
        %2385 = vmatmul.mubr.f32.gmra.mrb[0].mxu0 %v2280
        %v2386 = vpop.f32.mrb[0].mxu0
        %v2387 = vadd.f32 0.0, %v2386
        %v2388 = vpop.f32.mrb[0].mxu0
        %2389 = vmatprep.mubr.f32.mxu0 0.0
        %2390 = vmatmul.mubr.f32.gmra.mrb[0].mxu0 %v2283
        %v2391 = vpop.f32.mrb[0].mxu0
        %v2392 = vadd.f32 0.0, %v2391
        %v2393 = vpop.f32.mrb[0].mxu0
        %2394 = vdwg.mxu0
        %v2395 = vmul.f32 %v2352, %v2352
        %v2396 = vmul.f32 %v2357, %v2357
        %v2397 = vmul.f32 %v2362, %v2362
        %v2398 = vmul.f32 %v2367, %v2367
        %v2399 = vmul.f32 %v2372, %v2372
        %v2400 = vmul.f32 %v2377, %v2377
        %v2401 = vmul.f32 %v2382, %v2382
        %v2402 = vmul.f32 %v2387, %v2387
        %v2403 = vmul.f32 %v2392, %v2392
        %vm2404 = vcmask 785408
        %v2405 = vsel %vm2404, %v2395, 0.0
        %v2406 = vsel %vm2404, %v2396, 0.0
        %v2407 = vadd.f32 %v2405, %v2406
        %v2408 = vsel %vm2404, %v2397, 0.0
        %v2409 = vadd.f32 %v2407, %v2408
        %v2410 = vsel %vm2404, %v2398, 0.0
        %v2411 = vadd.f32 %v2409, %v2410
        %v2412 = vsel %vm2404, %v2399, 0.0
        %v2413 = vadd.f32 %v2411, %v2412
        %v2414 = vsel %vm2404, %v2400, 0.0
        %v2415 = vadd.f32 %v2413, %v2414
        %v2416 = vsel %vm2404, %v2401, 0.0
        %v2417 = vadd.f32 %v2415, %v2416
        %v2418 = vsel %vm2404, %v2402, 0.0
        %v2419 = vadd.f32 %v2417, %v2418
        %vm2420 = vcmask 778240
        %v2421 = vsel %vm2420, %v2403, 0.0
        %v2422 = vadd.f32 %v2419, %v2421
        %v2423 = vrot.slane %v2422, 4
        %v2424 = vadd.f32 %v2422, %v2423
        %v2425 = vrot.slane %v2424, 2
        %v2426 = vadd.f32 %v2424, %v2425
        %v2427 = vrot.slane %v2426, 1
        %v2428 = vadd.f32 %v2426, %v2427
        %v2429 = vsub.f32 %v2428, %v2403
        %v2430 = vmul.f32 %v2429, 0.015625
        %v2431 = vsub.f32 %v2430, %v2403
        %v2432 = vmax.f32 %v2431, 0.0
        %v2433 = vlaneseq
        %v2434 = vshrl.u32 %v2433, 7
        %v2435 = vsub.s32 0, %v2434
        %v2436 = vrot.slane %v2392, %v2435
        %v2437 = vsub.f32 %v2352, %v2436
        %v2438 = vsub.f32 %v2357, %v2436
        %v2439 = vsub.f32 %v2362, %v2436
        %v2440 = vsub.f32 %v2367, %v2436
        %v2441 = vsub.f32 %v2372, %v2436
        %v2442 = vsub.f32 %v2377, %v2436
        %v2443 = vsub.f32 %v2382, %v2436
        %v2444 = vsub.f32 %v2387, %v2436
        %v2445 = vsub.f32 %v2392, %v2436
        %v2446 = vadd.f32 %v2432, 1e-05
        %v2447 = vrsqrt.pop %v2446
        %v2448 = vlaneseq
        %v2449 = vshrl.u32 %v2448, 7
        %v2450 = vsub.s32 0, %v2449
        %v2451 = vrot.slane %v2447, %v2450
        %v2452 = vmul.f32 %v2437, %v2451
        %v2453 = vmul.f32 %v2438, %v2451
        %v2454 = vmul.f32 %v2439, %v2451
        %v2455 = vmul.f32 %v2440, %v2451
        %v2456 = vmul.f32 %v2441, %v2451
        %v2457 = vmul.f32 %v2442, %v2451
        %v2458 = vmul.f32 %v2443, %v2451
        %v2459 = vmul.f32 %v2444, %v2451
        %v2460 = vmul.f32 %v2445, %v2451
        %v2461 = vmax.f32 %v2452, 0.0
        %v2462 = vmax.f32 %v2453, 0.0
        %v2463 = vmax.f32 %v2454, 0.0
        %v2464 = vmax.f32 %v2455, 0.0
        %v2465 = vmax.f32 %v2456, 0.0
        %v2466 = vmax.f32 %v2457, 0.0
        %v2467 = vmax.f32 %v2458, 0.0
        %v2468 = vmax.f32 %v2459, 0.0
        %v2469 = vmax.f32 %v2460, 0.0
        %v2471 = vsel %vm451, %v2469, 0
        %2473 = vmatprep.subr.mxu0 0.0
        %2474 = vmatpush1.msra.mxu0 %v2461
        %2475 = vmatprep.subr.mxu0 0.0
        %2476 = vmatpush1.msra.mxu0 %v2462
        %2477 = vmatprep.subr.mxu0 0.0
        %2478 = vmatpush1.msra.mxu0 %v2463
        %2479 = vmatprep.subr.mxu0 0.0
        %2480 = vmatpush1.msra.mxu0 %v2464
        %2481 = vmatprep.subr.mxu0 0.0
        %2482 = vmatpush1.msra.mxu0 %v2465
        %2483 = vmatprep.subr.mxu0 0.0
        %2484 = vmatpush1.msra.mxu0 %v2466
        %2485 = vmatprep.subr.mxu0 0.0
        %2486 = vmatpush1.msra.mxu0 %v2467
        %2487 = vmatprep.subr.mxu0 0.0
        %2488 = vmatpush1.msra.mxu0 %v2468
        %2489 = vmatprep.subr.mxu0 0.0
        %2490 = vmatpush1.msra.mxu0 %v2471
        %2491 = vmatprep.subr.mxu0 0.0
        %2492 = vmatpush1.msra.mxu0 0.0
        %2493 = vmatprep.subr.mxu0 0.0
        %2494 = vmatpush1.msra.mxu0 0.0
        %2495 = vmatprep.subr.mxu0 0.0
        %2496 = vmatpush1.msra.mxu0 0.0
        %2497 = vmatprep.subr.mxu0 0.0
        %2498 = vmatpush1.msra.mxu0 0.0
        %2499 = vmatprep.subr.mxu0 0.0
        %2500 = vmatpush1.msra.mxu0 0.0
        %2501 = vmatprep.subr.mxu0 0.0
        %2502 = vmatpush1.msra.mxu0 0.0
        %2503 = vmatprep.subr.mxu0 0.0
        %2504 = vmatpush1.msra.mxu0 0.0
        %2505 = vmatprep.subr.mxu0 0.0
        %2506 = vmatpush1.msra.mxu0 0.0
        %2507 = vmatprep.subr.mxu0 0.0
        %2508 = vmatpush1.msra.mxu0 0.0
        %2509 = vmatprep.subr.mxu0 0.0
        %2510 = vmatpush1.msra.mxu0 0.0
        %2511 = vmatprep.subr.mxu0 0.0
        %2512 = vmatpush1.msra.mxu0 0.0
        %2513 = vmatprep.subr.mxu0 0.0
        %2514 = vmatpush1.msra.mxu0 0.0
        %2515 = vmatprep.subr.mxu0 0.0
        %2516 = vmatpush1.msra.mxu0 0.0
        %2517 = vmatprep.subr.mxu0 0.0
        %2518 = vmatpush1.msra.mxu0 0.0
        %2519 = vmatprep.subr.mxu0 0.0
        %2520 = vmatpush1.msra.mxu0 0.0
        %2521 = vmatprep.subr.mxu0 0.0
        %2522 = vmatpush1.msra.mxu0 0.0
        %2523 = vmatprep.subr.mxu0 0.0
        %2524 = vmatpush1.msra.mxu0 0.0
        %2525 = vmatprep.subr.mxu0 0.0
        %2526 = vmatpush1.msra.mxu0 0.0
        %2527 = vmatprep.subr.mxu0 0.0
        %2528 = vmatpush1.msra.mxu0 0.0
        %2529 = vmatprep.subr.mxu0 0.0
        %2530 = vmatpush1.msra.mxu0 0.0
        %2531 = vmatprep.subr.mxu0 0.0
        %2532 = vmatpush1.msra.mxu0 0.0
        %2533 = vmatprep.subr.mxu0 0.0
        %2534 = vmatpush1.msra.mxu0 0.0
        %2535 = vmatprep.subr.mxu0 0.0
        %2536 = vmatpush1.msra.mxu0 0.0
        %2537 = vmatprep.mubr.f32.mxu0 0.0
        %2538 = vmatmul.mubr.f32.gmra.mrb[0].mxu0 %v425
        %v2539 = vpop.f32.mrb[0].mxu0
        %v2540 = vadd.f32 0.0, %v2539
        %v2541 = vpop.f32.mrb[0].mxu0
        %2542 = vmatprep.mubr.f32.mxu0 0.0
        %2543 = vmatmul.mubr.f32.gmra.mrb[0].mxu0 %v428
        %v2544 = vpop.f32.mrb[0].mxu0
        %v2545 = vadd.f32 0.0, %v2544
        %v2546 = vpop.f32.mrb[0].mxu0
        %2547 = vmatprep.mubr.f32.mxu0 0.0
        %2548 = vmatmul.mubr.f32.gmra.mrb[0].mxu0 %v431
        %v2549 = vpop.f32.mrb[0].mxu0
        %v2550 = vadd.f32 0.0, %v2549
        %v2551 = vpop.f32.mrb[0].mxu0
        %2552 = vmatprep.mubr.f32.mxu0 0.0
        %2553 = vmatmul.mubr.f32.gmra.mrb[0].mxu0 %v434
        %v2554 = vpop.f32.mrb[0].mxu0
        %v2555 = vadd.f32 0.0, %v2554
        %v2556 = vpop.f32.mrb[0].mxu0
        %2557 = vmatprep.mubr.f32.mxu0 0.0
        %2558 = vmatmul.mubr.f32.gmra.mrb[0].mxu0 %v437
        %v2559 = vpop.f32.mrb[0].mxu0
        %v2560 = vadd.f32 0.0, %v2559
        %v2561 = vpop.f32.mrb[0].mxu0
        %2562 = vmatprep.mubr.f32.mxu0 0.0
        %2563 = vmatmul.mubr.f32.gmra.mrb[0].mxu0 %v440
        %v2564 = vpop.f32.mrb[0].mxu0
        %v2565 = vadd.f32 0.0, %v2564
        %v2566 = vpop.f32.mrb[0].mxu0
        %2567 = vmatprep.mubr.f32.mxu0 0.0
        %2568 = vmatmul.mubr.f32.gmra.mrb[0].mxu0 %v443
        %v2569 = vpop.f32.mrb[0].mxu0
        %v2570 = vadd.f32 0.0, %v2569
        %v2571 = vpop.f32.mrb[0].mxu0
        %2572 = vmatprep.mubr.f32.mxu0 0.0
        %2573 = vmatmul.mubr.f32.gmra.mrb[0].mxu0 %v446
        %v2574 = vpop.f32.mrb[0].mxu0
        %v2575 = vadd.f32 0.0, %v2574
        %v2576 = vpop.f32.mrb[0].mxu0
        %2577 = vmatprep.mubr.f32.mxu0 0.0
        %2578 = vmatmul.mubr.f32.gmra.mrb[0].mxu0 %v449
        %v2579 = vpop.f32.mrb[0].mxu0
        %v2580 = vadd.f32 0.0, %v2579
        %v2581 = vpop.f32.mrb[0].mxu0
        %2582 = vdwg.mxu0
        %v2583 = vld [vmem:[%s8] sm:$0xff]
        %v2584 = vld [vmem:[%s8 + $0x8] sm:$0xff]
        %v2585 = vld [vmem:[%s8 + $0x10] sm:$0xff]
        %v2586 = vld [vmem:[%s8 + $0x18] sm:$0xff]
        %v2587 = vld [vmem:[%s8 + $0x20] sm:$0xff]
        %v2588 = vld [vmem:[%s8 + $0x28] sm:$0xff]
        %v2589 = vld [vmem:[%s8 + $0x30] sm:$0xff]
        %v2590 = vld [vmem:[%s8 + $0x38] sm:$0xff]
        %v2591 = vld [vmem:[%s8 + $0x40] sm:$0xff]
        %v2592 = vld [vmem:[%s8 + $0x48] sm:$0xff]
        %v2593 = vld [vmem:[%s8 + $0x50] sm:$0xff]
        %v2594 = vld [vmem:[%s8 + $0x58] sm:$0xff]
        %v2596 = vsel %vm2404, %v2540, 0
        %v2599 = vsel %vm2404, %v2545, 0
        %v2602 = vsel %vm2404, %v2550, 0
        %v2605 = vsel %vm2404, %v2555, 0
        %v2608 = vsel %vm2404, %v2560, 0
        %v2611 = vsel %vm2404, %v2565, 0
        %v2614 = vsel %vm2404, %v2570, 0
        %v2617 = vsel %vm2404, %v2575, 0
        %v2620 = vsel %vm2404, %v2580, 0
        %2622 = vmatprep.subr.mxu0 0.0
        %2623 = vmatpush1.msra.mxu0 %v2583
        %2624 = vmatprep.subr.mxu0 0.0
        %2625 = vmatpush1.msra.mxu0 %v2584
        %2626 = vmatprep.subr.mxu0 0.0
        %2627 = vmatpush1.msra.mxu0 %v2585
        %2628 = vmatprep.subr.mxu0 0.0
        %2629 = vmatpush1.msra.mxu0 %v2586
        %2630 = vmatprep.subr.mxu0 0.0
        %2631 = vmatpush1.msra.mxu0 %v2587
        %2632 = vmatprep.subr.mxu0 0.0
        %2633 = vmatpush1.msra.mxu0 %v2588
        %2634 = vmatprep.subr.mxu0 0.0
        %2635 = vmatpush1.msra.mxu0 %v2589
        %2636 = vmatprep.subr.mxu0 0.0
        %2637 = vmatpush1.msra.mxu0 %v2590
        %2638 = vmatprep.subr.mxu0 0.0
        %2639 = vmatpush1.msra.mxu0 %v2591
        %2640 = vmatprep.subr.mxu0 0.0
        %2641 = vmatpush1.msra.mxu0 %v2592
        %2642 = vmatprep.subr.mxu0 0.0
        %2643 = vmatpush1.msra.mxu0 %v2593
        %2644 = vmatprep.subr.mxu0 0.0
        %2645 = vmatpush1.msra.mxu0 %v2594
        %2646 = vmatprep.subr.mxu0 0.0
        %2647 = vmatpush1.msra.mxu0 0.0
        %2648 = vmatprep.subr.mxu0 0.0
        %2649 = vmatpush1.msra.mxu0 0.0
        %2650 = vmatprep.subr.mxu0 0.0
        %2651 = vmatpush1.msra.mxu0 0.0
        %2652 = vmatprep.subr.mxu0 0.0
        %2653 = vmatpush1.msra.mxu0 0.0
        %2654 = vmatprep.subr.mxu0 0.0
        %2655 = vmatpush1.msra.mxu0 0.0
        %2656 = vmatprep.subr.mxu0 0.0
        %2657 = vmatpush1.msra.mxu0 0.0
        %2658 = vmatprep.subr.mxu0 0.0
        %2659 = vmatpush1.msra.mxu0 0.0
        %2660 = vmatprep.subr.mxu0 0.0
        %2661 = vmatpush1.msra.mxu0 0.0
        %2662 = vmatprep.subr.mxu0 0.0
        %2663 = vmatpush1.msra.mxu0 0.0
        %2664 = vmatprep.subr.mxu0 0.0
        %2665 = vmatpush1.msra.mxu0 0.0
        %2666 = vmatprep.subr.mxu0 0.0
        %2667 = vmatpush1.msra.mxu0 0.0
        %2668 = vmatprep.subr.mxu0 0.0
        %2669 = vmatpush1.msra.mxu0 0.0
        %2670 = vmatprep.subr.mxu0 0.0
        %2671 = vmatpush1.msra.mxu0 0.0
        %2672 = vmatprep.subr.mxu0 0.0
        %2673 = vmatpush1.msra.mxu0 0.0
        %2674 = vmatprep.subr.mxu0 0.0
        %2675 = vmatpush1.msra.mxu0 0.0
        %2676 = vmatprep.subr.mxu0 0.0
        %2677 = vmatpush1.msra.mxu0 0.0
        %2678 = vmatprep.subr.mxu0 0.0
        %2679 = vmatpush1.msra.mxu0 0.0
        %2680 = vmatprep.subr.mxu0 0.0
        %2681 = vmatpush1.msra.mxu0 0.0
        %2682 = vmatprep.subr.mxu0 0.0
        %2683 = vmatpush1.msra.mxu0 0.0
        %2684 = vmatprep.subr.mxu0 0.0
        %2685 = vmatpush1.msra.mxu0 0.0
        %2686 = vmatprep.mubr.f32.mxu0 0.0
        %2687 = vmatmul.mubr.f32.gmra.mrb[0].mxu0 %v2596
        %v2688 = vpop.f32.mrb[0].mxu0
        %v2689 = vadd.f32 0.0, %v2688
        %v2690 = vpop.f32.mrb[0].mxu0
        %2691 = vmatprep.mubr.f32.mxu0 0.0
        %2692 = vmatmul.mubr.f32.gmra.mrb[0].mxu0 %v2599
        %v2693 = vpop.f32.mrb[0].mxu0
        %v2694 = vadd.f32 0.0, %v2693
        %v2695 = vpop.f32.mrb[0].mxu0
        %2696 = vmatprep.mubr.f32.mxu0 0.0
        %2697 = vmatmul.mubr.f32.gmra.mrb[0].mxu0 %v2602
        %v2698 = vpop.f32.mrb[0].mxu0
        %v2699 = vadd.f32 0.0, %v2698
        %v2700 = vpop.f32.mrb[0].mxu0
        %2701 = vmatprep.mubr.f32.mxu0 0.0
        %2702 = vmatmul.mubr.f32.gmra.mrb[0].mxu0 %v2605
        %v2703 = vpop.f32.mrb[0].mxu0
        %v2704 = vadd.f32 0.0, %v2703
        %v2705 = vpop.f32.mrb[0].mxu0
        %2706 = vmatprep.mubr.f32.mxu0 0.0
        %2707 = vmatmul.mubr.f32.gmra.mrb[0].mxu0 %v2608
        %v2708 = vpop.f32.mrb[0].mxu0
        %v2709 = vadd.f32 0.0, %v2708
        %v2710 = vpop.f32.mrb[0].mxu0
        %2711 = vmatprep.mubr.f32.mxu0 0.0
        %2712 = vmatmul.mubr.f32.gmra.mrb[0].mxu0 %v2611
        %v2713 = vpop.f32.mrb[0].mxu0
        %v2714 = vadd.f32 0.0, %v2713
        %v2715 = vpop.f32.mrb[0].mxu0
        %2716 = vmatprep.mubr.f32.mxu0 0.0
        %2717 = vmatmul.mubr.f32.gmra.mrb[0].mxu0 %v2614
        %v2718 = vpop.f32.mrb[0].mxu0
        %v2719 = vadd.f32 0.0, %v2718
        %v2720 = vpop.f32.mrb[0].mxu0
        %2721 = vmatprep.mubr.f32.mxu0 0.0
        %2722 = vmatmul.mubr.f32.gmra.mrb[0].mxu0 %v2617
        %v2723 = vpop.f32.mrb[0].mxu0
        %v2724 = vadd.f32 0.0, %v2723
        %v2725 = vpop.f32.mrb[0].mxu0
        %2726 = vmatprep.mubr.f32.mxu0 0.0
        %2727 = vmatmul.mubr.f32.gmra.mrb[0].mxu0 %v2620
        %v2728 = vpop.f32.mrb[0].mxu0
        %v2729 = vadd.f32 0.0, %v2728
        %v2730 = vpop.f32.mrb[0].mxu0
        %2731 = vdwg.mxu0
        %v2732 = vmul.f32 %v2689, %v2689
        %v2733 = vmul.f32 %v2694, %v2694
        %v2734 = vmul.f32 %v2699, %v2699
        %v2735 = vmul.f32 %v2704, %v2704
        %v2736 = vmul.f32 %v2709, %v2709
        %v2737 = vmul.f32 %v2714, %v2714
        %v2738 = vmul.f32 %v2719, %v2719
        %v2739 = vmul.f32 %v2724, %v2724
        %v2740 = vmul.f32 %v2729, %v2729
        %vm2741 = vcmask 916480
        %v2742 = vsel %vm2741, %v2732, 0.0
        %v2743 = vsel %vm2741, %v2733, 0.0
        %v2744 = vadd.f32 %v2742, %v2743
        %v2745 = vsel %vm2741, %v2734, 0.0
        %v2746 = vadd.f32 %v2744, %v2745
        %v2747 = vsel %vm2741, %v2735, 0.0
        %v2748 = vadd.f32 %v2746, %v2747
        %v2749 = vsel %vm2741, %v2736, 0.0
        %v2750 = vadd.f32 %v2748, %v2749
        %v2751 = vsel %vm2741, %v2737, 0.0
        %v2752 = vadd.f32 %v2750, %v2751
        %v2753 = vsel %vm2741, %v2738, 0.0
        %v2754 = vadd.f32 %v2752, %v2753
        %v2755 = vsel %vm2741, %v2739, 0.0
        %v2756 = vadd.f32 %v2754, %v2755
        %vm2757 = vcmask 909312
        %v2758 = vsel %vm2757, %v2740, 0.0
        %v2759 = vadd.f32 %v2756, %v2758
        %v2760 = vrot.slane %v2759, 4
        %v2761 = vadd.f32 %v2759, %v2760
        %v2762 = vrot.slane %v2761, 2
        %v2763 = vadd.f32 %v2761, %v2762
        %v2764 = vrot.slane %v2763, 1
        %v2765 = vadd.f32 %v2763, %v2764
        %v2766 = vsub.f32 %v2765, %v2740
        %v2767 = vmul.f32 %v2766, 0.015625
        %v2768 = vsub.f32 %v2767, %v2740
        %v2769 = vmax.f32 %v2768, 0.0
        %v2770 = vlaneseq
        %v2771 = vshrl.u32 %v2770, 7
        %v2772 = vsub.s32 0, %v2771
        %v2773 = vrot.slane %v2729, %v2772
        %v2774 = vsub.f32 %v2689, %v2773
        %v2775 = vsub.f32 %v2694, %v2773
        %v2776 = vsub.f32 %v2699, %v2773
        %v2777 = vsub.f32 %v2704, %v2773
        %v2778 = vsub.f32 %v2709, %v2773
        %v2779 = vsub.f32 %v2714, %v2773
        %v2780 = vsub.f32 %v2719, %v2773
        %v2781 = vsub.f32 %v2724, %v2773
        %v2782 = vsub.f32 %v2729, %v2773
        %v2783 = vadd.f32 %v2769, 1e-05
        %v2784 = vrsqrt.pop %v2783
        %v2785 = vlaneseq
        %v2786 = vshrl.u32 %v2785, 7
        %v2787 = vsub.s32 0, %v2786
        %v2788 = vrot.slane %v2784, %v2787
        %v2789 = vmul.f32 %v2774, %v2788
        %v2790 = vmul.f32 %v2775, %v2788
        %v2791 = vmul.f32 %v2776, %v2788
        %v2792 = vmul.f32 %v2777, %v2788
        %v2793 = vmul.f32 %v2778, %v2788
        %v2794 = vmul.f32 %v2779, %v2788
        %v2795 = vmul.f32 %v2780, %v2788
        %v2796 = vmul.f32 %v2781, %v2788
        %v2797 = vmul.f32 %v2782, %v2788
        %v2798 = vmax.f32 %v2789, 0.0
        %v2799 = vmax.f32 %v2790, 0.0
        %v2800 = vmax.f32 %v2791, 0.0
        %v2801 = vmax.f32 %v2792, 0.0
        %v2802 = vmax.f32 %v2793, 0.0
        %v2803 = vmax.f32 %v2794, 0.0
        %v2804 = vmax.f32 %v2795, 0.0
        %v2805 = vmax.f32 %v2796, 0.0
        %v2806 = vmax.f32 %v2797, 0.0
        %v2808 = vsel %vm451, %v2806, 0
        %2810 = vmatprep.subr.mxu0 0.0
        %2811 = vmatpush1.msra.mxu0 %v2798
        %2812 = vmatprep.subr.mxu0 0.0
        %2813 = vmatpush1.msra.mxu0 %v2799
        %2814 = vmatprep.subr.mxu0 0.0
        %2815 = vmatpush1.msra.mxu0 %v2800
        %2816 = vmatprep.subr.mxu0 0.0
        %2817 = vmatpush1.msra.mxu0 %v2801
        %2818 = vmatprep.subr.mxu0 0.0
        %2819 = vmatpush1.msra.mxu0 %v2802
        %2820 = vmatprep.subr.mxu0 0.0
        %2821 = vmatpush1.msra.mxu0 %v2803
        %2822 = vmatprep.subr.mxu0 0.0
        %2823 = vmatpush1.msra.mxu0 %v2804
        %2824 = vmatprep.subr.mxu0 0.0
        %2825 = vmatpush1.msra.mxu0 %v2805
        %2826 = vmatprep.subr.mxu0 0.0
        %2827 = vmatpush1.msra.mxu0 %v2808
        %2828 = vmatprep.subr.mxu0 0.0
        %2829 = vmatpush1.msra.mxu0 0.0
        %2830 = vmatprep.subr.mxu0 0.0
        %2831 = vmatpush1.msra.mxu0 0.0
        %2832 = vmatprep.subr.mxu0 0.0
        %2833 = vmatpush1.msra.mxu0 0.0
        %2834 = vmatprep.subr.mxu0 0.0
        %2835 = vmatpush1.msra.mxu0 0.0
        %2836 = vmatprep.subr.mxu0 0.0
        %2837 = vmatpush1.msra.mxu0 0.0
        %2838 = vmatprep.subr.mxu0 0.0
        %2839 = vmatpush1.msra.mxu0 0.0
        %2840 = vmatprep.subr.mxu0 0.0
        %2841 = vmatpush1.msra.mxu0 0.0
        %2842 = vmatprep.subr.mxu0 0.0
        %2843 = vmatpush1.msra.mxu0 0.0
        %2844 = vmatprep.subr.mxu0 0.0
        %2845 = vmatpush1.msra.mxu0 0.0
        %2846 = vmatprep.subr.mxu0 0.0
        %2847 = vmatpush1.msra.mxu0 0.0
        %2848 = vmatprep.subr.mxu0 0.0
        %2849 = vmatpush1.msra.mxu0 0.0
        %2850 = vmatprep.subr.mxu0 0.0
        %2851 = vmatpush1.msra.mxu0 0.0
        %2852 = vmatprep.subr.mxu0 0.0
        %2853 = vmatpush1.msra.mxu0 0.0
        %2854 = vmatprep.subr.mxu0 0.0
        %2855 = vmatpush1.msra.mxu0 0.0
        %2856 = vmatprep.subr.mxu0 0.0
        %2857 = vmatpush1.msra.mxu0 0.0
        %2858 = vmatprep.subr.mxu0 0.0
        %2859 = vmatpush1.msra.mxu0 0.0
        %2860 = vmatprep.subr.mxu0 0.0
        %2861 = vmatpush1.msra.mxu0 0.0
        %2862 = vmatprep.subr.mxu0 0.0
        %2863 = vmatpush1.msra.mxu0 0.0
        %2864 = vmatprep.subr.mxu0 0.0
        %2865 = vmatpush1.msra.mxu0 0.0
        %2866 = vmatprep.subr.mxu0 0.0
        %2867 = vmatpush1.msra.mxu0 0.0
        %2868 = vmatprep.subr.mxu0 0.0
        %2869 = vmatpush1.msra.mxu0 0.0
        %2870 = vmatprep.subr.mxu0 0.0
        %2871 = vmatpush1.msra.mxu0 0.0
        %2872 = vmatprep.subr.mxu0 0.0
        %2873 = vmatpush1.msra.mxu0 0.0
        %2874 = vmatprep.mubr.f32.mxu0 0.0
        %2875 = vmatmul.mubr.f32.gmra.mrb[0].mxu0 %v425
        %v2876 = vpop.f32.mrb[0].mxu0
        %v2877 = vadd.f32 0.0, %v2876
        %v2878 = vpop.f32.mrb[0].mxu0
        %2879 = vmatprep.mubr.f32.mxu0 0.0
        %2880 = vmatmul.mubr.f32.gmra.mrb[0].mxu0 %v428
        %v2881 = vpop.f32.mrb[0].mxu0
        %v2882 = vadd.f32 0.0, %v2881
        %v2883 = vpop.f32.mrb[0].mxu0
        %2884 = vmatprep.mubr.f32.mxu0 0.0
        %2885 = vmatmul.mubr.f32.gmra.mrb[0].mxu0 %v431
        %v2886 = vpop.f32.mrb[0].mxu0
        %v2887 = vadd.f32 0.0, %v2886
        %v2888 = vpop.f32.mrb[0].mxu0
        %2889 = vmatprep.mubr.f32.mxu0 0.0
        %2890 = vmatmul.mubr.f32.gmra.mrb[0].mxu0 %v434
        %v2891 = vpop.f32.mrb[0].mxu0
        %v2892 = vadd.f32 0.0, %v2891
        %v2893 = vpop.f32.mrb[0].mxu0
        %2894 = vmatprep.mubr.f32.mxu0 0.0
        %2895 = vmatmul.mubr.f32.gmra.mrb[0].mxu0 %v437
        %v2896 = vpop.f32.mrb[0].mxu0
        %v2897 = vadd.f32 0.0, %v2896
        %v2898 = vpop.f32.mrb[0].mxu0
        %2899 = vmatprep.mubr.f32.mxu0 0.0
        %2900 = vmatmul.mubr.f32.gmra.mrb[0].mxu0 %v440
        %v2901 = vpop.f32.mrb[0].mxu0
        %v2902 = vadd.f32 0.0, %v2901
        %v2903 = vpop.f32.mrb[0].mxu0
        %2904 = vmatprep.mubr.f32.mxu0 0.0
        %2905 = vmatmul.mubr.f32.gmra.mrb[0].mxu0 %v443
        %v2906 = vpop.f32.mrb[0].mxu0
        %v2907 = vadd.f32 0.0, %v2906
        %v2908 = vpop.f32.mrb[0].mxu0
        %2909 = vmatprep.mubr.f32.mxu0 0.0
        %2910 = vmatmul.mubr.f32.gmra.mrb[0].mxu0 %v446
        %v2911 = vpop.f32.mrb[0].mxu0
        %v2912 = vadd.f32 0.0, %v2911
        %v2913 = vpop.f32.mrb[0].mxu0
        %2914 = vmatprep.mubr.f32.mxu0 0.0
        %2915 = vmatmul.mubr.f32.gmra.mrb[0].mxu0 %v449
        %v2916 = vpop.f32.mrb[0].mxu0
        %v2917 = vadd.f32 0.0, %v2916
        %v2918 = vpop.f32.mrb[0].mxu0
        %2919 = vdwg.mxu0
        %v2920 = vld [vmem:[%s9] sm:$0xff]
        %v2921 = vld [vmem:[%s9 + $0x8] sm:$0xff]
        %v2922 = vld [vmem:[%s9 + $0x10] sm:$0xff]
        %v2923 = vld [vmem:[%s9 + $0x18] sm:$0xff]
        %v2924 = vld [vmem:[%s9 + $0x20] sm:$0xff]
        %v2925 = vld [vmem:[%s9 + $0x28] sm:$0xff]
        %v2926 = vld [vmem:[%s9 + $0x30] sm:$0xff]
        %v2927 = vld [vmem:[%s9 + $0x38] sm:$0xff]
        %v2928 = vld [vmem:[%s9 + $0x40] sm:$0xff]
        %v2929 = vld [vmem:[%s9 + $0x48] sm:$0xff]
        %v2930 = vld [vmem:[%s9 + $0x50] sm:$0xff]
        %v2931 = vld [vmem:[%s9 + $0x58] sm:$0xff]
        %v2932 = vld [vmem:[%s9 + $0x60] sm:$0xff]
        %v2933 = vld [vmem:[%s9 + $0x68] sm:$0xff]
        %v2935 = vsel %vm2741, %v2877, 0
        %v2938 = vsel %vm2741, %v2882, 0
        %v2941 = vsel %vm2741, %v2887, 0
        %v2944 = vsel %vm2741, %v2892, 0
        %v2947 = vsel %vm2741, %v2897, 0
        %v2950 = vsel %vm2741, %v2902, 0
        %v2953 = vsel %vm2741, %v2907, 0
        %v2956 = vsel %vm2741, %v2912, 0
        %v2959 = vsel %vm2741, %v2917, 0
        %2961 = vmatprep.subr.mxu0 0.0
        %2962 = vmatpush1.msra.mxu0 %v2920
        %2963 = vmatprep.subr.mxu0 0.0
        %2964 = vmatpush1.msra.mxu0 %v2921
        %2965 = vmatprep.subr.mxu0 0.0
        %2966 = vmatpush1.msra.mxu0 %v2922
        %2967 = vmatprep.subr.mxu0 0.0
        %2968 = vmatpush1.msra.mxu0 %v2923
        %2969 = vmatprep.subr.mxu0 0.0
        %2970 = vmatpush1.msra.mxu0 %v2924
        %2971 = vmatprep.subr.mxu0 0.0
        %2972 = vmatpush1.msra.mxu0 %v2925
        %2973 = vmatprep.subr.mxu0 0.0
        %2974 = vmatpush1.msra.mxu0 %v2926
        %2975 = vmatprep.subr.mxu0 0.0
        %2976 = vmatpush1.msra.mxu0 %v2927
        %2977 = vmatprep.subr.mxu0 0.0
        %2978 = vmatpush1.msra.mxu0 %v2928
        %2979 = vmatprep.subr.mxu0 0.0
        %2980 = vmatpush1.msra.mxu0 %v2929
        %2981 = vmatprep.subr.mxu0 0.0
        %2982 = vmatpush1.msra.mxu0 %v2930
        %2983 = vmatprep.subr.mxu0 0.0
        %2984 = vmatpush1.msra.mxu0 %v2931
        %2985 = vmatprep.subr.mxu0 0.0
        %2986 = vmatpush1.msra.mxu0 %v2932
        %2987 = vmatprep.subr.mxu0 0.0
        %2988 = vmatpush1.msra.mxu0 %v2933
        %2989 = vmatprep.subr.mxu0 0.0
        %2990 = vmatpush1.msra.mxu0 0.0
        %2991 = vmatprep.subr.mxu0 0.0
        %2992 = vmatpush1.msra.mxu0 0.0
        %2993 = vmatprep.subr.mxu0 0.0
        %2994 = vmatpush1.msra.mxu0 0.0
        %2995 = vmatprep.subr.mxu0 0.0
        %2996 = vmatpush1.msra.mxu0 0.0
        %2997 = vmatprep.subr.mxu0 0.0
        %2998 = vmatpush1.msra.mxu0 0.0
        %2999 = vmatprep.subr.mxu0 0.0
        %3000 = vmatpush1.msra.mxu0 0.0
        %3001 = vmatprep.subr.mxu0 0.0
        %3002 = vmatpush1.msra.mxu0 0.0
        %3003 = vmatprep.subr.mxu0 0.0
        %3004 = vmatpush1.msra.mxu0 0.0
        %3005 = vmatprep.subr.mxu0 0.0
        %3006 = vmatpush1.msra.mxu0 0.0
        %3007 = vmatprep.subr.mxu0 0.0
        %3008 = vmatpush1.msra.mxu0 0.0
        %3009 = vmatprep.subr.mxu0 0.0
        %3010 = vmatpush1.msra.mxu0 0.0
        %3011 = vmatprep.subr.mxu0 0.0
        %3012 = vmatpush1.msra.mxu0 0.0
        %3013 = vmatprep.subr.mxu0 0.0
        %3014 = vmatpush1.msra.mxu0 0.0
        %3015 = vmatprep.subr.mxu0 0.0
        %3016 = vmatpush1.msra.mxu0 0.0
        %3017 = vmatprep.subr.mxu0 0.0
        %3018 = vmatpush1.msra.mxu0 0.0
        %3019 = vmatprep.subr.mxu0 0.0
        %3020 = vmatpush1.msra.mxu0 0.0
        %3021 = vmatprep.subr.mxu0 0.0
        %3022 = vmatpush1.msra.mxu0 0.0
        %3023 = vmatprep.subr.mxu0 0.0
        %3024 = vmatpush1.msra.mxu0 0.0
        %3025 = vmatprep.mubr.f32.mxu0 0.0
        %3026 = vmatmul.mubr.f32.gmra.mrb[0].mxu0 %v2935
        %v3027 = vpop.f32.mrb[0].mxu0
        %v3028 = vadd.f32 0.0, %v3027
        %v3029 = vpop.f32.mrb[0].mxu0
        %3030 = vmatprep.mubr.f32.mxu0 0.0
        %3031 = vmatmul.mubr.f32.gmra.mrb[0].mxu0 %v2938
        %v3032 = vpop.f32.mrb[0].mxu0
        %v3033 = vadd.f32 0.0, %v3032
        %v3034 = vpop.f32.mrb[0].mxu0
        %3035 = vmatprep.mubr.f32.mxu0 0.0
        %3036 = vmatmul.mubr.f32.gmra.mrb[0].mxu0 %v2941
        %v3037 = vpop.f32.mrb[0].mxu0
        %v3038 = vadd.f32 0.0, %v3037
        %v3039 = vpop.f32.mrb[0].mxu0
        %3040 = vmatprep.mubr.f32.mxu0 0.0
        %3041 = vmatmul.mubr.f32.gmra.mrb[0].mxu0 %v2944
        %v3042 = vpop.f32.mrb[0].mxu0
        %v3043 = vadd.f32 0.0, %v3042
        %v3044 = vpop.f32.mrb[0].mxu0
        %3045 = vmatprep.mubr.f32.mxu0 0.0
        %3046 = vmatmul.mubr.f32.gmra.mrb[0].mxu0 %v2947
        %v3047 = vpop.f32.mrb[0].mxu0
        %v3048 = vadd.f32 0.0, %v3047
        %v3049 = vpop.f32.mrb[0].mxu0
        %3050 = vmatprep.mubr.f32.mxu0 0.0
        %3051 = vmatmul.mubr.f32.gmra.mrb[0].mxu0 %v2950
        %v3052 = vpop.f32.mrb[0].mxu0
        %v3053 = vadd.f32 0.0, %v3052
        %v3054 = vpop.f32.mrb[0].mxu0
        %3055 = vmatprep.mubr.f32.mxu0 0.0
        %3056 = vmatmul.mubr.f32.gmra.mrb[0].mxu0 %v2953
        %v3057 = vpop.f32.mrb[0].mxu0
        %v3058 = vadd.f32 0.0, %v3057
        %v3059 = vpop.f32.mrb[0].mxu0
        %3060 = vmatprep.mubr.f32.mxu0 0.0
        %3061 = vmatmul.mubr.f32.gmra.mrb[0].mxu0 %v2956
        %v3062 = vpop.f32.mrb[0].mxu0
        %v3063 = vadd.f32 0.0, %v3062
        %v3064 = vpop.f32.mrb[0].mxu0
        %3065 = vmatprep.mubr.f32.mxu0 0.0
        %3066 = vmatmul.mubr.f32.gmra.mrb[0].mxu0 %v2959
        %v3067 = vpop.f32.mrb[0].mxu0
        %v3068 = vadd.f32 0.0, %v3067
        %v3069 = vpop.f32.mrb[0].mxu0
        %3070 = vdwg.mxu0
        %v3071 = vmul.f32 %v3028, %v3028
        %v3072 = vmul.f32 %v3033, %v3033
        %v3073 = vmul.f32 %v3038, %v3038
        %v3074 = vmul.f32 %v3043, %v3043
        %v3075 = vmul.f32 %v3048, %v3048
        %v3076 = vmul.f32 %v3053, %v3053
        %v3077 = vmul.f32 %v3058, %v3058
        %v3078 = vmul.f32 %v3063, %v3063
        %v3079 = vmul.f32 %v3068, %v3068
        %v3080 = vadd.f32 %v3071, %v3072
        %v3081 = vadd.f32 %v3080, %v3073
        %v3082 = vadd.f32 %v3081, %v3074
        %v3083 = vadd.f32 %v3082, %v3075
        %v3084 = vadd.f32 %v3083, %v3076
        %v3085 = vadd.f32 %v3084, %v3077
        %v3086 = vadd.f32 %v3085, %v3078
        %v3087 = vsel %vm451, %v3079, 0.0
        %v3088 = vadd.f32 %v3086, %v3087
        %v3089 = vrot.slane %v3088, 4
        %v3090 = vadd.f32 %v3088, %v3089
        %v3091 = vrot.slane %v3090, 2
        %v3092 = vadd.f32 %v3090, %v3091
        %v3093 = vrot.slane %v3092, 1
        %v3094 = vadd.f32 %v3092, %v3093
        %v3095 = vsub.f32 %v3094, %v3079
        %v3096 = vmul.f32 %v3095, 0.015625
        %v3097 = vsub.f32 %v3096, %v3079
        %v3098 = vmax.f32 %v3097, 0.0
        %v3099 = vlaneseq
        %v3100 = vshrl.u32 %v3099, 7
        %v3101 = vsub.s32 0, %v3100
        %v3102 = vrot.slane %v3068, %v3101
        %v3103 = vsub.f32 %v3028, %v3102
        %v3104 = vsub.f32 %v3033, %v3102
        %v3105 = vsub.f32 %v3038, %v3102
        %v3106 = vsub.f32 %v3043, %v3102
        %v3107 = vsub.f32 %v3048, %v3102
        %v3108 = vsub.f32 %v3053, %v3102
        %v3109 = vsub.f32 %v3058, %v3102
        %v3110 = vsub.f32 %v3063, %v3102
        %v3111 = vsub.f32 %v3068, %v3102
        %v3112 = vadd.f32 %v3098, 1e-05
        %v3113 = vrsqrt.pop %v3112
        %v3114 = vlaneseq
        %v3115 = vshrl.u32 %v3114, 7
        %v3116 = vsub.s32 0, %v3115
        %v3117 = vrot.slane %v3113, %v3116
        %v3118 = vmul.f32 %v3103, %v3117
        %v3119 = vmul.f32 %v3104, %v3117
        %v3120 = vmul.f32 %v3105, %v3117
        %v3121 = vmul.f32 %v3106, %v3117
        %v3122 = vmul.f32 %v3107, %v3117
        %v3123 = vmul.f32 %v3108, %v3117
        %v3124 = vmul.f32 %v3109, %v3117
        %v3125 = vmul.f32 %v3110, %v3117
        %v3126 = vmul.f32 %v3111, %v3117
        %v3127 = vmax.f32 %v3118, 0.0
        %v3128 = vmax.f32 %v3119, 0.0
        %v3129 = vmax.f32 %v3120, 0.0
        %v3130 = vmax.f32 %v3121, 0.0
        %v3131 = vmax.f32 %v3122, 0.0
        %v3132 = vmax.f32 %v3123, 0.0
        %v3133 = vmax.f32 %v3124, 0.0
        %v3134 = vmax.f32 %v3125, 0.0
        %v3135 = vmax.f32 %v3126, 0.0
        %v3137 = vsel %vm451, %v3135, 0
        %3139 = vmatprep.subr.mxu0 0.0
        %3140 = vmatpush1.msra.mxu0 %v3127
        %3141 = vmatprep.subr.mxu0 0.0
        %3142 = vmatpush1.msra.mxu0 %v3128
        %3143 = vmatprep.subr.mxu0 0.0
        %3144 = vmatpush1.msra.mxu0 %v3129
        %3145 = vmatprep.subr.mxu0 0.0
        %3146 = vmatpush1.msra.mxu0 %v3130
        %3147 = vmatprep.subr.mxu0 0.0
        %3148 = vmatpush1.msra.mxu0 %v3131
        %3149 = vmatprep.subr.mxu0 0.0
        %3150 = vmatpush1.msra.mxu0 %v3132
        %3151 = vmatprep.subr.mxu0 0.0
        %3152 = vmatpush1.msra.mxu0 %v3133
        %3153 = vmatprep.subr.mxu0 0.0
        %3154 = vmatpush1.msra.mxu0 %v3134
        %3155 = vmatprep.subr.mxu0 0.0
        %3156 = vmatpush1.msra.mxu0 %v3137
        %3157 = vmatprep.subr.mxu0 0.0
        %3158 = vmatpush1.msra.mxu0 0.0
        %3159 = vmatprep.subr.mxu0 0.0
        %3160 = vmatpush1.msra.mxu0 0.0
        %3161 = vmatprep.subr.mxu0 0.0
        %3162 = vmatpush1.msra.mxu0 0.0
        %3163 = vmatprep.subr.mxu0 0.0
        %3164 = vmatpush1.msra.mxu0 0.0
        %3165 = vmatprep.subr.mxu0 0.0
        %3166 = vmatpush1.msra.mxu0 0.0
        %3167 = vmatprep.subr.mxu0 0.0
        %3168 = vmatpush1.msra.mxu0 0.0
        %3169 = vmatprep.subr.mxu0 0.0
        %3170 = vmatpush1.msra.mxu0 0.0
        %3171 = vmatprep.subr.mxu0 0.0
        %3172 = vmatpush1.msra.mxu0 0.0
        %3173 = vmatprep.subr.mxu0 0.0
        %3174 = vmatpush1.msra.mxu0 0.0
        %3175 = vmatprep.subr.mxu0 0.0
        %3176 = vmatpush1.msra.mxu0 0.0
        %3177 = vmatprep.subr.mxu0 0.0
        %3178 = vmatpush1.msra.mxu0 0.0
        %3179 = vmatprep.subr.mxu0 0.0
        %3180 = vmatpush1.msra.mxu0 0.0
        %3181 = vmatprep.subr.mxu0 0.0
        %3182 = vmatpush1.msra.mxu0 0.0
        %3183 = vmatprep.subr.mxu0 0.0
        %3184 = vmatpush1.msra.mxu0 0.0
        %3185 = vmatprep.subr.mxu0 0.0
        %3186 = vmatpush1.msra.mxu0 0.0
        %3187 = vmatprep.subr.mxu0 0.0
        %3188 = vmatpush1.msra.mxu0 0.0
        %3189 = vmatprep.subr.mxu0 0.0
        %3190 = vmatpush1.msra.mxu0 0.0
        %3191 = vmatprep.subr.mxu0 0.0
        %3192 = vmatpush1.msra.mxu0 0.0
        %3193 = vmatprep.subr.mxu0 0.0
        %3194 = vmatpush1.msra.mxu0 0.0
        %3195 = vmatprep.subr.mxu0 0.0
        %3196 = vmatpush1.msra.mxu0 0.0
        %3197 = vmatprep.subr.mxu0 0.0
        %3198 = vmatpush1.msra.mxu0 0.0
        %3199 = vmatprep.subr.mxu0 0.0
        %3200 = vmatpush1.msra.mxu0 0.0
        %3201 = vmatprep.subr.mxu0 0.0
        %3202 = vmatpush1.msra.mxu0 0.0
        %3203 = vmatprep.mubr.f32.mxu0 0.0
        %3204 = vmatmul.mubr.f32.gmra.mrb[0].mxu0 %v425
        %v3205 = vpop.f32.mrb[0].mxu0
        %v3206 = vadd.f32 0.0, %v3205
        %v3207 = vpop.f32.mrb[0].mxu0
        %3208 = vmatprep.mubr.f32.mxu0 0.0
        %3209 = vmatmul.mubr.f32.gmra.mrb[0].mxu0 %v428
        %v3210 = vpop.f32.mrb[0].mxu0
        %v3211 = vadd.f32 0.0, %v3210
        %v3212 = vpop.f32.mrb[0].mxu0
        %3213 = vmatprep.mubr.f32.mxu0 0.0
        %3214 = vmatmul.mubr.f32.gmra.mrb[0].mxu0 %v431
        %v3215 = vpop.f32.mrb[0].mxu0
        %v3216 = vadd.f32 0.0, %v3215
        %v3217 = vpop.f32.mrb[0].mxu0
        %3218 = vmatprep.mubr.f32.mxu0 0.0
        %3219 = vmatmul.mubr.f32.gmra.mrb[0].mxu0 %v434
        %v3220 = vpop.f32.mrb[0].mxu0
        %v3221 = vadd.f32 0.0, %v3220
        %v3222 = vpop.f32.mrb[0].mxu0
        %3223 = vmatprep.mubr.f32.mxu0 0.0
        %3224 = vmatmul.mubr.f32.gmra.mrb[0].mxu0 %v437
        %v3225 = vpop.f32.mrb[0].mxu0
        %v3226 = vadd.f32 0.0, %v3225
        %v3227 = vpop.f32.mrb[0].mxu0
        %3228 = vmatprep.mubr.f32.mxu0 0.0
        %3229 = vmatmul.mubr.f32.gmra.mrb[0].mxu0 %v440
        %v3230 = vpop.f32.mrb[0].mxu0
        %v3231 = vadd.f32 0.0, %v3230
        %v3232 = vpop.f32.mrb[0].mxu0
        %3233 = vmatprep.mubr.f32.mxu0 0.0
        %3234 = vmatmul.mubr.f32.gmra.mrb[0].mxu0 %v443
        %v3235 = vpop.f32.mrb[0].mxu0
        %v3236 = vadd.f32 0.0, %v3235
        %v3237 = vpop.f32.mrb[0].mxu0
        %3238 = vmatprep.mubr.f32.mxu0 0.0
        %3239 = vmatmul.mubr.f32.gmra.mrb[0].mxu0 %v446
        %v3240 = vpop.f32.mrb[0].mxu0
        %v3241 = vadd.f32 0.0, %v3240
        %v3242 = vpop.f32.mrb[0].mxu0
        %3243 = vmatprep.mubr.f32.mxu0 0.0
        %3244 = vmatmul.mubr.f32.gmra.mrb[0].mxu0 %v449
        %v3245 = vpop.f32.mrb[0].mxu0
        %v3246 = vadd.f32 0.0, %v3245
        %v3247 = vpop.f32.mrb[0].mxu0
        %3248 = vdwg.mxu0
        %v3249 = vld [vmem:[%s10] sm:$0xff]
        %v3250 = vld [vmem:[%s10 + $0x8] sm:$0xff]
        %v3251 = vld [vmem:[%s10 + $0x10] sm:$0xff]
        %v3252 = vld [vmem:[%s10 + $0x18] sm:$0xff]
        %v3253 = vld [vmem:[%s10 + $0x20] sm:$0xff]
        %v3254 = vld [vmem:[%s10 + $0x28] sm:$0xff]
        %v3255 = vld [vmem:[%s10 + $0x30] sm:$0xff]
        %v3256 = vld [vmem:[%s10 + $0x38] sm:$0xff]
        %v3257 = vld [vmem:[%s10 + $0x40] sm:$0xff]
        %v3258 = vld [vmem:[%s10 + $0x48] sm:$0xff]
        %v3259 = vld [vmem:[%s10 + $0x50] sm:$0xff]
        %v3260 = vld [vmem:[%s10 + $0x58] sm:$0xff]
        %v3261 = vld [vmem:[%s10 + $0x60] sm:$0xff]
        %v3262 = vld [vmem:[%s10 + $0x68] sm:$0xff]
        %v3263 = vld [vmem:[%s10 + $0x70] sm:$0xff]
        %v3264 = vld [vmem:[%s10 + $0x78] sm:$0xff]
        %v3265 = vld [vmem:[%s10 + $0x80] sm:$0xff]
        %v3266 = vld [vmem:[%s10 + $0x88] sm:$0xff]
        %v3267 = vld [vmem:[%s10 + $0x90] sm:$0xff]
        %v3268 = vld [vmem:[%s10 + $0x98] sm:$0xff]
        %v3269 = vld [vmem:[%s10 + $0xa0] sm:$0xff]
        %v3270 = vld [vmem:[%s10 + $0xa8] sm:$0xff]
        %v3271 = vld [vmem:[%s10 + $0xb0] sm:$0xff]
        %v3272 = vld [vmem:[%s10 + $0xb8] sm:$0xff]
        %v3273 = vld [vmem:[%s10 + $0xc0] sm:$0xff]
        %v3274 = vld [vmem:[%s10 + $0xc8] sm:$0xff]
        %v3275 = vld [vmem:[%s10 + $0xd0] sm:$0xff]
        %v3276 = vld [vmem:[%s10 + $0xd8] sm:$0xff]
        %v3277 = vld [vmem:[%s10 + $0xe0] sm:$0xff]
        %v3278 = vld [vmem:[%s10 + $0xe8] sm:$0xff]
        %v3279 = vld [vmem:[%s10 + $0xf0] sm:$0xff]
        %v3280 = vld [vmem:[%s10 + $0xf8] sm:$0xff]
        %3281 = vmatprep.subr.mxu0 %v3250
        %3282 = vmatpush1.msra.mxu0 %v3249
        %3283 = vmatprep.subr.mxu0 %v3252
        %3284 = vmatpush1.msra.mxu0 %v3251
        %3285 = vmatprep.subr.mxu0 %v3254
        %3286 = vmatpush1.msra.mxu0 %v3253
        %3287 = vmatprep.subr.mxu0 %v3256
        %3288 = vmatpush1.msra.mxu0 %v3255
        %3289 = vmatprep.subr.mxu0 %v3258
        %3290 = vmatpush1.msra.mxu0 %v3257
        %3291 = vmatprep.subr.mxu0 %v3260
        %3292 = vmatpush1.msra.mxu0 %v3259
        %3293 = vmatprep.subr.mxu0 %v3262
        %3294 = vmatpush1.msra.mxu0 %v3261
        %3295 = vmatprep.subr.mxu0 %v3264
        %3296 = vmatpush1.msra.mxu0 %v3263
        %3297 = vmatprep.subr.mxu0 %v3266
        %3298 = vmatpush1.msra.mxu0 %v3265
        %3299 = vmatprep.subr.mxu0 %v3268
        %3300 = vmatpush1.msra.mxu0 %v3267
        %3301 = vmatprep.subr.mxu0 %v3270
        %3302 = vmatpush1.msra.mxu0 %v3269
        %3303 = vmatprep.subr.mxu0 %v3272
        %3304 = vmatpush1.msra.mxu0 %v3271
        %3305 = vmatprep.subr.mxu0 %v3274
        %3306 = vmatpush1.msra.mxu0 %v3273
        %3307 = vmatprep.subr.mxu0 %v3276
        %3308 = vmatpush1.msra.mxu0 %v3275
        %3309 = vmatprep.subr.mxu0 %v3278
        %3310 = vmatpush1.msra.mxu0 %v3277
        %3311 = vmatprep.subr.mxu0 %v3280
        %3312 = vmatpush1.msra.mxu0 %v3279
        %3313 = vmatprep.subr.mxu0 0.0
        %3314 = vmatpush1.msra.mxu0 0.0
        %3315 = vmatprep.subr.mxu0 0.0
        %3316 = vmatpush1.msra.mxu0 0.0
        %3317 = vmatprep.subr.mxu0 0.0
        %3318 = vmatpush1.msra.mxu0 0.0
        %3319 = vmatprep.subr.mxu0 0.0
        %3320 = vmatpush1.msra.mxu0 0.0
        %3321 = vmatprep.subr.mxu0 0.0
        %3322 = vmatpush1.msra.mxu0 0.0
        %3323 = vmatprep.subr.mxu0 0.0
        %3324 = vmatpush1.msra.mxu0 0.0
        %3325 = vmatprep.subr.mxu0 0.0
        %3326 = vmatpush1.msra.mxu0 0.0
        %3327 = vmatprep.subr.mxu0 0.0
        %3328 = vmatpush1.msra.mxu0 0.0
        %3329 = vmatprep.subr.mxu0 0.0
        %3330 = vmatpush1.msra.mxu0 0.0
        %3331 = vmatprep.subr.mxu0 0.0
        %3332 = vmatpush1.msra.mxu0 0.0
        %3333 = vmatprep.subr.mxu0 0.0
        %3334 = vmatpush1.msra.mxu0 0.0
        %3335 = vmatprep.subr.mxu0 0.0
        %3336 = vmatpush1.msra.mxu0 0.0
        %3337 = vmatprep.subr.mxu0 0.0
        %3338 = vmatpush1.msra.mxu0 0.0
        %3339 = vmatprep.subr.mxu0 0.0
        %3340 = vmatpush1.msra.mxu0 0.0
        %3341 = vmatprep.subr.mxu0 0.0
        %3342 = vmatpush1.msra.mxu0 0.0
        %3343 = vmatprep.subr.mxu0 0.0
        %3344 = vmatpush1.msra.mxu0 0.0
        %3345 = vmatprep.mubr.f32.mxu0 0.0
        %3346 = vmatmul.mubr.f32.gmra.mrb[0].mxu0 %v3206
        %v3347 = vpop.f32.mrb[0].mxu0
        %v3348 = vadd.f32 0.0, %v3347
        %v3349 = vpop.f32.mrb[0].mxu0
        %v3350 = vadd.f32 0.0, %v3349
        %3351 = vmatprep.mubr.f32.mxu0 0.0
        %3352 = vmatmul.mubr.f32.gmra.mrb[0].mxu0 %v3211
        %v3353 = vpop.f32.mrb[0].mxu0
        %v3354 = vadd.f32 0.0, %v3353
        %v3355 = vpop.f32.mrb[0].mxu0
        %v3356 = vadd.f32 0.0, %v3355
        %3357 = vmatprep.mubr.f32.mxu0 0.0
        %3358 = vmatmul.mubr.f32.gmra.mrb[0].mxu0 %v3216
        %v3359 = vpop.f32.mrb[0].mxu0
        %v3360 = vadd.f32 0.0, %v3359
        %v3361 = vpop.f32.mrb[0].mxu0
        %v3362 = vadd.f32 0.0, %v3361
        %3363 = vmatprep.mubr.f32.mxu0 0.0
        %3364 = vmatmul.mubr.f32.gmra.mrb[0].mxu0 %v3221
        %v3365 = vpop.f32.mrb[0].mxu0
        %v3366 = vadd.f32 0.0, %v3365
        %v3367 = vpop.f32.mrb[0].mxu0
        %v3368 = vadd.f32 0.0, %v3367
        %3369 = vmatprep.mubr.f32.mxu0 0.0
        %3370 = vmatmul.mubr.f32.gmra.mrb[0].mxu0 %v3226
        %v3371 = vpop.f32.mrb[0].mxu0
        %v3372 = vadd.f32 0.0, %v3371
        %v3373 = vpop.f32.mrb[0].mxu0
        %v3374 = vadd.f32 0.0, %v3373
        %3375 = vmatprep.mubr.f32.mxu0 0.0
        %3376 = vmatmul.mubr.f32.gmra.mrb[0].mxu0 %v3231
        %v3377 = vpop.f32.mrb[0].mxu0
        %v3378 = vadd.f32 0.0, %v3377
        %v3379 = vpop.f32.mrb[0].mxu0
        %v3380 = vadd.f32 0.0, %v3379
        %3381 = vmatprep.mubr.f32.mxu0 0.0
        %3382 = vmatmul.mubr.f32.gmra.mrb[0].mxu0 %v3236
        %v3383 = vpop.f32.mrb[0].mxu0
        %v3384 = vadd.f32 0.0, %v3383
        %v3385 = vpop.f32.mrb[0].mxu0
        %v3386 = vadd.f32 0.0, %v3385
        %3387 = vmatprep.mubr.f32.mxu0 0.0
        %3388 = vmatmul.mubr.f32.gmra.mrb[0].mxu0 %v3241
        %v3389 = vpop.f32.mrb[0].mxu0
        %v3390 = vadd.f32 0.0, %v3389
        %v3391 = vpop.f32.mrb[0].mxu0
        %v3392 = vadd.f32 0.0, %v3391
        %3393 = vmatprep.mubr.f32.mxu0 0.0
        %3394 = vmatmul.mubr.f32.gmra.mrb[0].mxu0 %v3246
        %v3395 = vpop.f32.mrb[0].mxu0
        %v3396 = vpop.f32.mrb[0].mxu0
        %3397 = vdwg.mxu0
        %3398 = vst [vmem:[#allocation2] sm:$0xff] %v3348
        %3399 = vst.msk [vmem:[#allocation2 + $0x8] sm:$0xff] %vm749, %v3350
        %3400 = vst [vmem:[#allocation2 + $0x10] sm:$0xff] %v3354
        %3401 = vst.msk [vmem:[#allocation2 + $0x18] sm:$0xff] %vm749, %v3356
        %3402 = vst [vmem:[#allocation2 + $0x20] sm:$0xff] %v3360
        %3403 = vst.msk [vmem:[#allocation2 + $0x28] sm:$0xff] %vm749, %v3362
        %3404 = vst [vmem:[#allocation2 + $0x30] sm:$0xff] %v3366
        %3405 = vst.msk [vmem:[#allocation2 + $0x38] sm:$0xff] %vm749, %v3368
        %3406 = vst [vmem:[#allocation2 + $0x40] sm:$0xff] %v3372
        %3407 = vst.msk [vmem:[#allocation2 + $0x48] sm:$0xff] %vm749, %v3374
        %3408 = vst [vmem:[#allocation2 + $0x50] sm:$0xff] %v3378
        %3409 = vst.msk [vmem:[#allocation2 + $0x58] sm:$0xff] %vm749, %v3380
        %3410 = vst [vmem:[#allocation2 + $0x60] sm:$0xff] %v3384
        %3411 = vst.msk [vmem:[#allocation2 + $0x68] sm:$0xff] %vm749, %v3386
        %3412 = vst [vmem:[#allocation2 + $0x70] sm:$0xff] %v3390
        %3413 = vst.msk [vmem:[#allocation2 + $0x78] sm:$0xff] %vm749, %v3392
        %3414 = vst [vmem:[#allocation2 + $0x80] sm:$0xff] 0.0
        %3415 = vst.msk [vmem:[#allocation2 + $0x88] sm:$0xff] %vm749, 0.0
        %3416 = vst [vmem:[#allocation2 + $0x90] sm:$0xff] 0.0
        %3417 = vst.msk [vmem:[#allocation2 + $0x98] sm:$0xff] %vm749, 0.0
        %3418 = vst [vmem:[#allocation2 + $0xa0] sm:$0xff] 0.0
        %3419 = vst.msk [vmem:[#allocation2 + $0xa8] sm:$0xff] %vm749, 0.0
        %3420 = vst [vmem:[#allocation2 + $0xb0] sm:$0xff] 0.0
        %3421 = vst.msk [vmem:[#allocation2 + $0xb8] sm:$0xff] %vm749, 0.0
        %3422 = vst [vmem:[#allocation2 + $0xc0] sm:$0xff] 0.0
        %3423 = vst.msk [vmem:[#allocation2 + $0xc8] sm:$0xff] %vm749, 0.0
        %3424 = vst [vmem:[#allocation2 + $0xd0] sm:$0xff] 0.0
        %3425 = vst.msk [vmem:[#allocation2 + $0xd8] sm:$0xff] %vm749, 0.0
        %3426 = vst [vmem:[#allocation2 + $0xe0] sm:$0xff] 0.0
        %3427 = vst.msk [vmem:[#allocation2 + $0xe8] sm:$0xff] %vm749, 0.0
        %3428 = vst [vmem:[#allocation2 + $0xf0] sm:$0xff] 0.0
        %3429 = vst.msk [vmem:[#allocation2 + $0xf8] sm:$0xff] %vm749, 0.0
        %v3430 = vld [vmem:[#allocation2] sm:$0xff]
        %v3431 = vld [vmem:[#allocation2 + $0x8] sm:$0xff]
        %v3432 = vld [vmem:[#allocation2 + $0x10] sm:$0xff]
        %v3433 = vld [vmem:[#allocation2 + $0x18] sm:$0xff]
        %v3434 = vld [vmem:[#allocation2 + $0x20] sm:$0xff]
        %v3435 = vld [vmem:[#allocation2 + $0x28] sm:$0xff]
        %v3436 = vld [vmem:[#allocation2 + $0x30] sm:$0xff]
        %v3437 = vld [vmem:[#allocation2 + $0x38] sm:$0xff]
        %v3438 = vld [vmem:[#allocation2 + $0x40] sm:$0xff]
        %v3439 = vld [vmem:[#allocation2 + $0x48] sm:$0xff]
        %v3440 = vld [vmem:[#allocation2 + $0x50] sm:$0xff]
        %v3441 = vld [vmem:[#allocation2 + $0x58] sm:$0xff]
        %v3442 = vld [vmem:[#allocation2 + $0x60] sm:$0xff]
        %v3443 = vld [vmem:[#allocation2 + $0x68] sm:$0xff]
        %v3444 = vld [vmem:[#allocation2 + $0x70] sm:$0xff]
        %v3445 = vld [vmem:[#allocation2 + $0x78] sm:$0xff]
        %v3446 = vld [vmem:[#allocation2 + $0x80] sm:$0xff]
        %v3447 = vld [vmem:[#allocation2 + $0x88] sm:$0xff]
        %v3448 = vld [vmem:[#allocation2 + $0x90] sm:$0xff]
        %v3449 = vld [vmem:[#allocation2 + $0x98] sm:$0xff]
        %v3450 = vld [vmem:[#allocation2 + $0xa0] sm:$0xff]
        %v3451 = vld [vmem:[#allocation2 + $0xa8] sm:$0xff]
        %v3452 = vld [vmem:[#allocation2 + $0xb0] sm:$0xff]
        %v3453 = vld [vmem:[#allocation2 + $0xb8] sm:$0xff]
        %v3454 = vld [vmem:[#allocation2 + $0xc0] sm:$0xff]
        %v3455 = vld [vmem:[#allocation2 + $0xc8] sm:$0xff]
        %v3456 = vld [vmem:[#allocation2 + $0xd0] sm:$0xff]
        %v3457 = vld [vmem:[#allocation2 + $0xd8] sm:$0xff]
        %v3458 = vld [vmem:[#allocation2 + $0xe0] sm:$0xff]
        %v3459 = vld [vmem:[#allocation2 + $0xe8] sm:$0xff]
        %v3460 = vld [vmem:[#allocation2 + $0xf0] sm:$0xff]
        %v3461 = vld [vmem:[#allocation2 + $0xf8] sm:$0xff]
        %v3463 = vsel %vm749, %v3350, 0
        %v3466 = vsel %vm749, %v3356, 0
        %v3469 = vsel %vm749, %v3362, 0
        %v3472 = vsel %vm749, %v3368, 0
        %v3475 = vsel %vm749, %v3374, 0
        %v3478 = vsel %vm749, %v3380, 0
        %v3481 = vsel %vm749, %v3386, 0
        %v3484 = vsel %vm749, %v3392, 0
        %v3487 = vsel %vm749, %v3431, 0
        %v3490 = vsel %vm749, %v3433, 0
        %v3493 = vsel %vm749, %v3435, 0
        %v3496 = vsel %vm749, %v3437, 0
        %v3499 = vsel %vm749, %v3439, 0
        %v3502 = vsel %vm749, %v3441, 0
        %v3505 = vsel %vm749, %v3443, 0
        %v3508 = vsel %vm749, %v3445, 0
        %v3511 = vsel %vm749, %v3447, 0
        %v3514 = vsel %vm749, %v3449, 0
        %v3517 = vsel %vm749, %v3451, 0
        %v3520 = vsel %vm749, %v3453, 0
        %v3523 = vsel %vm749, %v3455, 0
        %v3526 = vsel %vm749, %v3457, 0
        %v3529 = vsel %vm749, %v3459, 0
        %v3532 = vsel %vm749, %v3461, 0
        %3534 = vmatprep.subr.mxu0 %v3487
        %3535 = vmatpush1.xpose.msra.mxu0 %v3430
        %3536 = vmatprep.subr.mxu0 %v3490
        %3537 = vmatpush1.xpose.msra.mxu0 %v3432
        %3538 = vmatprep.subr.mxu0 %v3493
        %3539 = vmatpush1.xpose.msra.mxu0 %v3434
        %3540 = vmatprep.subr.mxu0 %v3496
        %3541 = vmatpush1.xpose.msra.mxu0 %v3436
        %3542 = vmatprep.subr.mxu0 %v3499
        %3543 = vmatpush1.xpose.msra.mxu0 %v3438
        %3544 = vmatprep.subr.mxu0 %v3502
        %3545 = vmatpush1.xpose.msra.mxu0 %v3440
        %3546 = vmatprep.subr.mxu0 %v3505
        %3547 = vmatpush1.xpose.msra.mxu0 %v3442
        %3548 = vmatprep.subr.mxu0 %v3508
        %3549 = vmatpush1.xpose.msra.mxu0 %v3444
        %3550 = vmatprep.subr.mxu0 %v3511
        %3551 = vmatpush1.xpose.msra.mxu0 %v3446
        %3552 = vmatprep.subr.mxu0 %v3514
        %3553 = vmatpush1.xpose.msra.mxu0 %v3448
        %3554 = vmatprep.subr.mxu0 %v3517
        %3555 = vmatpush1.xpose.msra.mxu0 %v3450
        %3556 = vmatprep.subr.mxu0 %v3520
        %3557 = vmatpush1.xpose.msra.mxu0 %v3452
        %3558 = vmatprep.subr.mxu0 %v3523
        %3559 = vmatpush1.xpose.msra.mxu0 %v3454
        %3560 = vmatprep.subr.mxu0 %v3526
        %3561 = vmatpush1.xpose.msra.mxu0 %v3456
        %3562 = vmatprep.subr.mxu0 %v3529
        %3563 = vmatpush1.xpose.msra.mxu0 %v3458
        %3564 = vmatprep.subr.mxu0 %v3532
        %3565 = vmatpush1.xpose.msra.mxu0 %v3460
        %3566 = vmatprep.subr.mxu0 0.0
        %3567 = vmatpush1.xpose.msra.mxu0 0.0
        %3568 = vmatprep.subr.mxu0 0.0
        %3569 = vmatpush1.xpose.msra.mxu0 0.0
        %3570 = vmatprep.subr.mxu0 0.0
        %3571 = vmatpush1.xpose.msra.mxu0 0.0
        %3572 = vmatprep.subr.mxu0 0.0
        %3573 = vmatpush1.xpose.msra.mxu0 0.0
        %3574 = vmatprep.subr.mxu0 0.0
        %3575 = vmatpush1.xpose.msra.mxu0 0.0
        %3576 = vmatprep.subr.mxu0 0.0
        %3577 = vmatpush1.xpose.msra.mxu0 0.0
        %3578 = vmatprep.subr.mxu0 0.0
        %3579 = vmatpush1.xpose.msra.mxu0 0.0
        %3580 = vmatprep.subr.mxu0 0.0
        %3581 = vmatpush1.xpose.msra.mxu0 0.0
        %3582 = vmatprep.subr.mxu0 0.0
        %3583 = vmatpush1.xpose.msra.mxu0 0.0
        %3584 = vmatprep.subr.mxu0 0.0
        %3585 = vmatpush1.xpose.msra.mxu0 0.0
        %3586 = vmatprep.subr.mxu0 0.0
        %3587 = vmatpush1.xpose.msra.mxu0 0.0
        %3588 = vmatprep.subr.mxu0 0.0
        %3589 = vmatpush1.xpose.msra.mxu0 0.0
        %3590 = vmatprep.subr.mxu0 0.0
        %3591 = vmatpush1.xpose.msra.mxu0 0.0
        %3592 = vmatprep.subr.mxu0 0.0
        %3593 = vmatpush1.xpose.msra.mxu0 0.0
        %3594 = vmatprep.subr.mxu0 0.0
        %3595 = vmatpush1.xpose.msra.mxu0 0.0
        %3596 = vmatprep.subr.mxu0 0.0
        %3597 = vmatpush1.xpose.msra.mxu0 0.0
        %3598 = vmatprep.mubr.f32.mxu0 %v3463
        %3599 = vmatmul.mubr.f32.gmra.mrb[0].mxu0 %v3348
        %v3600 = vpop.f32.mrb[0].mxu0
        %v3601 = vadd.f32 0.0, %v3600
        %v3602 = vpop.f32.mrb[0].mxu0
        %3603 = vmatprep.mubr.f32.mxu0 %v3466
        %3604 = vmatmul.mubr.f32.gmra.mrb[0].mxu0 %v3354
        %v3605 = vpop.f32.mrb[0].mxu0
        %v3606 = vadd.f32 0.0, %v3605
        %v3607 = vpop.f32.mrb[0].mxu0
        %3608 = vmatprep.mubr.f32.mxu0 %v3469
        %3609 = vmatmul.mubr.f32.gmra.mrb[0].mxu0 %v3360
        %v3610 = vpop.f32.mrb[0].mxu0
        %v3611 = vadd.f32 0.0, %v3610
        %v3612 = vpop.f32.mrb[0].mxu0
        %3613 = vmatprep.mubr.f32.mxu0 %v3472
        %3614 = vmatmul.mubr.f32.gmra.mrb[0].mxu0 %v3366
        %v3615 = vpop.f32.mrb[0].mxu0
        %v3616 = vadd.f32 0.0, %v3615
        %v3617 = vpop.f32.mrb[0].mxu0
        %3618 = vmatprep.mubr.f32.mxu0 %v3475
        %3619 = vmatmul.mubr.f32.gmra.mrb[0].mxu0 %v3372
        %v3620 = vpop.f32.mrb[0].mxu0
        %v3621 = vadd.f32 0.0, %v3620
        %v3622 = vpop.f32.mrb[0].mxu0
        %3623 = vmatprep.mubr.f32.mxu0 %v3478
        %3624 = vmatmul.mubr.f32.gmra.mrb[0].mxu0 %v3378
        %v3625 = vpop.f32.mrb[0].mxu0
        %v3626 = vadd.f32 0.0, %v3625
        %v3627 = vpop.f32.mrb[0].mxu0
        %3628 = vmatprep.mubr.f32.mxu0 %v3481
        %3629 = vmatmul.mubr.f32.gmra.mrb[0].mxu0 %v3384
        %v3630 = vpop.f32.mrb[0].mxu0
        %v3631 = vadd.f32 0.0, %v3630
        %v3632 = vpop.f32.mrb[0].mxu0
        %3633 = vmatprep.mubr.f32.mxu0 %v3484
        %3634 = vmatmul.mubr.f32.gmra.mrb[0].mxu0 %v3390
        %v3635 = vpop.f32.mrb[0].mxu0
        %v3636 = vadd.f32 0.0, %v3635
        %v3637 = vpop.f32.mrb[0].mxu0
        %3638 = vdwg.mxu0
        %3639 = vst [vmem:[%s394] sm:$0xff] %v3601
        %3640 = vst [vmem:[%s394 + $0x8] sm:$0xff] %v3606
        %3641 = vst [vmem:[%s394 + $0x10] sm:$0xff] %v3611
        %3642 = vst [vmem:[%s394 + $0x18] sm:$0xff] %v3616
        %3643 = vst [vmem:[%s394 + $0x20] sm:$0xff] %v3621
        %3644 = vst [vmem:[%s394 + $0x28] sm:$0xff] %v3626
        %3645 = vst [vmem:[%s394 + $0x30] sm:$0xff] %v3631
        %3646 = vst [vmem:[%s394 + $0x38] sm:$0xff] %v3636
        %s3647 = sand.u32 %s274, 1
        %s3648 = scalar_lea.sflag [#allocation4], %s3647
        %s3649 = sand.u32 %s274, 1
        %s3650 = smul.addr %s3649, 64
        %s3651 = scalar_lea.vmem [#allocation3], %s3650
        // Predicated region
        $region65: #{tpu_custom_call.1} parent=63 // pred_check
          %p3652 = pneg %p284
        $region66: #{tpu_custom_call.1} parent=63 // pred_check_branch
          %3654 = sbr.rel (%p3652) target = $region68
        $region67: #{tpu_custom_call.1} parent=63 // pred_region
          %s3656 = ssub.s32 1024, 1024
          %3657 = vsyncadd %s3648, %s3656
          %s3658 = smul.addr %s25, 8
          %s3659 = smul.addr %s3658, 128
          %s3660 = scalar_lea.hbm %s11, %s3659
          %s3661 = sshll.u32 %s3651, 4
          %s3662 = int_to_ptr.vmem [resolvable:$true] %s3661
          %3667 = dma.vmem_to_hbm [thread:$0]  %s3662, 1024, %s3660, %s3648, 128, 128, 8
        $region68: #{tpu_custom_call.1} parent=63 // pred_fallthru
          _
      $region64: #{tpu_custom_call.1} parent=5 // pred_fallthru
        _
      %p3668 = scmp.le.s32.totalorder 2, %s20
      // Predicated region
      $region69: #{tpu_custom_call.1} parent=5 // pred_check
        %p3669 = pneg %p3668
      $region70: #{tpu_custom_call.1} parent=5 // pred_check_branch
        %3671 = sbr.rel (%p3669) target = $region72
      $region71: #{tpu_custom_call.1} parent=5 // pred_region
        %s3672 = ssub.s32 %s20, 2
        // Predicated region
        $region73: #{tpu_custom_call.1} parent=71 // pred_check
          %p3673 = pneg %p290
        $region74: #{tpu_custom_call.1} parent=71 // pred_check_branch
          %3675 = sbr.rel (%p3673) target = $region76
        $region75: #{tpu_custom_call.1} parent=71 // pred_region
          %s3676 = sand.u32 %s275, 1
          %s3677 = scalar_lea.sflag [#allocation4], %s3676
          %s3678 = sand.u32 %s275, 1
          %s3679 = smul.addr %s3678, 64
          %s3680 = scalar_lea.vmem [#allocation3], %s3679
          %3681 = dma.done %s3677, 1024
        $region76: #{tpu_custom_call.1} parent=71 // pred_fallthru
          _
      $region72: #{tpu_custom_call.1} parent=5 // pred_fallthru
        _
    $region6: #{tpu_custom_call.1} parent=1 // loop_footer
      %s24 = sadd.s32 1, %s20
    $region7: #{tpu_custom_call.1} parent=1 // loop_footer_branch
      %19 = sbr.rel target = $region3
    $region8: #{tpu_custom_call.1} parent=1 // loop_exit
      _
    %3682 = vsyncpa [#allocation4], 1
    %s3683 = scalar_lea.sflag [#allocation4], 1
    %3684 = vsyncpa %s3683, 1

</llo_original>
